<compile_context>
chip_gen: v7x
topology: tpu7x:2x2x1
jax: 0.10.0
libtpu: 0.0.40
codegen_flags: <defaults>
</compile_context>

<pallas_src>
import functools
import math

import jax
import jax.numpy as jnp
from jax.experimental import pallas as pl
from jax.experimental.pallas import tpu as pltpu

_DEFAULT_TM = 128   # token-tile rows (was 8)
_LN_EPS = 1e-5


# ----------------------------------------------------------------------------
# small helpers
# ----------------------------------------------------------------------------
def _round_up(x, m):
    return ((x + m - 1) // m) * m


def _token_tiling(m, tm=_DEFAULT_TM):
    """Padded token count + tile size (tile is a multiple of 8 sublanes)."""
    m_pad = _round_up(max(m, 8), 8)
    tm = min(tm, m_pad)
    m_pad = _round_up(m_pad, tm)
    return m_pad, tm


def _pad_rows(x, m_pad):
    m = x.shape[0]
    return x if m == m_pad else jnp.pad(x, ((0, m_pad - m), (0, 0)))


def _row(v):
    return v.reshape(1, -1)


def _split_heads(x, seq, batch, nhead):
    d = x.shape[-1]
    dh = d // nhead
    return x.reshape(seq, batch, nhead, dh).transpose(1, 2, 0, 3)  # (B,H,seq,dh)


def _merge_heads(x):
    b, h, t, dh = x.shape
    return x.transpose(2, 0, 1, 3).reshape(t * b, h * dh)          # (T*B, D)


# ----------------------------------------------------------------------------
# kernels
# ----------------------------------------------------------------------------
def _self_qkv_kernel(x_ref, qpos_ref, wq_ref, bq_ref, wk_ref, bk_ref,
                     wv_ref, bv_ref, q_ref, k_ref, v_ref):
    """Fused self-attention input projections: q/k from (x+query_pos), v from x."""
    x = x_ref[...]
    xqk = x + qpos_ref[...]
    q_ref[...] = (jnp.dot(xqk, wq_ref[...], preferred_element_type=jnp.float32)
                  + bq_ref[...].astype(jnp.float32)).astype(q_ref.dtype)
    k_ref[...] = (jnp.dot(xqk, wk_ref[...], preferred_element_type=jnp.float32)
                  + bk_ref[...].astype(jnp.float32)).astype(k_ref.dtype)
    v_ref[...] = (jnp.dot(x, wv_ref[...], preferred_element_type=jnp.float32)
                  + bv_ref[...].astype(jnp.float32)).astype(v_ref.dtype)


def _cross_kv_kernel(mem_ref, pos_ref, wk_ref, bk_ref, wv_ref, bv_ref,
                     k_ref, v_ref):
    """Fused cross-attention K/V projections: k from (memory+pos), v from memory."""
    m = mem_ref[...]
    xk = m + pos_ref[...]
    k_ref[...] = (jnp.dot(xk, wk_ref[...], preferred_element_type=jnp.float32)
                  + bk_ref[...].astype(jnp.float32)).astype(k_ref.dtype)
    v_ref[...] = (jnp.dot(m, wv_ref[...], preferred_element_type=jnp.float32)
                  + bv_ref[...].astype(jnp.float32)).astype(v_ref.dtype)


def _add_linear_kernel(x_ref, a_ref, w_ref, b_ref, o_ref):
    """(x + a) @ w + b  (used for the cross-attention query projection)."""
    x = x_ref[...] + a_ref[...]
    o_ref[...] = (jnp.dot(x, w_ref[...], preferred_element_type=jnp.float32)
                  + b_ref[...].astype(jnp.float32)).astype(o_ref.dtype)


def _mha_core_kernel(q_ref, k_ref, v_ref, o_ref, *, scale):
    """softmax(q k^T * scale) v for all heads of one batch element."""
    q = q_ref[0].astype(jnp.float32) * scale          # (H, T, Dh)
    k = k_ref[0].astype(jnp.float32)                  # (H, S, Dh)
    v = v_ref[0]                                      # (H, S, Dh)
    s = jnp.einsum("htd,hsd->hts", q, k, preferred_element_type=jnp.float32)
    s = s - jnp.max(s, axis=-1, keepdims=True)
    p = jnp.exp(s)
    p = p / jnp.sum(p, axis=-1, keepdims=True)
    o = jnp.einsum("hts,hsd->htd", p.astype(v.dtype), v,
                   preferred_element_type=jnp.float32)
    o_ref[0] = o.astype(o_ref.dtype)


def _proj_add_ln_kernel(x_ref, w_ref, b_ref, r_ref, g_ref, bb_ref, o_ref, *, eps):
    """LayerNorm(residual + x @ w + b) — attention output projection block."""
    acc = jnp.dot(x_ref[...], w_ref[...], preferred_element_type=jnp.float32)
    acc = acc + b_ref[...].astype(jnp.float32) + r_ref[...].astype(jnp.float32)
    mu = jnp.mean(acc, axis=-1, keepdims=True)
    xc = acc - mu
    var = jnp.mean(xc * xc, axis=-1, keepdims=True)
    y = xc * jax.lax.rsqrt(var + eps)
    o_ref[...] = (y * g_ref[...].astype(jnp.float32)
                  + bb_ref[...].astype(jnp.float32)).astype(o_ref.dtype)


def _ffn_add_ln_kernel(x_ref, w1_ref, b1_ref, w2_ref, b2_ref, g_ref, bb_ref,
                       o_ref, *, eps):
    """LayerNorm(x + relu(x@w1+b1)@w2 + b2) — whole FFN block in one kernel."""
    x = x_ref[...]
    h = jnp.dot(x, w1_ref[...], preferred_element_type=jnp.float32)
    h = jnp.maximum(h + b1_ref[...].astype(jnp.float32), 0.0)
    acc = jnp.dot(h.astype(w2_ref.dtype), w2_ref[...],
                  preferred_element_type=jnp.float32)
    acc = acc + b2_ref[...].astype(jnp.float32) + x.astype(jnp.float32)
    mu = jnp.mean(acc, axis=-1, keepdims=True)
    xc = acc - mu
    var = jnp.mean(xc * xc, axis=-1, keepdims=True)
    y = xc * jax.lax.rsqrt(var + eps)
    o_ref[...] = (y * g_ref[...].astype(jnp.float32)
                  + bb_ref[...].astype(jnp.float32)).astype(o_ref.dtype)


def _ln_kernel(x_ref, g_ref, b_ref, o_ref, *, eps):
    x = x_ref[...].astype(jnp.float32)
    mu = jnp.mean(x, axis=-1, keepdims=True)
    xc = x - mu
    var = jnp.mean(xc * xc, axis=-1, keepdims=True)
    y = xc * jax.lax.rsqrt(var + eps)
    o_ref[...] = (y * g_ref[...].astype(jnp.float32)
                  + b_ref[...].astype(jnp.float32)).astype(o_ref.dtype)


# ----------------------------------------------------------------------------
# pallas_call wrappers (token axis tiled, cdiv grid + zero padding)
# ----------------------------------------------------------------------------
_PARALLEL = pltpu.CompilerParams(dimension_semantics=("parallel",))


def self_qkv_pallas(x, qpos, wq, bq, wk, bk, wv, bv, *, tm=_DEFAULT_TM):
    m, d = x.shape
    m_pad, tm = _token_tiling(m, tm)
    xp, qp = _pad_rows(x, m_pad), _pad_rows(qpos, m_pad)
    tok = pl.BlockSpec((tm, d), lambda i: (i, 0))
    wsp = pl.BlockSpec((d, d), lambda i: (0, 0))
    bsp = pl.BlockSpec((1, d), lambda i: (0, 0))
    q, k, v = pl.pallas_call(
        _self_qkv_kernel,
        out_shape=tuple(jax.ShapeDtypeStruct((m_pad, d), x.dtype) for _ in range(3)),
        grid_spec=pltpu.PrefetchScalarGridSpec(
            num_scalar_prefetch=0,
            grid=(m_pad // tm,),
            in_specs=[tok, tok, wsp, bsp, wsp, bsp, wsp, bsp],
            out_specs=[tok, tok, tok],
        ),
        compiler_params=_PARALLEL,
    )(xp, qp, wq, _row(bq), wk, _row(bk), wv, _row(bv))
    return q[:m], k[:m], v[:m]


def cross_kv_pallas(mem, pos, wk, bk, wv, bv, *, tm=_DEFAULT_TM):
    m, d = mem.shape
    m_pad, tm = _token_tiling(m, tm)
    mp, pp = _pad_rows(mem, m_pad), _pad_rows(pos, m_pad)
    tok = pl.BlockSpec((tm, d), lambda i: (i, 0))
    wsp = pl.BlockSpec((d, d), lambda i: (0, 0))
    bsp = pl.BlockSpec((1, d), lambda i: (0, 0))
    k, v = pl.pallas_call(
        _cross_kv_kernel,
        out_shape=tuple(jax.ShapeDtypeStruct((m_pad, d), mem.dtype) for _ in range(2)),
        grid_spec=pltpu.PrefetchScalarGridSpec(
            num_scalar_prefetch=0,
            grid=(m_pad // tm,),
            in_specs=[tok, tok, wsp, bsp, wsp, bsp],
            out_specs=[tok, tok],
        ),
        compiler_params=_PARALLEL,
    )(mp, pp, wk, _row(bk), wv, _row(bv))
    return k[:m], v[:m]


def add_linear_pallas(x, a, w, b, *, tm=_DEFAULT_TM):
    m, d = x.shape
    n = w.shape[1]
    m_pad, tm = _token_tiling(m, tm)
    xp, ap = _pad_rows(x, m_pad), _pad_rows(a, m_pad)
    tok_in = pl.BlockSpec((tm, d), lambda i: (i, 0))
    tok_out = pl.BlockSpec((tm, n), lambda i: (i, 0))
    wsp = pl.BlockSpec((d, n), lambda i: (0, 0))
    bsp = pl.BlockSpec((1, n), lambda i: (0, 0))
    out = pl.pallas_call(
        _add_linear_kernel,
        out_shape=jax.ShapeDtypeStruct((m_pad, n), x.dtype),
        grid_spec=pltpu.PrefetchScalarGridSpec(
            num_scalar_prefetch=0,
            grid=(m_pad // tm,),
            in_specs=[tok_in, tok_in, wsp, bsp],
            out_specs=tok_out,
        ),
        compiler_params=_PARALLEL,
    )(xp, ap, w, _row(b))
    return out[:m]


def mha_core_pallas(q, k, v, *, scale):
    b, h, t, dh = q.shape
    s = k.shape[2]
    kern = functools.partial(_mha_core_kernel, scale=scale)
    return pl.pallas_call(
        kern,
        out_shape=jax.ShapeDtypeStruct((b, h, t, dh), q.dtype),
        grid_spec=pltpu.PrefetchScalarGridSpec(
            num_scalar_prefetch=0,
            grid=(b,),
            in_specs=[
                pl.BlockSpec((1, h, t, dh), lambda i: (i, 0, 0, 0)),
                pl.BlockSpec((1, h, s, dh), lambda i: (i, 0, 0, 0)),
                pl.BlockSpec((1, h, s, dh), lambda i: (i, 0, 0, 0)),
            ],
            out_specs=pl.BlockSpec((1, h, t, dh), lambda i: (i, 0, 0, 0)),
        ),
        compiler_params=_PARALLEL,
    )(q, k, v)


def proj_residual_ln_pallas(x, w, b, residual, gamma, beta, *,
                            eps=_LN_EPS, tm=_DEFAULT_TM):
    m, d = x.shape
    n = w.shape[1]
    m_pad, tm = _token_tiling(m, tm)
    xp, rp = _pad_rows(x, m_pad), _pad_rows(residual, m_pad)
    tok_in = pl.BlockSpec((tm, d), lambda i: (i, 0))
    tok_out = pl.BlockSpec((tm, n), lambda i: (i, 0))
    wsp = pl.BlockSpec((d, n), lambda i: (0, 0))
    vsp = pl.BlockSpec((1, n), lambda i: (0, 0))
    kern = functools.partial(_proj_add_ln_kernel, eps=eps)
    out = pl.pallas_call(
        kern,
        out_shape=jax.ShapeDtypeStruct((m_pad, n), x.dtype),
        grid_spec=pltpu.PrefetchScalarGridSpec(
            num_scalar_prefetch=0,
            grid=(m_pad // tm,),
            in_specs=[tok_in, wsp, vsp, tok_out, vsp, vsp],
            out_specs=tok_out,
        ),
        compiler_params=_PARALLEL,
    )(xp, w, _row(b), rp, _row(gamma), _row(beta))
    return out[:m]


def ffn_residual_ln_pallas(x, w1, b1, w2, b2, gamma, beta, *,
                           eps=_LN_EPS, tm=_DEFAULT_TM):
    m, d = x.shape
    f = w1.shape[1]
    m_pad, tm = _token_tiling(m, tm)
    xp = _pad_rows(x, m_pad)
    tok = pl.BlockSpec((tm, d), lambda i: (i, 0))
    w1sp = pl.BlockSpec((d, f), lambda i: (0, 0))
    b1sp = pl.BlockSpec((1, f), lambda i: (0, 0))
    w2sp = pl.BlockSpec((f, d), lambda i: (0, 0))
    dvec = pl.BlockSpec((1, d), lambda i: (0, 0))
    kern = functools.partial(_ffn_add_ln_kernel, eps=eps)
    out = pl.pallas_call(
        kern,
        out_shape=jax.ShapeDtypeStruct((m_pad, d), x.dtype),
        grid_spec=pltpu.PrefetchScalarGridSpec(
            num_scalar_prefetch=0,
            grid=(m_pad // tm,),
            in_specs=[tok, w1sp, b1sp, w2sp, dvec, dvec, dvec],
            out_specs=tok,
        ),
        compiler_params=_PARALLEL,
    )(xp, w1, _row(b1), w2, _row(b2), _row(gamma), _row(beta))
    return out[:m]


def layernorm_pallas(x, gamma, beta, *, eps=_LN_EPS, tm=_DEFAULT_TM):
    m, d = x.shape
    m_pad, tm = _token_tiling(m, tm)
    xp = _pad_rows(x, m_pad)
    tok = pl.BlockSpec((tm, d), lambda i: (i, 0))
    vsp = pl.BlockSpec((1, d), lambda i: (0, 0))
    kern = functools.partial(_ln_kernel, eps=eps)
    out = pl.pallas_call(
        kern,
        out_shape=jax.ShapeDtypeStruct((m_pad, d), x.dtype),
        grid_spec=pltpu.PrefetchScalarGridSpec(
            num_scalar_prefetch=0,
            grid=(m_pad // tm,),
            in_specs=[tok, vsp, vsp],
            out_specs=tok,
        ),
        compiler_params=_PARALLEL,
    )(xp, _row(gamma), _row(beta))
    return out[:m]


# ----------------------------------------------------------------------------
# decoder layer + decoder stack (Pallas path)
# ----------------------------------------------------------------------------
def _maybe(x, like):
    return jnp.zeros_like(like) if x is None else x


def decoder_layer_forward(tgt, memory, lp, *, nhead, pos=None, query_pos=None):
    t, b, d = tgt.shape
    s = memory.shape[0]
    dh = d // nhead
    scale = 1.0 / math.sqrt(dh)
    mt = t * b

    tgt_flat = tgt.reshape(mt, d)
    mem_flat = memory.reshape(s * b, d)
    qpos_flat = _maybe(query_pos, tgt).reshape(mt, d)
    pos_flat = _maybe(pos, memory).reshape(s * b, d)

    # --- self-attention block -------------------------------------------------
    sa = lp["self_attn"]
    q, k, v = self_qkv_pallas(tgt_flat, qpos_flat, sa["wq"], sa["bq"],
                              sa["wk"], sa["bk"], sa["wv"], sa["bv"])
    attn = mha_core_pallas(_split_heads(q, t, b, nhead),
                           _split_heads(k, t, b, nhead),
                           _split_heads(v, t, b, nhead), scale=scale)
    attn = _merge_heads(attn)
    tgt_flat = proj_residual_ln_pallas(attn, sa["wo"], sa["bo"], tgt_flat,
                                       lp["norm1_g"], lp["norm1_b"])

    # --- cross-attention block ------------------------------------------------
    ca = lp["cross_attn"]
    q = add_linear_pallas(tgt_flat, qpos_flat, ca["wq"], ca["bq"])
    k, v = cross_kv_pallas(mem_flat, pos_flat, ca["wk"], ca["bk"],
                           ca["wv"], ca["bv"])
    attn = mha_core_pallas(_split_heads(q, t, b, nhead),
                           _split_heads(k, s, b, nhead),
                           _split_heads(v, s, b, nhead), scale=scale)
    attn = _merge_heads(attn)
    tgt_flat = proj_residual_ln_pallas(attn, ca["wo"], ca["bo"], tgt_flat,
                                       lp["norm2_g"], lp["norm2_b"])

    # --- FFN block (fully fused) -----------------------------------------------
    tgt_flat = ffn_residual_ln_pallas(tgt_flat, lp["w1"], lp["b1"],
                                      lp["w2"], lp["b2"],
                                      lp["norm3_g"], lp["norm3_b"])
    return tgt_flat.reshape(t, b, d)


def transformer_decoder_forward(tgt, memory, params, *, nhead,
                                pos=None, query_pos=None,
                                return_intermediate=False):
    """Pallas equivalent of TransformerDecoder.forward (mask args unsupported)."""
    t, b, d = tgt.shape
    output = tgt
    norm = params.get("norm")
    intermediate = []
    for lp in params["layers"]:
        output = decoder_layer_forward(output, memory, lp, nhead=nhead,
                                       pos=pos, query_pos=query_pos)
        if return_intermediate:
            inter = layernorm_pallas(output.reshape(t * b, d), norm[0], norm[1])
            intermediate.append(inter.reshape(t, b, d))
    if norm is not None:
        output = layernorm_pallas(output.reshape(t * b, d),
                                  norm[0], norm[1]).reshape(t, b, d)
        if return_intermediate:
            intermediate.pop()
            intermediate.append(output)
    if return_intermediate:
        return jnp.stack(intermediate)
    return output[None]   # == output.unsqueeze(0)


# ----------------------------------------------------------------------------
# parameters + pure-JAX reference
# ----------------------------------------------------------------------------
def init_decoder_params(key, *, d_model, nhead, dim_feedforward, num_layers,
                        dtype=jnp.float32):
    def linear(k, n_in, n_out):
        kw, kb = jax.random.split(k)
        bound = 1.0 / math.sqrt(n_in)
        w = jax.random.uniform(kw, (n_in, n_out), dtype, -bound, bound)
        bb = jax.random.uniform(kb, (n_out,), dtype, -bound, bound)
        return w, bb

    def attn(k):
        kq, kk, kv, ko = jax.random.split(k, 4)
        wq, bq = linear(kq, d_model, d_model)
        wk, bk = linear(kk, d_model, d_model)
        wv, bv = linear(kv, d_model, d_model)
        wo, bo = linear(ko, d_model, d_model)
        return dict(wq=wq, bq=bq, wk=wk, bk=bk, wv=wv, bv=bv, wo=wo, bo=bo)

    layers = []
    for _ in range(num_layers):
        key, ksa, kca, k1, k2 = jax.random.split(key, 5)
        w1, b1 = linear(k1, d_model, dim_feedforward)
        w2, b2 = linear(k2, dim_feedforward, d_model)
        layers.append(dict(
            self_attn=attn(ksa), cross_attn=attn(kca),
            w1=w1, b1=b1, w2=w2, b2=b2,
            norm1_g=jnp.ones((d_model,), dtype), norm1_b=jnp.zeros((d_model,), dtype),
            norm2_g=jnp.ones((d_model,), dtype), norm2_b=jnp.zeros((d_model,), dtype),
            norm3_g=jnp.ones((d_model,), dtype), norm3_b=jnp.zeros((d_model,), dtype),
        ))
    norm = (jnp.ones((d_model,), dtype), jnp.zeros((d_model,), dtype))
    return dict(layers=layers, norm=norm)


_HI = jax.lax.Precision.HIGHEST


def _mm(a, b):
    return jnp.dot(a, b, precision=_HI)


def _ln_ref(x, g, b, eps=_LN_EPS):
    mu = jnp.mean(x, axis=-1, keepdims=True)
    var = jnp.mean((x - mu) ** 2, axis=-1, keepdims=True)
    return (x - mu) * jax.lax.rsqrt(var + eps) * g + b


def _mha_ref(q_in, k_in, v_in, p, nhead):
    t, b, d = q_in.shape
    s = k_in.shape[0]
    dh = d // nhead
    q = _mm(q_in.reshape(t * b, d), p["wq"]) + p["bq"]
    k = _mm(k_in.reshape(s * b, d), p["wk"]) + p["bk"]
    v = _mm(v_in.reshape(s * b, d), p["wv"]) + p["bv"]
    q = q.reshape(t, b, nhead, dh).transpose(1, 2, 0, 3) * (1.0 / math.sqrt(dh))
    k = k.reshape(s, b, nhead, dh).transpose(1, 2, 0, 3)
    v = v.reshape(s, b, nhead, dh).transpose(1, 2, 0, 3)
    scores = jnp.einsum("bhtd,bhsd->bhts", q, k, precision=_HI)
    scores = scores - jnp.max(scores, axis=-1, keepdims=True)
    p_att = jnp.exp(scores)
    p_att = p_att / jnp.sum(p_att, axis=-1, keepdims=True)
    o = jnp.einsum("bhts,bhsd->bhtd", p_att, v, precision=_HI)
    o = o.transpose(2, 0, 1, 3).reshape(t * b, d)
    return _mm(o, p["wo"]) + p["bo"]


def decoder_reference(tgt, memory, params, *, nhead, pos=None, query_pos=None,
                      return_intermediate=False):
    def with_pos(x, p):
        return x if p is None else x + p

    t, b, d = tgt.shape
    output = tgt
    norm = params.get("norm")
    intermediate = []
    for lp in params["layers"]:
        x = output.reshape(t * b, d)
        qk_in = with_pos(output, query_pos)
        sa = _mha_ref(qk_in, qk_in, output, lp["self_attn"], nhead)
        x = _ln_ref(x + sa, lp["norm1_g"], lp["norm1_b"])
        output = x.reshape(t, b, d)
        ca = _mha_ref(with_pos(output, query_pos), with_pos(memory, pos),
                      memory, lp["cross_attn"], nhead)
        x = _ln_ref(x + ca, lp["norm2_g"], lp["norm2_b"])
        h = jnp.maximum(_mm(x, lp["w1"]) + lp["b1"], 0.0)
        f = _mm(h, lp["w2"]) + lp["b2"]
        x = _ln_ref(x + f, lp["norm3_g"], lp["norm3_b"])
        output = x.reshape(t, b, d)
        if return_intermediate:
            intermediate.append(_ln_ref(output, norm[0], norm[1]))
    if norm is not None:
        output = _ln_ref(output, norm[0], norm[1])
        if return_intermediate:
            intermediate.pop()
            intermediate.append(output)
    if return_intermediate:
        return jnp.stack(intermediate)
    return output[None]


# ----------------------------------------------------------------------------
# demo / self-test
# ----------------------------------------------------------------------------
if __name__ == "__main__":
    # Small DETR-like shapes: 8 object queries, 16 memory tokens, batch 2,
    # d_model=128 (lane-dense), 4 heads, ffn=256, 2 decoder layers.
    T, S, B = 8, 16, 2
    D, NHEAD, FFN, LAYERS = 128, 4, 256, 2

    key = jax.random.PRNGKey(0)
    k_tgt, k_mem, k_pos, k_qpos, k_par = jax.random.split(key, 5)
    tgt = jax.random.normal(k_tgt, (T, B, D), jnp.float32)
    memory = jax.random.normal(k_mem, (S, B, D), jnp.float32)
    pos = jax.random.normal(k_pos, (S, B, D), jnp.float32)
    query_pos = jax.random.normal(k_qpos, (T, B, D), jnp.float32)
    params = init_decoder_params(k_par, d_model=D, nhead=NHEAD,
                                 dim_feedforward=FFN, num_layers=LAYERS)

    fwd = jax.jit(functools.partial(transformer_decoder_forward,
                                    nhead=NHEAD, return_intermediate=False))
    out = fwd(tgt, memory, params, pos=pos, query_pos=query_pos)
    out = jax.block_until_ready(out)

    ref = decoder_reference(tgt, memory, params, nhead=NHEAD,
                            pos=pos, query_pos=query_pos,
                            return_intermediate=False)

    assert out.shape == (1, T, B, D), out.shape
    max_err = float(jnp.max(jnp.abs(out - ref)))
    assert jnp.allclose(out, ref, atol=2e-3, rtol=2e-3), f"max abs err={max_err}"

    print("KERNEL_OK")
</pallas_src>

<mosaic_0001>
module attributes {stable_mosaic.version = 11 : i64} {
  func.func @_self_qkv_kernel(%arg0: i32, %arg1: memref<16x128xf32, #tpu.memory_space<vmem>>, %arg2: memref<16x128xf32, #tpu.memory_space<vmem>>, %arg3: memref<128x128xf32, #tpu.memory_space<vmem>>, %arg4: memref<1x128xf32, #tpu.memory_space<vmem>>, %arg5: memref<128x128xf32, #tpu.memory_space<vmem>>, %arg6: memref<1x128xf32, #tpu.memory_space<vmem>>, %arg7: memref<128x128xf32, #tpu.memory_space<vmem>>, %arg8: memref<1x128xf32, #tpu.memory_space<vmem>>, %arg9: memref<16x128xf32, #tpu.memory_space<vmem>>, %arg10: memref<16x128xf32, #tpu.memory_space<vmem>>, %arg11: memref<16x128xf32, #tpu.memory_space<vmem>>) attributes {dimension_semantics = [#tpu.dimension_semantics<parallel>], iteration_bounds = array<i64: 1>, scalar_prefetch = 0 : i64, scratch_operands = 0 : i64, tpu.core_type = #tpu.core_type<tc>, window_params = [{transform_indices = @transform_0, window_bounds = array<i64: 16, 128>}, {transform_indices = @transform_1, window_bounds = array<i64: 16, 128>}, {pipeline_mode = #tpu.pipeline_mode<synchronous>, transform_indices = @transform_2, window_bounds = array<i64: 128, 128>}, {pipeline_mode = #tpu.pipeline_mode<synchronous>, transform_indices = @transform_3, window_bounds = array<i64: 1, 128>}, {pipeline_mode = #tpu.pipeline_mode<synchronous>, transform_indices = @transform_4, window_bounds = array<i64: 128, 128>}, {pipeline_mode = #tpu.pipeline_mode<synchronous>, transform_indices = @transform_5, window_bounds = array<i64: 1, 128>}, {pipeline_mode = #tpu.pipeline_mode<synchronous>, transform_indices = @transform_6, window_bounds = array<i64: 128, 128>}, {pipeline_mode = #tpu.pipeline_mode<synchronous>, transform_indices = @transform_7, window_bounds = array<i64: 1, 128>}, {transform_indices = @transform_8, window_bounds = array<i64: 16, 128>}, {transform_indices = @transform_9, window_bounds = array<i64: 16, 128>}, {transform_indices = @transform_10, window_bounds = array<i64: 16, 128>}]} {
    %c0 = arith.constant 0 : index
    %c0_0 = arith.constant 0 : index
    %0 = vector.load %arg1[%c0, %c0_0] : memref<16x128xf32, #tpu.memory_space<vmem>>, vector<16x128xf32>
    %c0_1 = arith.constant 0 : index
    %c0_2 = arith.constant 0 : index
    %1 = vector.load %arg2[%c0_1, %c0_2] : memref<16x128xf32, #tpu.memory_space<vmem>>, vector<16x128xf32>
    %2 = arith.addf %0, %1 : vector<16x128xf32>
    %c0_3 = arith.constant 0 : index
    %c0_4 = arith.constant 0 : index
    %3 = vector.load %arg3[%c0_3, %c0_4] : memref<128x128xf32, #tpu.memory_space<vmem>>, vector<128x128xf32>
    %cst = arith.constant dense<0.000000e+00> : vector<16x128xf32>
    %4 = tpu.matmul %2, %3, %cst {dimension_numbers = #tpu.dot_dimension_numbers<[1], [0], [0], [1], [0, 0, 1, 1], [], []>} : vector<16x128xf32>, vector<128x128xf32>, vector<16x128xf32> -> vector<16x128xf32>
    %c0_5 = arith.constant 0 : index
    %c0_6 = arith.constant 0 : index
    %5 = vector.load %arg4[%c0_5, %c0_6] : memref<1x128xf32, #tpu.memory_space<vmem>>, vector<1x128xf32>
    %6 = vector.broadcast %5 : vector<1x128xf32> to vector<16x128xf32>
    %7 = arith.addf %4, %6 : vector<16x128xf32>
    %c0_7 = arith.constant 0 : index
    %c0_8 = arith.constant 0 : index
    %8 = vector.load %arg9[%c0_7, %c0_8] : memref<16x128xf32, #tpu.memory_space<vmem>>, vector<16x128xf32>
    tpu.vector_store %arg9[%c0_7, %c0_8], %7 {strides = array<i32>} : memref<16x128xf32, #tpu.memory_space<vmem>>, vector<16x128xf32>,
    %c0_9 = arith.constant 0 : index
    %c0_10 = arith.constant 0 : index
    %9 = vector.load %arg5[%c0_9, %c0_10] : memref<128x128xf32, #tpu.memory_space<vmem>>, vector<128x128xf32>
    %cst_11 = arith.constant dense<0.000000e+00> : vector<16x128xf32>
    %10 = tpu.matmul %2, %9, %cst_11 {dimension_numbers = #tpu.dot_dimension_numbers<[1], [0], [0], [1], [0, 0, 1, 1], [], []>} : vector<16x128xf32>, vector<128x128xf32>, vector<16x128xf32> -> vector<16x128xf32>
    %c0_12 = arith.constant 0 : index
    %c0_13 = arith.constant 0 : index
    %11 = vector.load %arg6[%c0_12, %c0_13] : memref<1x128xf32, #tpu.memory_space<vmem>>, vector<1x128xf32>
    %12 = vector.broadcast %11 : vector<1x128xf32> to vector<16x128xf32>
    %13 = arith.addf %10, %12 : vector<16x128xf32>
    %c0_14 = arith.constant 0 : index
    %c0_15 = arith.constant 0 : index
    %14 = vector.load %arg10[%c0_14, %c0_15] : memref<16x128xf32, #tpu.memory_space<vmem>>, vector<16x128xf32>
    tpu.vector_store %arg10[%c0_14, %c0_15], %13 {strides = array<i32>} : memref<16x128xf32, #tpu.memory_space<vmem>>, vector<16x128xf32>,
    %c0_16 = arith.constant 0 : index
    %c0_17 = arith.constant 0 : index
    %15 = vector.load %arg7[%c0_16, %c0_17] : memref<128x128xf32, #tpu.memory_space<vmem>>, vector<128x128xf32>
    %cst_18 = arith.constant dense<0.000000e+00> : vector<16x128xf32>
    %16 = tpu.matmul %0, %15, %cst_18 {dimension_numbers = #tpu.dot_dimension_numbers<[1], [0], [0], [1], [0, 0, 1, 1], [], []>} : vector<16x128xf32>, vector<128x128xf32>, vector<16x128xf32> -> vector<16x128xf32>
    %c0_19 = arith.constant 0 : index
    %c0_20 = arith.constant 0 : index
    %17 = vector.load %arg8[%c0_19, %c0_20] : memref<1x128xf32, #tpu.memory_space<vmem>>, vector<1x128xf32>
    %18 = vector.broadcast %17 : vector<1x128xf32> to vector<16x128xf32>
    %19 = arith.addf %16, %18 : vector<16x128xf32>
    %c0_21 = arith.constant 0 : index
    %c0_22 = arith.constant 0 : index
    %20 = vector.load %arg11[%c0_21, %c0_22] : memref<16x128xf32, #tpu.memory_space<vmem>>, vector<16x128xf32>
    tpu.vector_store %arg11[%c0_21, %c0_22], %19 {strides = array<i32>} : memref<16x128xf32, #tpu.memory_space<vmem>>, vector<16x128xf32>,
    return
  }
  func.func @transform_0(%arg0: i32) -> (i32, i32) {
    %c0_i32 = arith.constant 0 : i32
    %c0_i32_0 = arith.constant 0 : i32
    return %arg0, %c0_i32 : i32, i32
  }
  func.func @transform_1(%arg0: i32) -> (i32, i32) {
    %c0_i32 = arith.constant 0 : i32
    %c0_i32_0 = arith.constant 0 : i32
    return %arg0, %c0_i32 : i32, i32
  }
  func.func @transform_2(%arg0: i32) -> (i32, i32) {
    %c0_i32 = arith.constant 0 : i32
    %c0_i32_0 = arith.constant 0 : i32
    %c0_i32_1 = arith.constant 0 : i32
    return %c0_i32, %c0_i32_0 : i32, i32
  }
  func.func @transform_3(%arg0: i32) -> (i32, i32) {
    %c0_i32 = arith.constant 0 : i32
    %c0_i32_0 = arith.constant 0 : i32
    %c0_i32_1 = arith.constant 0 : i32
    return %c0_i32, %c0_i32_0 : i32, i32
  }
  func.func @transform_4(%arg0: i32) -> (i32, i32) {
    %c0_i32 = arith.constant 0 : i32
    %c0_i32_0 = arith.constant 0 : i32
    %c0_i32_1 = arith.constant 0 : i32
    return %c0_i32, %c0_i32_0 : i32, i32
  }
  func.func @transform_5(%arg0: i32) -> (i32, i32) {
    %c0_i32 = arith.constant 0 : i32
    %c0_i32_0 = arith.constant 0 : i32
    %c0_i32_1 = arith.constant 0 : i32
    return %c0_i32, %c0_i32_0 : i32, i32
  }
  func.func @transform_6(%arg0: i32) -> (i32, i32) {
    %c0_i32 = arith.constant 0 : i32
    %c0_i32_0 = arith.constant 0 : i32
    %c0_i32_1 = arith.constant 0 : i32
    return %c0_i32, %c0_i32_0 : i32, i32
  }
  func.func @transform_7(%arg0: i32) -> (i32, i32) {
    %c0_i32 = arith.constant 0 : i32
    %c0_i32_0 = arith.constant 0 : i32
    %c0_i32_1 = arith.constant 0 : i32
    return %c0_i32, %c0_i32_0 : i32, i32
  }
  func.func @transform_8(%arg0: i32) -> (i32, i32) {
    %c0_i32 = arith.constant 0 : i32
    %c0_i32_0 = arith.constant 0 : i32
    return %arg0, %c0_i32 : i32, i32
  }
  func.func @transform_9(%arg0: i32) -> (i32, i32) {
    %c0_i32 = arith.constant 0 : i32
    %c0_i32_0 = arith.constant 0 : i32
    return %arg0, %c0_i32 : i32, i32
  }
  func.func @transform_10(%arg0: i32) -> (i32, i32) {
    %c0_i32 = arith.constant 0 : i32
    %c0_i32_0 = arith.constant 0 : i32
    return %arg0, %c0_i32 : i32, i32
  }
}

module attributes {stable_mosaic.version = 11 : i64} {
  func.func @_proj_add_ln_kernel(%arg0: i32, %arg1: memref<16x128xf32, #tpu.memory_space<vmem>>, %arg2: memref<128x128xf32, #tpu.memory_space<vmem>>, %arg3: memref<1x128xf32, #tpu.memory_space<vmem>>, %arg4: memref<16x128xf32, #tpu.memory_space<vmem>>, %arg5: memref<1x128xf32, #tpu.memory_space<vmem>>, %arg6: memref<1x128xf32, #tpu.memory_space<vmem>>, %arg7: memref<16x128xf32, #tpu.memory_space<vmem>>) attributes {dimension_semantics = [#tpu.dimension_semantics<parallel>], iteration_bounds = array<i64: 1>, scalar_prefetch = 0 : i64, scratch_operands = 0 : i64, tpu.core_type = #tpu.core_type<tc>, window_params = [{transform_indices = @transform_0, window_bounds = array<i64: 16, 128>}, {pipeline_mode = #tpu.pipeline_mode<synchronous>, transform_indices = @transform_1, window_bounds = array<i64: 128, 128>}, {pipeline_mode = #tpu.pipeline_mode<synchronous>, transform_indices = @transform_2, window_bounds = array<i64: 1, 128>}, {transform_indices = @transform_3, window_bounds = array<i64: 16, 128>}, {pipeline_mode = #tpu.pipeline_mode<synchronous>, transform_indices = @transform_4, window_bounds = array<i64: 1, 128>}, {pipeline_mode = #tpu.pipeline_mode<synchronous>, transform_indices = @transform_5, window_bounds = array<i64: 1, 128>}, {transform_indices = @transform_6, window_bounds = array<i64: 16, 128>}]} {
    %c0 = arith.constant 0 : index
    %c0_0 = arith.constant 0 : index
    %0 = vector.load %arg1[%c0, %c0_0] : memref<16x128xf32, #tpu.memory_space<vmem>>, vector<16x128xf32>
    %c0_1 = arith.constant 0 : index
    %c0_2 = arith.constant 0 : index
    %1 = vector.load %arg2[%c0_1, %c0_2] : memref<128x128xf32, #tpu.memory_space<vmem>>, vector<128x128xf32>
    %cst = arith.constant dense<0.000000e+00> : vector<16x128xf32>
    %2 = tpu.matmul %0, %1, %cst {dimension_numbers = #tpu.dot_dimension_numbers<[1], [0], [0], [1], [0, 0, 1, 1], [], []>} : vector<16x128xf32>, vector<128x128xf32>, vector<16x128xf32> -> vector<16x128xf32>
    %c0_3 = arith.constant 0 : index
    %c0_4 = arith.constant 0 : index
    %3 = vector.load %arg3[%c0_3, %c0_4] : memref<1x128xf32, #tpu.memory_space<vmem>>, vector<1x128xf32>
    %4 = vector.broadcast %3 : vector<1x128xf32> to vector<16x128xf32>
    %5 = arith.addf %2, %4 : vector<16x128xf32>
    %c0_5 = arith.constant 0 : index
    %c0_6 = arith.constant 0 : index
    %6 = vector.load %arg4[%c0_5, %c0_6] : memref<16x128xf32, #tpu.memory_space<vmem>>, vector<16x128xf32>
    %7 = arith.addf %5, %6 : vector<16x128xf32>
    %cst_7 = arith.constant dense<0.000000e+00> : vector<16xf32>
    %8 = vector.multi_reduction <add>, %7, %cst_7 [1] : vector<16x128xf32> to vector<16xf32>
    %9 = vector.shape_cast %8 : vector<16xf32> to vector<16x1xf32>
    %cst_8 = arith.constant 1.280000e+02 : f32
    %10 = vector.broadcast %cst_8 : f32 to vector<16x1xf32>
    %11 = arith.divf %9, %10 : vector<16x1xf32>
    %12 = vector.broadcast %11 : vector<16x1xf32> to vector<16x128xf32>
    %13 = arith.subf %7, %12 : vector<16x128xf32>
    %14 = arith.mulf %13, %13 : vector<16x128xf32>
    %cst_9 = arith.constant dense<0.000000e+00> : vector<16xf32>
    %15 = vector.multi_reduction <add>, %14, %cst_9 [1] : vector<16x128xf32> to vector<16xf32>
    %16 = vector.shape_cast %15 : vector<16xf32> to vector<16x1xf32>
    %cst_10 = arith.constant 1.280000e+02 : f32
    %17 = vector.broadcast %cst_10 : f32 to vector<16x1xf32>
    %18 = arith.divf %16, %17 : vector<16x1xf32>
    %cst_11 = arith.constant 9.99999974E-6 : f32
    %19 = vector.broadcast %cst_11 : f32 to vector<16x1xf32>
    %20 = arith.addf %18, %19 : vector<16x1xf32>
    %21 = math.rsqrt %20 : vector<16x1xf32>
    %22 = vector.broadcast %21 : vector<16x1xf32> to vector<16x128xf32>
    %23 = arith.mulf %13, %22 : vector<16x128xf32>
    %c0_12 = arith.constant 0 : index
    %c0_13 = arith.constant 0 : index
    %24 = vector.load %arg5[%c0_12, %c0_13] : memref<1x128xf32, #tpu.memory_space<vmem>>, vector<1x128xf32>
    %25 = vector.broadcast %24 : vector<1x128xf32> to vector<16x128xf32>
    %26 = arith.mulf %23, %25 : vector<16x128xf32>
    %c0_14 = arith.constant 0 : index
    %c0_15 = arith.constant 0 : index
    %27 = vector.load %arg6[%c0_14, %c0_15] : memref<1x128xf32, #tpu.memory_space<vmem>>, vector<1x128xf32>
    %28 = vector.broadcast %27 : vector<1x128xf32> to vector<16x128xf32>
    %29 = arith.addf %26, %28 : vector<16x128xf32>
    %c0_16 = arith.constant 0 : index
    %c0_17 = arith.constant 0 : index
    %30 = vector.load %arg7[%c0_16, %c0_17] : memref<16x128xf32, #tpu.memory_space<vmem>>, vector<16x128xf32>
    tpu.vector_store %arg7[%c0_16, %c0_17], %29 {strides = array<i32>} : memref<16x128xf32, #tpu.memory_space<vmem>>, vector<16x128xf32>,
    return
  }
  func.func @transform_0(%arg0: i32) -> (i32, i32) {
    %c0_i32 = arith.constant 0 : i32
    %c0_i32_0 = arith.constant 0 : i32
    return %arg0, %c0_i32 : i32, i32
  }
  func.func @transform_1(%arg0: i32) -> (i32, i32) {
    %c0_i32 = arith.constant 0 : i32
    %c0_i32_0 = arith.constant 0 : i32
    %c0_i32_1 = arith.constant 0 : i32
    return %c0_i32, %c0_i32_0 : i32, i32
  }
  func.func @transform_2(%arg0: i32) -> (i32, i32) {
    %c0_i32 = arith.constant 0 : i32
    %c0_i32_0 = arith.constant 0 : i32
    %c0_i32_1 = arith.constant 0 : i32
    return %c0_i32, %c0_i32_0 : i32, i32
  }
  func.func @transform_3(%arg0: i32) -> (i32, i32) {
    %c0_i32 = arith.constant 0 : i32
    %c0_i32_0 = arith.constant 0 : i32
    return %arg0, %c0_i32 : i32, i32
  }
  func.func @transform_4(%arg0: i32) -> (i32, i32) {
    %c0_i32 = arith.constant 0 : i32
    %c0_i32_0 = arith.constant 0 : i32
    %c0_i32_1 = arith.constant 0 : i32
    return %c0_i32, %c0_i32_0 : i32, i32
  }
  func.func @transform_5(%arg0: i32) -> (i32, i32) {
    %c0_i32 = arith.constant 0 : i32
    %c0_i32_0 = arith.constant 0 : i32
    %c0_i32_1 = arith.constant 0 : i32
    return %c0_i32, %c0_i32_0 : i32, i32
  }
  func.func @transform_6(%arg0: i32) -> (i32, i32) {
    %c0_i32 = arith.constant 0 : i32
    %c0_i32_0 = arith.constant 0 : i32
    return %arg0, %c0_i32 : i32, i32
  }
}

module attributes {stable_mosaic.version = 11 : i64} {
  func.func @_mha_core_kernel(%arg0: i32, %arg1: memref<1x4x8x32xf32, #tpu.memory_space<vmem>>, %arg2: memref<1x4x8x32xf32, #tpu.memory_space<vmem>>, %arg3: memref<1x4x8x32xf32, #tpu.memory_space<vmem>>, %arg4: memref<1x4x8x32xf32, #tpu.memory_space<vmem>>) attributes {dimension_semantics = [#tpu.dimension_semantics<parallel>], iteration_bounds = array<i64: 2>, scalar_prefetch = 0 : i64, scratch_operands = 0 : i64, tpu.core_type = #tpu.core_type<tc>, window_params = [{transform_indices = @transform_0, window_bounds = array<i64: 1, 4, 8, 32>}, {transform_indices = @transform_1, window_bounds = array<i64: 1, 4, 8, 32>}, {transform_indices = @transform_2, window_bounds = array<i64: 1, 4, 8, 32>}, {transform_indices = @transform_3, window_bounds = array<i64: 1, 4, 8, 32>}]} {
    %c0 = arith.constant 0 : index
    %c0_0 = arith.constant 0 : index
    %c0_1 = arith.constant 0 : index
    %c0_2 = arith.constant 0 : index
    %0 = vector.load %arg1[%c0, %c0_0, %c0_1, %c0_2] : memref<1x4x8x32xf32, #tpu.memory_space<vmem>>, vector<1x4x8x32xf32>
    %1 = vector.shape_cast %0 : vector<1x4x8x32xf32> to vector<4x8x32xf32>
    %cst = arith.constant 0.176776692 : f32
    %2 = vector.broadcast %cst : f32 to vector<4x8x32xf32>
    %3 = arith.mulf %1, %2 : vector<4x8x32xf32>
    %c0_3 = arith.constant 0 : index
    %c0_4 = arith.constant 0 : index
    %c0_5 = arith.constant 0 : index
    %c0_6 = arith.constant 0 : index
    %4 = vector.load %arg2[%c0_3, %c0_4, %c0_5, %c0_6] : memref<1x4x8x32xf32, #tpu.memory_space<vmem>>, vector<1x4x8x32xf32>
    %5 = vector.shape_cast %4 : vector<1x4x8x32xf32> to vector<4x8x32xf32>
    %c0_7 = arith.constant 0 : index
    %c0_8 = arith.constant 0 : index
    %c0_9 = arith.constant 0 : index
    %c0_10 = arith.constant 0 : index
    %6 = vector.load %arg3[%c0_7, %c0_8, %c0_9, %c0_10] : memref<1x4x8x32xf32, #tpu.memory_space<vmem>>, vector<1x4x8x32xf32>
    %7 = vector.shape_cast %6 : vector<1x4x8x32xf32> to vector<4x8x32xf32>
    "tpu.trace_start"() <{level = 10 : i32, message = "htd,hsd->hts"}> : () -> ()
    %cst_11 = arith.constant dense<0.000000e+00> : vector<4x8x8xf32>
    %8 = tpu.matmul %3, %5, %cst_11 {dimension_numbers = #tpu.dot_dimension_numbers<[2], [2], [1], [1], [0, 0, 0, 1, 1, 1], [0], [0]>} : vector<4x8x32xf32>, vector<4x8x32xf32>, vector<4x8x8xf32> -> vector<4x8x8xf32>
    "tpu.trace_stop"() : () -> ()
    %cst_12 = arith.constant dense<0xFF800000> : vector<4x8xf32>
    %9 = vector.multi_reduction <maximumf>, %8, %cst_12 [2] : vector<4x8x8xf32> to vector<4x8xf32>
    %10 = vector.shape_cast %9 : vector<4x8xf32> to vector<4x8x1xf32>
    %11 = vector.broadcast %10 : vector<4x8x1xf32> to vector<4x8x8xf32>
    %12 = arith.subf %8, %11 : vector<4x8x8xf32>
    %13 = math.exp %12 : vector<4x8x8xf32>
    %cst_13 = arith.constant dense<0.000000e+00> : vector<4x8xf32>
    %14 = vector.multi_reduction <add>, %13, %cst_13 [2] : vector<4x8x8xf32> to vector<4x8xf32>
    %15 = vector.shape_cast %14 : vector<4x8xf32> to vector<4x8x1xf32>
    %16 = vector.broadcast %15 : vector<4x8x1xf32> to vector<4x8x8xf32>
    %17 = arith.divf %13, %16 : vector<4x8x8xf32>
    "tpu.trace_start"() <{level = 10 : i32, message = "hts,hsd->htd"}> : () -> ()
    %cst_14 = arith.constant dense<0.000000e+00> : vector<4x8x32xf32>
    %18 = tpu.matmul %17, %7, %cst_14 {dimension_numbers = #tpu.dot_dimension_numbers<[2], [1], [1], [2], [0, 0, 0, 1, 1, 2], [0], [0]>} : vector<4x8x8xf32>, vector<4x8x32xf32>, vector<4x8x32xf32> -> vector<4x8x32xf32>
    "tpu.trace_stop"() : () -> ()
    %c0_15 = arith.constant 0 : index
    %c0_16 = arith.constant 0 : index
    %c0_17 = arith.constant 0 : index
    %c0_18 = arith.constant 0 : index
    %19 = vector.load %arg4[%c0_15, %c0_16, %c0_17, %c0_18] : memref<1x4x8x32xf32, #tpu.memory_space<vmem>>, vector<1x4x8x32xf32>
    %20 = vector.shape_cast %19 : vector<1x4x8x32xf32> to vector<4x8x32xf32>
    %21 = vector.shape_cast %18 : vector<4x8x32xf32> to vector<1x4x8x32xf32>
    tpu.vector_store %arg4[%c0_15, %c0_16, %c0_17, %c0_18], %21 {strides = array<i32>} : memref<1x4x8x32xf32, #tpu.memory_space<vmem>>, vector<1x4x8x32xf32>,
    return
  }
  func.func @transform_0(%arg0: i32) -> (i32, i32, i32, i32) {
    %c0_i32 = arith.constant 0 : i32
    %c0_i32_0 = arith.constant 0 : i32
    %c0_i32_1 = arith.constant 0 : i32
    %c0_i32_2 = arith.constant 0 : i32
    return %arg0, %c0_i32, %c0_i32_0, %c0_i32_1 : i32, i32, i32, i32
  }
  func.func @transform_1(%arg0: i32) -> (i32, i32, i32, i32) {
    %c0_i32 = arith.constant 0 : i32
    %c0_i32_0 = arith.constant 0 : i32
    %c0_i32_1 = arith.constant 0 : i32
    %c0_i32_2 = arith.constant 0 : i32
    return %arg0, %c0_i32, %c0_i32_0, %c0_i32_1 : i32, i32, i32, i32
  }
  func.func @transform_2(%arg0: i32) -> (i32, i32, i32, i32) {
    %c0_i32 = arith.constant 0 : i32
    %c0_i32_0 = arith.constant 0 : i32
    %c0_i32_1 = arith.constant 0 : i32
    %c0_i32_2 = arith.constant 0 : i32
    return %arg0, %c0_i32, %c0_i32_0, %c0_i32_1 : i32, i32, i32, i32
  }
  func.func @transform_3(%arg0: i32) -> (i32, i32, i32, i32) {
    %c0_i32 = arith.constant 0 : i32
    %c0_i32_0 = arith.constant 0 : i32
    %c0_i32_1 = arith.constant 0 : i32
    %c0_i32_2 = arith.constant 0 : i32
    return %arg0, %c0_i32, %c0_i32_0, %c0_i32_1 : i32, i32, i32, i32
  }
}

module attributes {stable_mosaic.version = 11 : i64} {
  func.func @_add_linear_kernel(%arg0: i32, %arg1: memref<16x128xf32, #tpu.memory_space<vmem>>, %arg2: memref<16x128xf32, #tpu.memory_space<vmem>>, %arg3: memref<128x128xf32, #tpu.memory_space<vmem>>, %arg4: memref<1x128xf32, #tpu.memory_space<vmem>>, %arg5: memref<16x128xf32, #tpu.memory_space<vmem>>) attributes {dimension_semantics = [#tpu.dimension_semantics<parallel>], iteration_bounds = array<i64: 1>, scalar_prefetch = 0 : i64, scratch_operands = 0 : i64, tpu.core_type = #tpu.core_type<tc>, window_params = [{transform_indices = @transform_0, window_bounds = array<i64: 16, 128>}, {transform_indices = @transform_1, window_bounds = array<i64: 16, 128>}, {pipeline_mode = #tpu.pipeline_mode<synchronous>, transform_indices = @transform_2, window_bounds = array<i64: 128, 128>}, {pipeline_mode = #tpu.pipeline_mode<synchronous>, transform_indices = @transform_3, window_bounds = array<i64: 1, 128>}, {transform_indices = @transform_4, window_bounds = array<i64: 16, 128>}]} {
    %c0 = arith.constant 0 : index
    %c0_0 = arith.constant 0 : index
    %0 = vector.load %arg1[%c0, %c0_0] : memref<16x128xf32, #tpu.memory_space<vmem>>, vector<16x128xf32>
    %c0_1 = arith.constant 0 : index
    %c0_2 = arith.constant 0 : index
    %1 = vector.load %arg2[%c0_1, %c0_2] : memref<16x128xf32, #tpu.memory_space<vmem>>, vector<16x128xf32>
    %2 = arith.addf %0, %1 : vector<16x128xf32>
    %c0_3 = arith.constant 0 : index
    %c0_4 = arith.constant 0 : index
    %3 = vector.load %arg3[%c0_3, %c0_4] : memref<128x128xf32, #tpu.memory_space<vmem>>, vector<128x128xf32>
    %cst = arith.constant dense<0.000000e+00> : vector<16x128xf32>
    %4 = tpu.matmul %2, %3, %cst {dimension_numbers = #tpu.dot_dimension_numbers<[1], [0], [0], [1], [0, 0, 1, 1], [], []>} : vector<16x128xf32>, vector<128x128xf32>, vector<16x128xf32> -> vector<16x128xf32>
    %c0_5 = arith.constant 0 : index
    %c0_6 = arith.constant 0 : index
    %5 = vector.load %arg4[%c0_5, %c0_6] : memref<1x128xf32, #tpu.memory_space<vmem>>, vector<1x128xf32>
    %6 = vector.broadcast %5 : vector<1x128xf32> to vector<16x128xf32>
    %7 = arith.addf %4, %6 : vector<16x128xf32>
    %c0_7 = arith.constant 0 : index
    %c0_8 = arith.constant 0 : index
    %8 = vector.load %arg5[%c0_7, %c0_8] : memref<16x128xf32, #tpu.memory_space<vmem>>, vector<16x128xf32>
    tpu.vector_store %arg5[%c0_7, %c0_8], %7 {strides = array<i32>} : memref<16x128xf32, #tpu.memory_space<vmem>>, vector<16x128xf32>,
    return
  }
  func.func @transform_0(%arg0: i32) -> (i32, i32) {
    %c0_i32 = arith.constant 0 : i32
    %c0_i32_0 = arith.constant 0 : i32
    return %arg0, %c0_i32 : i32, i32
  }
  func.func @transform_1(%arg0: i32) -> (i32, i32) {
    %c0_i32 = arith.constant 0 : i32
    %c0_i32_0 = arith.constant 0 : i32
    return %arg0, %c0_i32 : i32, i32
  }
  func.func @transform_2(%arg0: i32) -> (i32, i32) {
    %c0_i32 = arith.constant 0 : i32
    %c0_i32_0 = arith.constant 0 : i32
    %c0_i32_1 = arith.constant 0 : i32
    return %c0_i32, %c0_i32_0 : i32, i32
  }
  func.func @transform_3(%arg0: i32) -> (i32, i32) {
    %c0_i32 = arith.constant 0 : i32
    %c0_i32_0 = arith.constant 0 : i32
    %c0_i32_1 = arith.constant 0 : i32
    return %c0_i32, %c0_i32_0 : i32, i32
  }
  func.func @transform_4(%arg0: i32) -> (i32, i32) {
    %c0_i32 = arith.constant 0 : i32
    %c0_i32_0 = arith.constant 0 : i32
    return %arg0, %c0_i32 : i32, i32
  }
}

module attributes {stable_mosaic.version = 11 : i64} {
  func.func @_cross_kv_kernel(%arg0: i32, %arg1: memref<32x128xf32, #tpu.memory_space<vmem>>, %arg2: memref<32x128xf32, #tpu.memory_space<vmem>>, %arg3: memref<128x128xf32, #tpu.memory_space<vmem>>, %arg4: memref<1x128xf32, #tpu.memory_space<vmem>>, %arg5: memref<128x128xf32, #tpu.memory_space<vmem>>, %arg6: memref<1x128xf32, #tpu.memory_space<vmem>>, %arg7: memref<32x128xf32, #tpu.memory_space<vmem>>, %arg8: memref<32x128xf32, #tpu.memory_space<vmem>>) attributes {dimension_semantics = [#tpu.dimension_semantics<parallel>], iteration_bounds = array<i64: 1>, scalar_prefetch = 0 : i64, scratch_operands = 0 : i64, tpu.core_type = #tpu.core_type<tc>, window_params = [{transform_indices = @transform_0, window_bounds = array<i64: 32, 128>}, {transform_indices = @transform_1, window_bounds = array<i64: 32, 128>}, {pipeline_mode = #tpu.pipeline_mode<synchronous>, transform_indices = @transform_2, window_bounds = array<i64: 128, 128>}, {pipeline_mode = #tpu.pipeline_mode<synchronous>, transform_indices = @transform_3, window_bounds = array<i64: 1, 128>}, {pipeline_mode = #tpu.pipeline_mode<synchronous>, transform_indices = @transform_4, window_bounds = array<i64: 128, 128>}, {pipeline_mode = #tpu.pipeline_mode<synchronous>, transform_indices = @transform_5, window_bounds = array<i64: 1, 128>}, {transform_indices = @transform_6, window_bounds = array<i64: 32, 128>}, {transform_indices = @transform_7, window_bounds = array<i64: 32, 128>}]} {
    %c0 = arith.constant 0 : index
    %c0_0 = arith.constant 0 : index
    %0 = vector.load %arg1[%c0, %c0_0] : memref<32x128xf32, #tpu.memory_space<vmem>>, vector<32x128xf32>
    %c0_1 = arith.constant 0 : index
    %c0_2 = arith.constant 0 : index
    %1 = vector.load %arg2[%c0_1, %c0_2] : memref<32x128xf32, #tpu.memory_space<vmem>>, vector<32x128xf32>
    %2 = arith.addf %0, %1 : vector<32x128xf32>
    %c0_3 = arith.constant 0 : index
    %c0_4 = arith.constant 0 : index
    %3 = vector.load %arg3[%c0_3, %c0_4] : memref<128x128xf32, #tpu.memory_space<vmem>>, vector<128x128xf32>
    %cst = arith.constant dense<0.000000e+00> : vector<32x128xf32>
    %4 = tpu.matmul %2, %3, %cst {dimension_numbers = #tpu.dot_dimension_numbers<[1], [0], [0], [1], [0, 0, 1, 1], [], []>} : vector<32x128xf32>, vector<128x128xf32>, vector<32x128xf32> -> vector<32x128xf32>
    %c0_5 = arith.constant 0 : index
    %c0_6 = arith.constant 0 : index
    %5 = vector.load %arg4[%c0_5, %c0_6] : memref<1x128xf32, #tpu.memory_space<vmem>>, vector<1x128xf32>
    %6 = vector.broadcast %5 : vector<1x128xf32> to vector<32x128xf32>
    %7 = arith.addf %4, %6 : vector<32x128xf32>
    %c0_7 = arith.constant 0 : index
    %c0_8 = arith.constant 0 : index
    %8 = vector.load %arg7[%c0_7, %c0_8] : memref<32x128xf32, #tpu.memory_space<vmem>>, vector<32x128xf32>
    tpu.vector_store %arg7[%c0_7, %c0_8], %7 {strides = array<i32>} : memref<32x128xf32, #tpu.memory_space<vmem>>, vector<32x128xf32>,
    %c0_9 = arith.constant 0 : index
    %c0_10 = arith.constant 0 : index
    %9 = vector.load %arg5[%c0_9, %c0_10] : memref<128x128xf32, #tpu.memory_space<vmem>>, vector<128x128xf32>
    %cst_11 = arith.constant dense<0.000000e+00> : vector<32x128xf32>
    %10 = tpu.matmul %0, %9, %cst_11 {dimension_numbers = #tpu.dot_dimension_numbers<[1], [0], [0], [1], [0, 0, 1, 1], [], []>} : vector<32x128xf32>, vector<128x128xf32>, vector<32x128xf32> -> vector<32x128xf32>
    %c0_12 = arith.constant 0 : index
    %c0_13 = arith.constant 0 : index
    %11 = vector.load %arg6[%c0_12, %c0_13] : memref<1x128xf32, #tpu.memory_space<vmem>>, vector<1x128xf32>
    %12 = vector.broadcast %11 : vector<1x128xf32> to vector<32x128xf32>
    %13 = arith.addf %10, %12 : vector<32x128xf32>
    %c0_14 = arith.constant 0 : index
    %c0_15 = arith.constant 0 : index
    %14 = vector.load %arg8[%c0_14, %c0_15] : memref<32x128xf32, #tpu.memory_space<vmem>>, vector<32x128xf32>
    tpu.vector_store %arg8[%c0_14, %c0_15], %13 {strides = array<i32>} : memref<32x128xf32, #tpu.memory_space<vmem>>, vector<32x128xf32>,
    return
  }
  func.func @transform_0(%arg0: i32) -> (i32, i32) {
    %c0_i32 = arith.constant 0 : i32
    %c0_i32_0 = arith.constant 0 : i32
    return %arg0, %c0_i32 : i32, i32
  }
  func.func @transform_1(%arg0: i32) -> (i32, i32) {
    %c0_i32 = arith.constant 0 : i32
    %c0_i32_0 = arith.constant 0 : i32
    return %arg0, %c0_i32 : i32, i32
  }
  func.func @transform_2(%arg0: i32) -> (i32, i32) {
    %c0_i32 = arith.constant 0 : i32
    %c0_i32_0 = arith.constant 0 : i32
    %c0_i32_1 = arith.constant 0 : i32
    return %c0_i32, %c0_i32_0 : i32, i32
  }
  func.func @transform_3(%arg0: i32) -> (i32, i32) {
    %c0_i32 = arith.constant 0 : i32
    %c0_i32_0 = arith.constant 0 : i32
    %c0_i32_1 = arith.constant 0 : i32
    return %c0_i32, %c0_i32_0 : i32, i32
  }
  func.func @transform_4(%arg0: i32) -> (i32, i32) {
    %c0_i32 = arith.constant 0 : i32
    %c0_i32_0 = arith.constant 0 : i32
    %c0_i32_1 = arith.constant 0 : i32
    return %c0_i32, %c0_i32_0 : i32, i32
  }
  func.func @transform_5(%arg0: i32) -> (i32, i32) {
    %c0_i32 = arith.constant 0 : i32
    %c0_i32_0 = arith.constant 0 : i32
    %c0_i32_1 = arith.constant 0 : i32
    return %c0_i32, %c0_i32_0 : i32, i32
  }
  func.func @transform_6(%arg0: i32) -> (i32, i32) {
    %c0_i32 = arith.constant 0 : i32
    %c0_i32_0 = arith.constant 0 : i32
    return %arg0, %c0_i32 : i32, i32
  }
  func.func @transform_7(%arg0: i32) -> (i32, i32) {
    %c0_i32 = arith.constant 0 : i32
    %c0_i32_0 = arith.constant 0 : i32
    return %arg0, %c0_i32 : i32, i32
  }
}

module attributes {stable_mosaic.version = 11 : i64} {
  func.func @_mha_core_kernel(%arg0: i32, %arg1: memref<1x4x8x32xf32, #tpu.memory_space<vmem>>, %arg2: memref<1x4x16x32xf32, #tpu.memory_space<vmem>>, %arg3: memref<1x4x16x32xf32, #tpu.memory_space<vmem>>, %arg4: memref<1x4x8x32xf32, #tpu.memory_space<vmem>>) attributes {dimension_semantics = [#tpu.dimension_semantics<parallel>], iteration_bounds = array<i64: 2>, scalar_prefetch = 0 : i64, scratch_operands = 0 : i64, tpu.core_type = #tpu.core_type<tc>, window_params = [{transform_indices = @transform_0, window_bounds = array<i64: 1, 4, 8, 32>}, {transform_indices = @transform_1, window_bounds = array<i64: 1, 4, 16, 32>}, {transform_indices = @transform_2, window_bounds = array<i64: 1, 4, 16, 32>}, {transform_indices = @transform_3, window_bounds = array<i64: 1, 4, 8, 32>}]} {
    %c0 = arith.constant 0 : index
    %c0_0 = arith.constant 0 : index
    %c0_1 = arith.constant 0 : index
    %c0_2 = arith.constant 0 : index
    %0 = vector.load %arg1[%c0, %c0_0, %c0_1, %c0_2] : memref<1x4x8x32xf32, #tpu.memory_space<vmem>>, vector<1x4x8x32xf32>
    %1 = vector.shape_cast %0 : vector<1x4x8x32xf32> to vector<4x8x32xf32>
    %cst = arith.constant 0.176776692 : f32
    %2 = vector.broadcast %cst : f32 to vector<4x8x32xf32>
    %3 = arith.mulf %1, %2 : vector<4x8x32xf32>
    %c0_3 = arith.constant 0 : index
    %c0_4 = arith.constant 0 : index
    %c0_5 = arith.constant 0 : index
    %c0_6 = arith.constant 0 : index
    %4 = vector.load %arg2[%c0_3, %c0_4, %c0_5, %c0_6] : memref<1x4x16x32xf32, #tpu.memory_space<vmem>>, vector<1x4x16x32xf32>
    %5 = vector.shape_cast %4 : vector<1x4x16x32xf32> to vector<4x16x32xf32>
    %c0_7 = arith.constant 0 : index
    %c0_8 = arith.constant 0 : index
    %c0_9 = arith.constant 0 : index
    %c0_10 = arith.constant 0 : index
    %6 = vector.load %arg3[%c0_7, %c0_8, %c0_9, %c0_10] : memref<1x4x16x32xf32, #tpu.memory_space<vmem>>, vector<1x4x16x32xf32>
    %7 = vector.shape_cast %6 : vector<1x4x16x32xf32> to vector<4x16x32xf32>
    "tpu.trace_start"() <{level = 10 : i32, message = "htd,hsd->hts"}> : () -> ()
    %cst_11 = arith.constant dense<0.000000e+00> : vector<4x8x16xf32>
    %8 = tpu.matmul %3, %5, %cst_11 {dimension_numbers = #tpu.dot_dimension_numbers<[2], [2], [1], [1], [0, 0, 0, 1, 1, 1], [0], [0]>} : vector<4x8x32xf32>, vector<4x16x32xf32>, vector<4x8x16xf32> -> vector<4x8x16xf32>
    "tpu.trace_stop"() : () -> ()
    %cst_12 = arith.constant dense<0xFF800000> : vector<4x8xf32>
    %9 = vector.multi_reduction <maximumf>, %8, %cst_12 [2] : vector<4x8x16xf32> to vector<4x8xf32>
    %10 = vector.shape_cast %9 : vector<4x8xf32> to vector<4x8x1xf32>
    %11 = vector.broadcast %10 : vector<4x8x1xf32> to vector<4x8x16xf32>
    %12 = arith.subf %8, %11 : vector<4x8x16xf32>
    %13 = math.exp %12 : vector<4x8x16xf32>
    %cst_13 = arith.constant dense<0.000000e+00> : vector<4x8xf32>
    %14 = vector.multi_reduction <add>, %13, %cst_13 [2] : vector<4x8x16xf32> to vector<4x8xf32>
    %15 = vector.shape_cast %14 : vector<4x8xf32> to vector<4x8x1xf32>
    %16 = vector.broadcast %15 : vector<4x8x1xf32> to vector<4x8x16xf32>
    %17 = arith.divf %13, %16 : vector<4x8x16xf32>
    "tpu.trace_start"() <{level = 10 : i32, message = "hts,hsd->htd"}> : () -> ()
    %cst_14 = arith.constant dense<0.000000e+00> : vector<4x8x32xf32>
    %18 = tpu.matmul %17, %7, %cst_14 {dimension_numbers = #tpu.dot_dimension_numbers<[2], [1], [1], [2], [0, 0, 0, 1, 1, 2], [0], [0]>} : vector<4x8x16xf32>, vector<4x16x32xf32>, vector<4x8x32xf32> -> vector<4x8x32xf32>
    "tpu.trace_stop"() : () -> ()
    %c0_15 = arith.constant 0 : index
    %c0_16 = arith.constant 0 : index
    %c0_17 = arith.constant 0 : index
    %c0_18 = arith.constant 0 : index
    %19 = vector.load %arg4[%c0_15, %c0_16, %c0_17, %c0_18] : memref<1x4x8x32xf32, #tpu.memory_space<vmem>>, vector<1x4x8x32xf32>
    %20 = vector.shape_cast %19 : vector<1x4x8x32xf32> to vector<4x8x32xf32>
    %21 = vector.shape_cast %18 : vector<4x8x32xf32> to vector<1x4x8x32xf32>
    tpu.vector_store %arg4[%c0_15, %c0_16, %c0_17, %c0_18], %21 {strides = array<i32>} : memref<1x4x8x32xf32, #tpu.memory_space<vmem>>, vector<1x4x8x32xf32>,
    return
  }
  func.func @transform_0(%arg0: i32) -> (i32, i32, i32, i32) {
    %c0_i32 = arith.constant 0 : i32
    %c0_i32_0 = arith.constant 0 : i32
    %c0_i32_1 = arith.constant 0 : i32
    %c0_i32_2 = arith.constant 0 : i32
    return %arg0, %c0_i32, %c0_i32_0, %c0_i32_1 : i32, i32, i32, i32
  }
  func.func @transform_1(%arg0: i32) -> (i32, i32, i32, i32) {
    %c0_i32 = arith.constant 0 : i32
    %c0_i32_0 = arith.constant 0 : i32
    %c0_i32_1 = arith.constant 0 : i32
    %c0_i32_2 = arith.constant 0 : i32
    return %arg0, %c0_i32, %c0_i32_0, %c0_i32_1 : i32, i32, i32, i32
  }
  func.func @transform_2(%arg0: i32) -> (i32, i32, i32, i32) {
    %c0_i32 = arith.constant 0 : i32
    %c0_i32_0 = arith.constant 0 : i32
    %c0_i32_1 = arith.constant 0 : i32
    %c0_i32_2 = arith.constant 0 : i32
    return %arg0, %c0_i32, %c0_i32_0, %c0_i32_1 : i32, i32, i32, i32
  }
  func.func @transform_3(%arg0: i32) -> (i32, i32, i32, i32) {
    %c0_i32 = arith.constant 0 : i32
    %c0_i32_0 = arith.constant 0 : i32
    %c0_i32_1 = arith.constant 0 : i32
    %c0_i32_2 = arith.constant 0 : i32
    return %arg0, %c0_i32, %c0_i32_0, %c0_i32_1 : i32, i32, i32, i32
  }
}

module attributes {stable_mosaic.version = 11 : i64} {
  func.func @_self_qkv_kernel(%arg0: i32, %arg1: memref<16x128xf32, #tpu.memory_space<vmem>>, %arg2: memref<16x128xf32, #tpu.memory_space<vmem>>, %arg3: memref<128x128xf32, #tpu.memory_space<vmem>>, %arg4: memref<1x128xf32, #tpu.memory_space<vmem>>, %arg5: memref<128x128xf32, #tpu.memory_space<vmem>>, %arg6: memref<1x128xf32, #tpu.memory_space<vmem>>, %arg7: memref<128x128xf32, #tpu.memory_space<vmem>>, %arg8: memref<1x128xf32, #tpu.memory_space<vmem>>, %arg9: memref<16x128xf32, #tpu.memory_space<vmem>>, %arg10: memref<16x128xf32, #tpu.memory_space<vmem>>, %arg11: memref<16x128xf32, #tpu.memory_space<vmem>>) attributes {dimension_semantics = [#tpu.dimension_semantics<parallel>], iteration_bounds = array<i64: 1>, scalar_prefetch = 0 : i64, scratch_operands = 0 : i64, tpu.core_type = #tpu.core_type<tc>, window_params = [{transform_indices = @transform_0, window_bounds = array<i64: 16, 128>}, {transform_indices = @transform_1, window_bounds = array<i64: 16, 128>}, {pipeline_mode = #tpu.pipeline_mode<synchronous>, transform_indices = @transform_2, window_bounds = array<i64: 128, 128>}, {pipeline_mode = #tpu.pipeline_mode<synchronous>, transform_indices = @transform_3, window_bounds = array<i64: 1, 128>}, {pipeline_mode = #tpu.pipeline_mode<synchronous>, transform_indices = @transform_4, window_bounds = array<i64: 128, 128>}, {pipeline_mode = #tpu.pipeline_mode<synchronous>, transform_indices = @transform_5, window_bounds = array<i64: 1, 128>}, {pipeline_mode = #tpu.pipeline_mode<synchronous>, transform_indices = @transform_6, window_bounds = array<i64: 128, 128>}, {pipeline_mode = #tpu.pipeline_mode<synchronous>, transform_indices = @transform_7, window_bounds = array<i64: 1, 128>}, {transform_indices = @transform_8, window_bounds = array<i64: 16, 128>}, {transform_indices = @transform_9, window_bounds = array<i64: 16, 128>}, {transform_indices = @transform_10, window_bounds = array<i64: 16, 128>}]} {
    %c0 = arith.constant 0 : index
    %c0_0 = arith.constant 0 : index
    %0 = vector.load %arg1[%c0, %c0_0] : memref<16x128xf32, #tpu.memory_space<vmem>>, vector<16x128xf32>
    %c0_1 = arith.constant 0 : index
    %c0_2 = arith.constant 0 : index
    %1 = vector.load %arg2[%c0_1, %c0_2] : memref<16x128xf32, #tpu.memory_space<vmem>>, vector<16x128xf32>
    %2 = arith.addf %0, %1 : vector<16x128xf32>
    %c0_3 = arith.constant 0 : index
    %c0_4 = arith.constant 0 : index
    %3 = vector.load %arg3[%c0_3, %c0_4] : memref<128x128xf32, #tpu.memory_space<vmem>>, vector<128x128xf32>
    %cst = arith.constant dense<0.000000e+00> : vector<16x128xf32>
    %4 = tpu.matmul %2, %3, %cst {dimension_numbers = #tpu.dot_dimension_numbers<[1], [0], [0], [1], [0, 0, 1, 1], [], []>} : vector<16x128xf32>, vector<128x128xf32>, vector<16x128xf32> -> vector<16x128xf32>
    %c0_5 = arith.constant 0 : index
    %c0_6 = arith.constant 0 : index
    %5 = vector.load %arg4[%c0_5, %c0_6] : memref<1x128xf32, #tpu.memory_space<vmem>>, vector<1x128xf32>
    %6 = vector.broadcast %5 : vector<1x128xf32> to vector<16x128xf32>
    %7 = arith.addf %4, %6 : vector<16x128xf32>
    %c0_7 = arith.constant 0 : index
    %c0_8 = arith.constant 0 : index
    %8 = vector.load %arg9[%c0_7, %c0_8] : memref<16x128xf32, #tpu.memory_space<vmem>>, vector<16x128xf32>
    tpu.vector_store %arg9[%c0_7, %c0_8], %7 {strides = array<i32>} : memref<16x128xf32, #tpu.memory_space<vmem>>, vector<16x128xf32>,
    %c0_9 = arith.constant 0 : index
    %c0_10 = arith.constant 0 : index
    %9 = vector.load %arg5[%c0_9, %c0_10] : memref<128x128xf32, #tpu.memory_space<vmem>>, vector<128x128xf32>
    %cst_11 = arith.constant dense<0.000000e+00> : vector<16x128xf32>
    %10 = tpu.matmul %2, %9, %cst_11 {dimension_numbers = #tpu.dot_dimension_numbers<[1], [0], [0], [1], [0, 0, 1, 1], [], []>} : vector<16x128xf32>, vector<128x128xf32>, vector<16x128xf32> -> vector<16x128xf32>
    %c0_12 = arith.constant 0 : index
    %c0_13 = arith.constant 0 : index
    %11 = vector.load %arg6[%c0_12, %c0_13] : memref<1x128xf32, #tpu.memory_space<vmem>>, vector<1x128xf32>
    %12 = vector.broadcast %11 : vector<1x128xf32> to vector<16x128xf32>
    %13 = arith.addf %10, %12 : vector<16x128xf32>
    %c0_14 = arith.constant 0 : index
    %c0_15 = arith.constant 0 : index
    %14 = vector.load %arg10[%c0_14, %c0_15] : memref<16x128xf32, #tpu.memory_space<vmem>>, vector<16x128xf32>
    tpu.vector_store %arg10[%c0_14, %c0_15], %13 {strides = array<i32>} : memref<16x128xf32, #tpu.memory_space<vmem>>, vector<16x128xf32>,
    %c0_16 = arith.constant 0 : index
    %c0_17 = arith.constant 0 : index
    %15 = vector.load %arg7[%c0_16, %c0_17] : memref<128x128xf32, #tpu.memory_space<vmem>>, vector<128x128xf32>
    %cst_18 = arith.constant dense<0.000000e+00> : vector<16x128xf32>
    %16 = tpu.matmul %0, %15, %cst_18 {dimension_numbers = #tpu.dot_dimension_numbers<[1], [0], [0], [1], [0, 0, 1, 1], [], []>} : vector<16x128xf32>, vector<128x128xf32>, vector<16x128xf32> -> vector<16x128xf32>
    %c0_19 = arith.constant 0 : index
    %c0_20 = arith.constant 0 : index
    %17 = vector.load %arg8[%c0_19, %c0_20] : memref<1x128xf32, #tpu.memory_space<vmem>>, vector<1x128xf32>
    %18 = vector.broadcast %17 : vector<1x128xf32> to vector<16x128xf32>
    %19 = arith.addf %16, %18 : vector<16x128xf32>
    %c0_21 = arith.constant 0 : index
    %c0_22 = arith.constant 0 : index
    %20 = vector.load %arg11[%c0_21, %c0_22] : memref<16x128xf32, #tpu.memory_space<vmem>>, vector<16x128xf32>
    tpu.vector_store %arg11[%c0_21, %c0_22], %19 {strides = array<i32>} : memref<16x128xf32, #tpu.memory_space<vmem>>, vector<16x128xf32>,
    return
  }
  func.func @transform_0(%arg0: i32) -> (i32, i32) {
    %c0_i32 = arith.constant 0 : i32
    %c0_i32_0 = arith.constant 0 : i32
    return %arg0, %c0_i32 : i32, i32
  }
  func.func @transform_1(%arg0: i32) -> (i32, i32) {
    %c0_i32 = arith.constant 0 : i32
    %c0_i32_0 = arith.constant 0 : i32
    return %arg0, %c0_i32 : i32, i32
  }
  func.func @transform_2(%arg0: i32) -> (i32, i32) {
    %c0_i32 = arith.constant 0 : i32
    %c0_i32_0 = arith.constant 0 : i32
    %c0_i32_1 = arith.constant 0 : i32
    return %c0_i32, %c0_i32_0 : i32, i32
  }
  func.func @transform_3(%arg0: i32) -> (i32, i32) {
    %c0_i32 = arith.constant 0 : i32
    %c0_i32_0 = arith.constant 0 : i32
    %c0_i32_1 = arith.constant 0 : i32
    return %c0_i32, %c0_i32_0 : i32, i32
  }
  func.func @transform_4(%arg0: i32) -> (i32, i32) {
    %c0_i32 = arith.constant 0 : i32
    %c0_i32_0 = arith.constant 0 : i32
    %c0_i32_1 = arith.constant 0 : i32
    return %c0_i32, %c0_i32_0 : i32, i32
  }
  func.func @transform_5(%arg0: i32) -> (i32, i32) {
    %c0_i32 = arith.constant 0 : i32
    %c0_i32_0 = arith.constant 0 : i32
    %c0_i32_1 = arith.constant 0 : i32
    return %c0_i32, %c0_i32_0 : i32, i32
  }
  func.func @transform_6(%arg0: i32) -> (i32, i32) {
    %c0_i32 = arith.constant 0 : i32
    %c0_i32_0 = arith.constant 0 : i32
    %c0_i32_1 = arith.constant 0 : i32
    return %c0_i32, %c0_i32_0 : i32, i32
  }
  func.func @transform_7(%arg0: i32) -> (i32, i32) {
    %c0_i32 = arith.constant 0 : i32
    %c0_i32_0 = arith.constant 0 : i32
    %c0_i32_1 = arith.constant 0 : i32
    return %c0_i32, %c0_i32_0 : i32, i32
  }
  func.func @transform_8(%arg0: i32) -> (i32, i32) {
    %c0_i32 = arith.constant 0 : i32
    %c0_i32_0 = arith.constant 0 : i32
    return %arg0, %c0_i32 : i32, i32
  }
  func.func @transform_9(%arg0: i32) -> (i32, i32) {
    %c0_i32 = arith.constant 0 : i32
    %c0_i32_0 = arith.constant 0 : i32
    return %arg0, %c0_i32 : i32, i32
  }
  func.func @transform_10(%arg0: i32) -> (i32, i32) {
    %c0_i32 = arith.constant 0 : i32
    %c0_i32_0 = arith.constant 0 : i32
    return %arg0, %c0_i32 : i32, i32
  }
}

module attributes {stable_mosaic.version = 11 : i64} {
  func.func @_ffn_add_ln_kernel(%arg0: i32, %arg1: memref<16x128xf32, #tpu.memory_space<vmem>>, %arg2: memref<128x256xf32, #tpu.memory_space<vmem>>, %arg3: memref<1x256xf32, #tpu.memory_space<vmem>>, %arg4: memref<256x128xf32, #tpu.memory_space<vmem>>, %arg5: memref<1x128xf32, #tpu.memory_space<vmem>>, %arg6: memref<1x128xf32, #tpu.memory_space<vmem>>, %arg7: memref<1x128xf32, #tpu.memory_space<vmem>>, %arg8: memref<16x128xf32, #tpu.memory_space<vmem>>) attributes {dimension_semantics = [#tpu.dimension_semantics<parallel>], iteration_bounds = array<i64: 1>, scalar_prefetch = 0 : i64, scratch_operands = 0 : i64, tpu.core_type = #tpu.core_type<tc>, window_params = [{transform_indices = @transform_0, window_bounds = array<i64: 16, 128>}, {pipeline_mode = #tpu.pipeline_mode<synchronous>, transform_indices = @transform_1, window_bounds = array<i64: 128, 256>}, {pipeline_mode = #tpu.pipeline_mode<synchronous>, transform_indices = @transform_2, window_bounds = array<i64: 1, 256>}, {pipeline_mode = #tpu.pipeline_mode<synchronous>, transform_indices = @transform_3, window_bounds = array<i64: 256, 128>}, {pipeline_mode = #tpu.pipeline_mode<synchronous>, transform_indices = @transform_4, window_bounds = array<i64: 1, 128>}, {pipeline_mode = #tpu.pipeline_mode<synchronous>, transform_indices = @transform_5, window_bounds = array<i64: 1, 128>}, {pipeline_mode = #tpu.pipeline_mode<synchronous>, transform_indices = @transform_6, window_bounds = array<i64: 1, 128>}, {transform_indices = @transform_7, window_bounds = array<i64: 16, 128>}]} {
    %c0 = arith.constant 0 : index
    %c0_0 = arith.constant 0 : index
    %0 = vector.load %arg1[%c0, %c0_0] : memref<16x128xf32, #tpu.memory_space<vmem>>, vector<16x128xf32>
    %c0_1 = arith.constant 0 : index
    %c0_2 = arith.constant 0 : index
    %1 = vector.load %arg2[%c0_1, %c0_2] : memref<128x256xf32, #tpu.memory_space<vmem>>, vector<128x256xf32>
    %cst = arith.constant dense<0.000000e+00> : vector<16x256xf32>
    %2 = tpu.matmul %0, %1, %cst {dimension_numbers = #tpu.dot_dimension_numbers<[1], [0], [0], [1], [0, 0, 1, 1], [], []>} : vector<16x128xf32>, vector<128x256xf32>, vector<16x256xf32> -> vector<16x256xf32>
    %c0_3 = arith.constant 0 : index
    %c0_4 = arith.constant 0 : index
    %3 = vector.load %arg3[%c0_3, %c0_4] : memref<1x256xf32, #tpu.memory_space<vmem>>, vector<1x256xf32>
    %4 = vector.broadcast %3 : vector<1x256xf32> to vector<16x256xf32>
    %5 = arith.addf %2, %4 : vector<16x256xf32>
    %cst_5 = arith.constant 0.000000e+00 : f32
    %6 = vector.broadcast %cst_5 : f32 to vector<16x256xf32>
    %7 = arith.maximumf %5, %6 : vector<16x256xf32>
    %c0_6 = arith.constant 0 : index
    %c0_7 = arith.constant 0 : index
    %8 = vector.load %arg4[%c0_6, %c0_7] : memref<256x128xf32, #tpu.memory_space<vmem>>, vector<256x128xf32>
    %cst_8 = arith.constant dense<0.000000e+00> : vector<16x128xf32>
    %9 = tpu.matmul %7, %8, %cst_8 {dimension_numbers = #tpu.dot_dimension_numbers<[1], [0], [0], [1], [0, 0, 1, 1], [], []>} : vector<16x256xf32>, vector<256x128xf32>, vector<16x128xf32> -> vector<16x128xf32>
    %c0_9 = arith.constant 0 : index
    %c0_10 = arith.constant 0 : index
    %10 = vector.load %arg5[%c0_9, %c0_10] : memref<1x128xf32, #tpu.memory_space<vmem>>, vector<1x128xf32>
    %11 = vector.broadcast %10 : vector<1x128xf32> to vector<16x128xf32>
    %12 = arith.addf %9, %11 : vector<16x128xf32>
    %13 = arith.addf %12, %0 : vector<16x128xf32>
    %cst_11 = arith.constant dense<0.000000e+00> : vector<16xf32>
    %14 = vector.multi_reduction <add>, %13, %cst_11 [1] : vector<16x128xf32> to vector<16xf32>
    %15 = vector.shape_cast %14 : vector<16xf32> to vector<16x1xf32>
    %cst_12 = arith.constant 1.280000e+02 : f32
    %16 = vector.broadcast %cst_12 : f32 to vector<16x1xf32>
    %17 = arith.divf %15, %16 : vector<16x1xf32>
    %18 = vector.broadcast %17 : vector<16x1xf32> to vector<16x128xf32>
    %19 = arith.subf %13, %18 : vector<16x128xf32>
    %20 = arith.mulf %19, %19 : vector<16x128xf32>
    %cst_13 = arith.constant dense<0.000000e+00> : vector<16xf32>
    %21 = vector.multi_reduction <add>, %20, %cst_13 [1] : vector<16x128xf32> to vector<16xf32>
    %22 = vector.shape_cast %21 : vector<16xf32> to vector<16x1xf32>
    %cst_14 = arith.constant 1.280000e+02 : f32
    %23 = vector.broadcast %cst_14 : f32 to vector<16x1xf32>
    %24 = arith.divf %22, %23 : vector<16x1xf32>
    %cst_15 = arith.constant 9.99999974E-6 : f32
    %25 = vector.broadcast %cst_15 : f32 to vector<16x1xf32>
    %26 = arith.addf %24, %25 : vector<16x1xf32>
    %27 = math.rsqrt %26 : vector<16x1xf32>
    %28 = vector.broadcast %27 : vector<16x1xf32> to vector<16x128xf32>
    %29 = arith.mulf %19, %28 : vector<16x128xf32>
    %c0_16 = arith.constant 0 : index
    %c0_17 = arith.constant 0 : index
    %30 = vector.load %arg6[%c0_16, %c0_17] : memref<1x128xf32, #tpu.memory_space<vmem>>, vector<1x128xf32>
    %31 = vector.broadcast %30 : vector<1x128xf32> to vector<16x128xf32>
    %32 = arith.mulf %29, %31 : vector<16x128xf32>
    %c0_18 = arith.constant 0 : index
    %c0_19 = arith.constant 0 : index
    %33 = vector.load %arg7[%c0_18, %c0_19] : memref<1x128xf32, #tpu.memory_space<vmem>>, vector<1x128xf32>
    %34 = vector.broadcast %33 : vector<1x128xf32> to vector<16x128xf32>
    %35 = arith.addf %32, %34 : vector<16x128xf32>
    %c0_20 = arith.constant 0 : index
    %c0_21 = arith.constant 0 : index
    %36 = vector.load %arg8[%c0_20, %c0_21] : memref<16x128xf32, #tpu.memory_space<vmem>>, vector<16x128xf32>
    tpu.vector_store %arg8[%c0_20, %c0_21], %35 {strides = array<i32>} : memref<16x128xf32, #tpu.memory_space<vmem>>, vector<16x128xf32>,
    return
  }
  func.func @transform_0(%arg0: i32) -> (i32, i32) {
    %c0_i32 = arith.constant 0 : i32
    %c0_i32_0 = arith.constant 0 : i32
    return %arg0, %c0_i32 : i32, i32
  }
  func.func @transform_1(%arg0: i32) -> (i32, i32) {
    %c0_i32 = arith.constant 0 : i32
    %c0_i32_0 = arith.constant 0 : i32
    %c0_i32_1 = arith.constant 0 : i32
    return %c0_i32, %c0_i32_0 : i32, i32
  }
  func.func @transform_2(%arg0: i32) -> (i32, i32) {
    %c0_i32 = arith.constant 0 : i32
    %c0_i32_0 = arith.constant 0 : i32
    %c0_i32_1 = arith.constant 0 : i32
    return %c0_i32, %c0_i32_0 : i32, i32
  }
  func.func @transform_3(%arg0: i32) -> (i32, i32) {
    %c0_i32 = arith.constant 0 : i32
    %c0_i32_0 = arith.constant 0 : i32
    %c0_i32_1 = arith.constant 0 : i32
    return %c0_i32, %c0_i32_0 : i32, i32
  }
  func.func @transform_4(%arg0: i32) -> (i32, i32) {
    %c0_i32 = arith.constant 0 : i32
    %c0_i32_0 = arith.constant 0 : i32
    %c0_i32_1 = arith.constant 0 : i32
    return %c0_i32, %c0_i32_0 : i32, i32
  }
  func.func @transform_5(%arg0: i32) -> (i32, i32) {
    %c0_i32 = arith.constant 0 : i32
    %c0_i32_0 = arith.constant 0 : i32
    %c0_i32_1 = arith.constant 0 : i32
    return %c0_i32, %c0_i32_0 : i32, i32
  }
  func.func @transform_6(%arg0: i32) -> (i32, i32) {
    %c0_i32 = arith.constant 0 : i32
    %c0_i32_0 = arith.constant 0 : i32
    %c0_i32_1 = arith.constant 0 : i32
    return %c0_i32, %c0_i32_0 : i32, i32
  }
  func.func @transform_7(%arg0: i32) -> (i32, i32) {
    %c0_i32 = arith.constant 0 : i32
    %c0_i32_0 = arith.constant 0 : i32
    return %arg0, %c0_i32 : i32, i32
  }
}

module attributes {stable_mosaic.version = 11 : i64} {
  func.func @_ln_kernel(%arg0: i32, %arg1: memref<16x128xf32, #tpu.memory_space<vmem>>, %arg2: memref<1x128xf32, #tpu.memory_space<vmem>>, %arg3: memref<1x128xf32, #tpu.memory_space<vmem>>, %arg4: memref<16x128xf32, #tpu.memory_space<vmem>>) attributes {dimension_semantics = [#tpu.dimension_semantics<parallel>], iteration_bounds = array<i64: 1>, scalar_prefetch = 0 : i64, scratch_operands = 0 : i64, tpu.core_type = #tpu.core_type<tc>, window_params = [{transform_indices = @transform_0, window_bounds = array<i64: 16, 128>}, {pipeline_mode = #tpu.pipeline_mode<synchronous>, transform_indices = @transform_1, window_bounds = array<i64: 1, 128>}, {pipeline_mode = #tpu.pipeline_mode<synchronous>, transform_indices = @transform_2, window_bounds = array<i64: 1, 128>}, {transform_indices = @transform_3, window_bounds = array<i64: 16, 128>}]} {
    %c0 = arith.constant 0 : index
    %c0_0 = arith.constant 0 : index
    %0 = vector.load %arg1[%c0, %c0_0] : memref<16x128xf32, #tpu.memory_space<vmem>>, vector<16x128xf32>
    %cst = arith.constant dense<0.000000e+00> : vector<16xf32>
    %1 = vector.multi_reduction <add>, %0, %cst [1] : vector<16x128xf32> to vector<16xf32>
    %2 = vector.shape_cast %1 : vector<16xf32> to vector<16x1xf32>
    %cst_1 = arith.constant 1.280000e+02 : f32
    %3 = vector.broadcast %cst_1 : f32 to vector<16x1xf32>
    %4 = arith.divf %2, %3 : vector<16x1xf32>
    %5 = vector.broadcast %4 : vector<16x1xf32> to vector<16x128xf32>
    %6 = arith.subf %0, %5 : vector<16x128xf32>
    %7 = arith.mulf %6, %6 : vector<16x128xf32>
    %cst_2 = arith.constant dense<0.000000e+00> : vector<16xf32>
    %8 = vector.multi_reduction <add>, %7, %cst_2 [1] : vector<16x128xf32> to vector<16xf32>
    %9 = vector.shape_cast %8 : vector<16xf32> to vector<16x1xf32>
    %cst_3 = arith.constant 1.280000e+02 : f32
    %10 = vector.broadcast %cst_3 : f32 to vector<16x1xf32>
    %11 = arith.divf %9, %10 : vector<16x1xf32>
    %cst_4 = arith.constant 9.99999974E-6 : f32
    %12 = vector.broadcast %cst_4 : f32 to vector<16x1xf32>
    %13 = arith.addf %11, %12 : vector<16x1xf32>
    %14 = math.rsqrt %13 : vector<16x1xf32>
    %15 = vector.broadcast %14 : vector<16x1xf32> to vector<16x128xf32>
    %16 = arith.mulf %6, %15 : vector<16x128xf32>
    %c0_5 = arith.constant 0 : index
    %c0_6 = arith.constant 0 : index
    %17 = vector.load %arg2[%c0_5, %c0_6] : memref<1x128xf32, #tpu.memory_space<vmem>>, vector<1x128xf32>
    %18 = vector.broadcast %17 : vector<1x128xf32> to vector<16x128xf32>
    %19 = arith.mulf %16, %18 : vector<16x128xf32>
    %c0_7 = arith.constant 0 : index
    %c0_8 = arith.constant 0 : index
    %20 = vector.load %arg3[%c0_7, %c0_8] : memref<1x128xf32, #tpu.memory_space<vmem>>, vector<1x128xf32>
    %21 = vector.broadcast %20 : vector<1x128xf32> to vector<16x128xf32>
    %22 = arith.addf %19, %21 : vector<16x128xf32>
    %c0_9 = arith.constant 0 : index
    %c0_10 = arith.constant 0 : index
    %23 = vector.load %arg4[%c0_9, %c0_10] : memref<16x128xf32, #tpu.memory_space<vmem>>, vector<16x128xf32>
    tpu.vector_store %arg4[%c0_9, %c0_10], %22 {strides = array<i32>} : memref<16x128xf32, #tpu.memory_space<vmem>>, vector<16x128xf32>,
    return
  }
  func.func @transform_0(%arg0: i32) -> (i32, i32) {
    %c0_i32 = arith.constant 0 : i32
    %c0_i32_0 = arith.constant 0 : i32
    return %arg0, %c0_i32 : i32, i32
  }
  func.func @transform_1(%arg0: i32) -> (i32, i32) {
    %c0_i32 = arith.constant 0 : i32
    %c0_i32_0 = arith.constant 0 : i32
    %c0_i32_1 = arith.constant 0 : i32
    return %c0_i32, %c0_i32_0 : i32, i32
  }
  func.func @transform_2(%arg0: i32) -> (i32, i32) {
    %c0_i32 = arith.constant 0 : i32
    %c0_i32_0 = arith.constant 0 : i32
    %c0_i32_1 = arith.constant 0 : i32
    return %c0_i32, %c0_i32_0 : i32, i32
  }
  func.func @transform_3(%arg0: i32) -> (i32, i32) {
    %c0_i32 = arith.constant 0 : i32
    %c0_i32_0 = arith.constant 0 : i32
    return %arg0, %c0_i32 : i32, i32
  }
}

</mosaic_0001>

<llo_original>
// kernel: transformer_decoder_forward.20
$region0: #{transformer_decoder_forward.20}
  #allocation0 [shape = 'u32[]', space=smem, size = 0x4, offset = 0x4, fixed_abs, tag = 'smem constant byte address 0x4 - core index']
  #allocation1 [shape = 'u32[144,128]{1,0:T(1,128)}', space=vmem, size = 0x12000, scoped, tag = 'internal scratch']
  %s0 = inlined_call_operand.vmem [shape: f32[16,128], index: 0, kind: input, shape index: {}]
  %s1 = inlined_call_operand.vmem [shape: f32[16,128], index: 1, kind: input, shape index: {}]
  %s2 = inlined_call_operand.vmem [shape: f32[128,128], index: 2, kind: input, shape index: {}]
  %s3 = inlined_call_operand.vmem [shape: f32[1,128], index: 3, kind: input, shape index: {}]
  %s4 = inlined_call_operand.vmem [shape: f32[16,128], index: 4, kind: output, shape index: {}]
  %s5 = sld [smem:[#allocation0]]
  $region26: #{transformer_decoder_forward.20} parent=0
    _
  %s7 = ssub.s32 1, %s5
  %s8 = scalar_select 0, %s7, %s5
  // Predicated region
  $region2: #{transformer_decoder_forward.20} parent=0 // pred_check
    _
  $region3: #{transformer_decoder_forward.20} parent=0 // pred_check_branch
    %10 = sbr.rel (0) target = $region5
  $region4: #{transformer_decoder_forward.20} parent=0 // pred_region
    _
  $region5: #{transformer_decoder_forward.20} parent=0 // pred_fallthru
    _
  // Predicated region
  $region6: #{transformer_decoder_forward.20} parent=0 // pred_check
    _
  $region7: #{transformer_decoder_forward.20} parent=0 // pred_check_branch
    %12 = sbr.rel (0) target = $region9
  $region8: #{transformer_decoder_forward.20} parent=0 // pred_region
    _
  $region9: #{transformer_decoder_forward.20} parent=0 // pred_fallthru
    _
  // Predicated region
  $region10: #{transformer_decoder_forward.20} parent=0 // pred_check
    _
  $region11: #{transformer_decoder_forward.20} parent=0 // pred_check_branch
    %14 = sbr.rel (0) target = $region13
  $region12: #{transformer_decoder_forward.20} parent=0 // pred_region
    _
  $region13: #{transformer_decoder_forward.20} parent=0 // pred_fallthru
    _
  // Predicated region
  $region14: #{transformer_decoder_forward.20} parent=0 // pred_check
    _
  $region15: #{transformer_decoder_forward.20} parent=0 // pred_check_branch
    %16 = sbr.rel (0) target = $region17
  $region16: #{transformer_decoder_forward.20} parent=0 // pred_region
    _
  $region17: #{transformer_decoder_forward.20} parent=0 // pred_fallthru
    _
  %v17 = vld [vmem:[%s0] sm:$0xff]
  %v18 = vld [vmem:[%s0 + $0x8] sm:$0xff]
  %v19 = vld [vmem:[%s1] sm:$0xff]
  %v20 = vld [vmem:[%s1 + $0x8] sm:$0xff]
  %v21 = vadd.f32 %v17, %v19
  %v22 = vadd.f32 %v18, %v20
  %v23 = vld [vmem:[%s2] sm:$0xff]
  %v24 = vld [vmem:[%s2 + $0x8] sm:$0xff]
  %v25 = vld [vmem:[%s2 + $0x10] sm:$0xff]
  %v26 = vld [vmem:[%s2 + $0x18] sm:$0xff]
  %v27 = vld [vmem:[%s2 + $0x20] sm:$0xff]
  %v28 = vld [vmem:[%s2 + $0x28] sm:$0xff]
  %v29 = vld [vmem:[%s2 + $0x30] sm:$0xff]
  %v30 = vld [vmem:[%s2 + $0x38] sm:$0xff]
  %v31 = vld [vmem:[%s2 + $0x40] sm:$0xff]
  %v32 = vld [vmem:[%s2 + $0x48] sm:$0xff]
  %v33 = vld [vmem:[%s2 + $0x50] sm:$0xff]
  %v34 = vld [vmem:[%s2 + $0x58] sm:$0xff]
  %v35 = vld [vmem:[%s2 + $0x60] sm:$0xff]
  %v36 = vld [vmem:[%s2 + $0x68] sm:$0xff]
  %v37 = vld [vmem:[%s2 + $0x70] sm:$0xff]
  %v38 = vld [vmem:[%s2 + $0x78] sm:$0xff]
  %v39 = vld [vmem:[%s3] sm:$0x1]
  %v41 = vlaneseq
  %v42 = vshrl.u32 %v41, 7
  %v43 = vsub.s32 0, %v42
  %v44 = vrot.slane %v39, %v43
  %46 = vmatprep.subr.mxu0 0.0
  %47 = vmatpush1.msra.mxu0 %v23
  %48 = vmatprep.subr.mxu0 0.0
  %49 = vmatpush1.msra.mxu0 %v24
  %50 = vmatprep.subr.mxu0 0.0
  %51 = vmatpush1.msra.mxu0 %v25
  %52 = vmatprep.subr.mxu0 0.0
  %53 = vmatpush1.msra.mxu0 %v26
  %54 = vmatprep.subr.mxu0 0.0
  %55 = vmatpush1.msra.mxu0 %v27
  %56 = vmatprep.subr.mxu0 0.0
  %57 = vmatpush1.msra.mxu0 %v28
  %58 = vmatprep.subr.mxu0 0.0
  %59 = vmatpush1.msra.mxu0 %v29
  %60 = vmatprep.subr.mxu0 0.0
  %61 = vmatpush1.msra.mxu0 %v30
  %62 = vmatprep.subr.mxu0 0.0
  %63 = vmatpush1.msra.mxu0 %v31
  %64 = vmatprep.subr.mxu0 0.0
  %65 = vmatpush1.msra.mxu0 %v32
  %66 = vmatprep.subr.mxu0 0.0
  %67 = vmatpush1.msra.mxu0 %v33
  %68 = vmatprep.subr.mxu0 0.0
  %69 = vmatpush1.msra.mxu0 %v34
  %70 = vmatprep.subr.mxu0 0.0
  %71 = vmatpush1.msra.mxu0 %v35
  %72 = vmatprep.subr.mxu0 0.0
  %73 = vmatpush1.msra.mxu0 %v36
  %74 = vmatprep.subr.mxu0 0.0
  %75 = vmatpush1.msra.mxu0 %v37
  %76 = vmatprep.subr.mxu0 0.0
  %77 = vmatpush1.msra.mxu0 %v38
  %78 = vmatprep.subr.mxu0 0.0
  %79 = vmatpush1.msra.mxu0 0.0
  %80 = vmatprep.subr.mxu0 0.0
  %81 = vmatpush1.msra.mxu0 0.0
  %82 = vmatprep.subr.mxu0 0.0
  %83 = vmatpush1.msra.mxu0 0.0
  %84 = vmatprep.subr.mxu0 0.0
  %85 = vmatpush1.msra.mxu0 0.0
  %86 = vmatprep.subr.mxu0 0.0
  %87 = vmatpush1.msra.mxu0 0.0
  %88 = vmatprep.subr.mxu0 0.0
  %89 = vmatpush1.msra.mxu0 0.0
  %90 = vmatprep.subr.mxu0 0.0
  %91 = vmatpush1.msra.mxu0 0.0
  %92 = vmatprep.subr.mxu0 0.0
  %93 = vmatpush1.msra.mxu0 0.0
  %94 = vmatprep.subr.mxu0 0.0
  %95 = vmatpush1.msra.mxu0 0.0
  %96 = vmatprep.subr.mxu0 0.0
  %97 = vmatpush1.msra.mxu0 0.0
  %98 = vmatprep.subr.mxu0 0.0
  %99 = vmatpush1.msra.mxu0 0.0
  %100 = vmatprep.subr.mxu0 0.0
  %101 = vmatpush1.msra.mxu0 0.0
  %102 = vmatprep.subr.mxu0 0.0
  %103 = vmatpush1.msra.mxu0 0.0
  %104 = vmatprep.subr.mxu0 0.0
  %105 = vmatpush1.msra.mxu0 0.0
  %106 = vmatprep.subr.mxu0 0.0
  %107 = vmatpush1.msra.mxu0 0.0
  %108 = vmatprep.subr.mxu0 0.0
  %109 = vmatpush1.msra.mxu0 0.0
  %110 = vmatprep.mubr.f32.mxu0 0.0
  %111 = vmatmul.mubr.f32.gmra.mrb[0].mxu0 %v21
  %v112 = vpop.f32.mrb[0].mxu0
  %v113 = vadd.f32 %v44, %v112
  %v114 = vpop.f32.mrb[0].mxu0
  %115 = vmatprep.mubr.f32.mxu0 0.0
  %116 = vmatmul.mubr.f32.gmra.mrb[0].mxu0 %v22
  %v117 = vpop.f32.mrb[0].mxu0
  %v118 = vadd.f32 %v44, %v117
  %v119 = vpop.f32.mrb[0].mxu0
  %120 = vdwg.mxu0
  %121 = vst [vmem:[%s4] sm:$0xff] %v113
  %122 = vst [vmem:[%s4 + $0x8] sm:$0xff] %v118
  // Predicated region
  $region18: #{transformer_decoder_forward.20} parent=0 // pred_check
    _
  $region19: #{transformer_decoder_forward.20} parent=0 // pred_check_branch
    %124 = sbr.rel (0) target = $region21
  $region20: #{transformer_decoder_forward.20} parent=0 // pred_region
    _
  $region21: #{transformer_decoder_forward.20} parent=0 // pred_fallthru
    _
  // Predicated region
  $region22: #{transformer_decoder_forward.20} parent=0 // pred_check
    _
  $region23: #{transformer_decoder_forward.20} parent=0 // pred_check_branch
    %126 = sbr.rel (0) target = $region25
  $region24: #{transformer_decoder_forward.20} parent=0 // pred_region
    _
  $region25: #{transformer_decoder_forward.20} parent=0 // pred_fallthru
    _

// kernel: transformer_decoder_forward.19
$region0: #{transformer_decoder_forward.19}
  #allocation0 [shape = 'u32[]', space=smem, size = 0x4, offset = 0x4, fixed_abs, tag = 'smem constant byte address 0x4 - core index']
  #allocation1 [shape = 'u32[144,128]{1,0:T(1,128)}', space=vmem, size = 0x12000, scoped, tag = 'internal scratch']
  %s0 = inlined_call_operand.vmem [shape: f32[16,128], index: 0, kind: input, shape index: {}]
  %s1 = inlined_call_operand.vmem [shape: f32[128,128], index: 1, kind: input, shape index: {}]
  %s2 = inlined_call_operand.vmem [shape: f32[1,128], index: 2, kind: input, shape index: {}]
  %s3 = inlined_call_operand.vmem [shape: f32[16,128], index: 3, kind: input, shape index: {}]
  %s4 = inlined_call_operand.vmem [shape: f32[1,128], index: 4, kind: input, shape index: {}]
  %s5 = inlined_call_operand.vmem [shape: f32[1,128], index: 5, kind: input, shape index: {}]
  %s6 = inlined_call_operand.vmem [shape: f32[16,128], index: 6, kind: output, shape index: {}]
  %s7 = sld [smem:[#allocation0]]
  $region34: #{transformer_decoder_forward.19} parent=0
    _
  %s9 = ssub.s32 1, %s7
  %s10 = scalar_select 0, %s9, %s7
  // Predicated region
  $region2: #{transformer_decoder_forward.19} parent=0 // pred_check
    _
  $region3: #{transformer_decoder_forward.19} parent=0 // pred_check_branch
    %12 = sbr.rel (0) target = $region5
  $region4: #{transformer_decoder_forward.19} parent=0 // pred_region
    _
  $region5: #{transformer_decoder_forward.19} parent=0 // pred_fallthru
    _
  // Predicated region
  $region6: #{transformer_decoder_forward.19} parent=0 // pred_check
    _
  $region7: #{transformer_decoder_forward.19} parent=0 // pred_check_branch
    %14 = sbr.rel (0) target = $region9
  $region8: #{transformer_decoder_forward.19} parent=0 // pred_region
    _
  $region9: #{transformer_decoder_forward.19} parent=0 // pred_fallthru
    _
  // Predicated region
  $region10: #{transformer_decoder_forward.19} parent=0 // pred_check
    _
  $region11: #{transformer_decoder_forward.19} parent=0 // pred_check_branch
    %16 = sbr.rel (0) target = $region13
  $region12: #{transformer_decoder_forward.19} parent=0 // pred_region
    _
  $region13: #{transformer_decoder_forward.19} parent=0 // pred_fallthru
    _
  // Predicated region
  $region14: #{transformer_decoder_forward.19} parent=0 // pred_check
    _
  $region15: #{transformer_decoder_forward.19} parent=0 // pred_check_branch
    %18 = sbr.rel (0) target = $region17
  $region16: #{transformer_decoder_forward.19} parent=0 // pred_region
    _
  $region17: #{transformer_decoder_forward.19} parent=0 // pred_fallthru
    _
  // Predicated region
  $region18: #{transformer_decoder_forward.19} parent=0 // pred_check
    _
  $region19: #{transformer_decoder_forward.19} parent=0 // pred_check_branch
    %20 = sbr.rel (0) target = $region21
  $region20: #{transformer_decoder_forward.19} parent=0 // pred_region
    _
  $region21: #{transformer_decoder_forward.19} parent=0 // pred_fallthru
    _
  // Predicated region
  $region22: #{transformer_decoder_forward.19} parent=0 // pred_check
    _
  $region23: #{transformer_decoder_forward.19} parent=0 // pred_check_branch
    %22 = sbr.rel (0) target = $region25
  $region24: #{transformer_decoder_forward.19} parent=0 // pred_region
    _
  $region25: #{transformer_decoder_forward.19} parent=0 // pred_fallthru
    _
  %v23 = vld [vmem:[%s0] sm:$0xff]
  %v24 = vld [vmem:[%s0 + $0x8] sm:$0xff]
  %v25 = vld [vmem:[%s1] sm:$0xff]
  %v26 = vld [vmem:[%s1 + $0x8] sm:$0xff]
  %v27 = vld [vmem:[%s1 + $0x10] sm:$0xff]
  %v28 = vld [vmem:[%s1 + $0x18] sm:$0xff]
  %v29 = vld [vmem:[%s1 + $0x20] sm:$0xff]
  %v30 = vld [vmem:[%s1 + $0x28] sm:$0xff]
  %v31 = vld [vmem:[%s1 + $0x30] sm:$0xff]
  %v32 = vld [vmem:[%s1 + $0x38] sm:$0xff]
  %v33 = vld [vmem:[%s1 + $0x40] sm:$0xff]
  %v34 = vld [vmem:[%s1 + $0x48] sm:$0xff]
  %v35 = vld [vmem:[%s1 + $0x50] sm:$0xff]
  %v36 = vld [vmem:[%s1 + $0x58] sm:$0xff]
  %v37 = vld [vmem:[%s1 + $0x60] sm:$0xff]
  %v38 = vld [vmem:[%s1 + $0x68] sm:$0xff]
  %v39 = vld [vmem:[%s1 + $0x70] sm:$0xff]
  %v40 = vld [vmem:[%s1 + $0x78] sm:$0xff]
  %v41 = vld [vmem:[%s2] sm:$0x1]
  %v43 = vlaneseq
  %v44 = vshrl.u32 %v43, 7
  %v45 = vsub.s32 0, %v44
  %v46 = vrot.slane %v41, %v45
  %48 = vmatprep.subr.mxu0 0.0
  %49 = vmatpush1.msra.mxu0 %v25
  %50 = vmatprep.subr.mxu0 0.0
  %51 = vmatpush1.msra.mxu0 %v26
  %52 = vmatprep.subr.mxu0 0.0
  %53 = vmatpush1.msra.mxu0 %v27
  %54 = vmatprep.subr.mxu0 0.0
  %55 = vmatpush1.msra.mxu0 %v28
  %56 = vmatprep.subr.mxu0 0.0
  %57 = vmatpush1.msra.mxu0 %v29
  %58 = vmatprep.subr.mxu0 0.0
  %59 = vmatpush1.msra.mxu0 %v30
  %60 = vmatprep.subr.mxu0 0.0
  %61 = vmatpush1.msra.mxu0 %v31
  %62 = vmatprep.subr.mxu0 0.0
  %63 = vmatpush1.msra.mxu0 %v32
  %64 = vmatprep.subr.mxu0 0.0
  %65 = vmatpush1.msra.mxu0 %v33
  %66 = vmatprep.subr.mxu0 0.0
  %67 = vmatpush1.msra.mxu0 %v34
  %68 = vmatprep.subr.mxu0 0.0
  %69 = vmatpush1.msra.mxu0 %v35
  %70 = vmatprep.subr.mxu0 0.0
  %71 = vmatpush1.msra.mxu0 %v36
  %72 = vmatprep.subr.mxu0 0.0
  %73 = vmatpush1.msra.mxu0 %v37
  %74 = vmatprep.subr.mxu0 0.0
  %75 = vmatpush1.msra.mxu0 %v38
  %76 = vmatprep.subr.mxu0 0.0
  %77 = vmatpush1.msra.mxu0 %v39
  %78 = vmatprep.subr.mxu0 0.0
  %79 = vmatpush1.msra.mxu0 %v40
  %80 = vmatprep.subr.mxu0 0.0
  %81 = vmatpush1.msra.mxu0 0.0
  %82 = vmatprep.subr.mxu0 0.0
  %83 = vmatpush1.msra.mxu0 0.0
  %84 = vmatprep.subr.mxu0 0.0
  %85 = vmatpush1.msra.mxu0 0.0
  %86 = vmatprep.subr.mxu0 0.0
  %87 = vmatpush1.msra.mxu0 0.0
  %88 = vmatprep.subr.mxu0 0.0
  %89 = vmatpush1.msra.mxu0 0.0
  %90 = vmatprep.subr.mxu0 0.0
  %91 = vmatpush1.msra.mxu0 0.0
  %92 = vmatprep.subr.mxu0 0.0
  %93 = vmatpush1.msra.mxu0 0.0
  %94 = vmatprep.subr.mxu0 0.0
  %95 = vmatpush1.msra.mxu0 0.0
  %96 = vmatprep.subr.mxu0 0.0
  %97 = vmatpush1.msra.mxu0 0.0
  %98 = vmatprep.subr.mxu0 0.0
  %99 = vmatpush1.msra.mxu0 0.0
  %100 = vmatprep.subr.mxu0 0.0
  %101 = vmatpush1.msra.mxu0 0.0
  %102 = vmatprep.subr.mxu0 0.0
  %103 = vmatpush1.msra.mxu0 0.0
  %104 = vmatprep.subr.mxu0 0.0
  %105 = vmatpush1.msra.mxu0 0.0
  %106 = vmatprep.subr.mxu0 0.0
  %107 = vmatpush1.msra.mxu0 0.0
  %108 = vmatprep.subr.mxu0 0.0
  %109 = vmatpush1.msra.mxu0 0.0
  %110 = vmatprep.subr.mxu0 0.0
  %111 = vmatpush1.msra.mxu0 0.0
  %112 = vmatprep.mubr.f32.mxu0 0.0
  %113 = vmatmul.mubr.f32.gmra.mrb[0].mxu0 %v23
  %v114 = vpop.f32.mrb[0].mxu0
  %v115 = vadd.f32 %v46, %v114
  %v116 = vpop.f32.mrb[0].mxu0
  %117 = vmatprep.mubr.f32.mxu0 0.0
  %118 = vmatmul.mubr.f32.gmra.mrb[0].mxu0 %v24
  %v119 = vpop.f32.mrb[0].mxu0
  %v120 = vadd.f32 %v46, %v119
  %v121 = vpop.f32.mrb[0].mxu0
  %122 = vdwg.mxu0
  %v123 = vld [vmem:[%s3] sm:$0xff]
  %v124 = vld [vmem:[%s3 + $0x8] sm:$0xff]
  %v125 = vadd.f32 %v115, %v123
  %v126 = vadd.f32 %v120, %v124
  %127 = vadd.xlane.f32.xlu0 %v125
  %v128 = vpop.xlane.xlu0 %127
  %129 = vadd.xlane.f32.xlu0 %v126
  %v130 = vpop.xlane.xlu0 %129
  %v131 = vrcp.pop 128.0
  %v132 = vmul.f32 %v128, %v131
  %v133 = vmul.f32 %v130, %v131
  %v134 = vsub.f32 %v125, %v132
  %v135 = vsub.f32 %v126, %v133
  %v136 = vmul.f32 %v134, %v134
  %v137 = vmul.f32 %v135, %v135
  %138 = vadd.xlane.f32.xlu0 %v136
  %v139 = vpop.xlane.xlu0 %138
  %140 = vadd.xlane.f32.xlu0 %v137
  %v141 = vpop.xlane.xlu0 %140
  %v142 = vmul.f32 %v139, %v131
  %v143 = vmul.f32 %v141, %v131
  %v144 = vadd.f32 %v142, 1e-05
  %v145 = vadd.f32 %v143, 1e-05
  %v146 = vrsqrt.pop %v144
  %v147 = vrsqrt.pop %v145
  %v148 = vmul.f32 %v134, %v146
  %v149 = vmul.f32 %v135, %v147
  %v150 = vld [vmem:[%s4] sm:$0x1]
  %v152 = vlaneseq
  %v153 = vshrl.u32 %v152, 7
  %v154 = vsub.s32 0, %v153
  %v155 = vrot.slane %v150, %v154
  %v157 = vmul.f32 %v148, %v155
  %v158 = vmul.f32 %v149, %v155
  %v159 = vld [vmem:[%s5] sm:$0x1]
  %v161 = vlaneseq
  %v162 = vshrl.u32 %v161, 7
  %v163 = vsub.s32 0, %v162
  %v164 = vrot.slane %v159, %v163
  %v166 = vadd.f32 %v157, %v164
  %v167 = vadd.f32 %v158, %v164
  %168 = vst [vmem:[%s6] sm:$0xff] %v166
  %169 = vst [vmem:[%s6 + $0x8] sm:$0xff] %v167
  // Predicated region
  $region26: #{transformer_decoder_forward.19} parent=0 // pred_check
    _
  $region27: #{transformer_decoder_forward.19} parent=0 // pred_check_branch
    %171 = sbr.rel (0) target = $region29
  $region28: #{transformer_decoder_forward.19} parent=0 // pred_region
    _
  $region29: #{transformer_decoder_forward.19} parent=0 // pred_fallthru
    _
  // Predicated region
  $region30: #{transformer_decoder_forward.19} parent=0 // pred_check
    _
  $region31: #{transformer_decoder_forward.19} parent=0 // pred_check_branch
    %173 = sbr.rel (0) target = $region33
  $region32: #{transformer_decoder_forward.19} parent=0 // pred_region
    _
  $region33: #{transformer_decoder_forward.19} parent=0 // pred_fallthru
    _

// kernel: transformer_decoder_forward.17
$region0: #{transformer_decoder_forward.17}
  #allocation0 [shape = 'u32[]', space=smem, size = 0x4, offset = 0x4, fixed_abs, tag = 'smem constant byte address 0x4 - core index']
  #allocation1 [shape = 'u32[144,128]{1,0:T(1,128)}', space=vmem, size = 0x12000, scoped, tag = 'internal scratch']
  %s0 = inlined_call_operand.vmem [shape: f32[16,128], index: 0, kind: input, shape index: {}]
  %s1 = inlined_call_operand.vmem [shape: f32[16,128], index: 1, kind: input, shape index: {}]
  %s2 = inlined_call_operand.vmem [shape: f32[128,128], index: 2, kind: input, shape index: {}]
  %s3 = inlined_call_operand.vmem [shape: f32[1,128], index: 3, kind: input, shape index: {}]
  %s4 = inlined_call_operand.hbm [shape: f32[128,128], index: 4, kind: input, shape index: {}]
  %s5 = inlined_call_operand.vmem [shape: f32[1,128], index: 5, kind: input, shape index: {}]
  %s6 = inlined_call_operand.hbm [shape: f32[128,128], index: 6, kind: input, shape index: {}]
  %s7 = inlined_call_operand.vmem [shape: f32[1,128], index: 7, kind: input, shape index: {}]
  %s8 = inlined_call_operand.vmem [shape: f32[16,128], index: 8, kind: output, shape index: {0}]
  %s9 = inlined_call_operand.vmem [shape: f32[16,128], index: 9, kind: output, shape index: {1}]
  %s10 = inlined_call_operand.vmem [shape: f32[16,128], index: 10, kind: output, shape index: {2}]
  %11 = xla_tuple %s8, %s9, %s10
  %s12 = sld [smem:[#allocation0]]
  $region66: #{transformer_decoder_forward.17} parent=0
    _
  %s14 = ssub.s32 1, %s12
  %s15 = scalar_select 0, %s14, %s12
  $region1: #{transformer_decoder_forward.17} parent=0
    #allocation2 [shape = 'u8[65536]{0}', space=vmem, size = 0x10000, scoped, tag = 'input window, operand 4, single buffered']
    #allocation3 [shape = 's32[1]{0}', space=sflag, size = 0x4, scoped, tag = 'scoped memory for transformer_decoder_forward.17']
    #allocation4 [shape = 'u8[65536]{0}', space=vmem, size = 0x10000, scoped, tag = 'input window, operand 6, single buffered']
    #allocation5 [shape = 's32[1]{0}', space=sflag, size = 0x4, scoped, tag = 'scoped memory for transformer_decoder_forward.17']
    %16 = vsyncpa [#allocation3], 0
    %17 = vsyncpa [#allocation5], 0
    // Predicated region
    $region2: #{transformer_decoder_forward.17} parent=1 // pred_check
      _
    $region3: #{transformer_decoder_forward.17} parent=1 // pred_check_branch
      %19 = sbr.rel (0) target = $region5
    $region4: #{transformer_decoder_forward.17} parent=1 // pred_region
      _
    $region5: #{transformer_decoder_forward.17} parent=1 // pred_fallthru
      _
    // Predicated region
    $region6: #{transformer_decoder_forward.17} parent=1 // pred_check
      _
    $region7: #{transformer_decoder_forward.17} parent=1 // pred_check_branch
      %21 = sbr.rel (0) target = $region9
    $region8: #{transformer_decoder_forward.17} parent=1 // pred_region
      _
    $region9: #{transformer_decoder_forward.17} parent=1 // pred_fallthru
      _
    // Predicated region
    $region10: #{transformer_decoder_forward.17} parent=1 // pred_check
      _
    $region11: #{transformer_decoder_forward.17} parent=1 // pred_check_branch
      %23 = sbr.rel (0) target = $region13
    $region12: #{transformer_decoder_forward.17} parent=1 // pred_region
      _
    $region13: #{transformer_decoder_forward.17} parent=1 // pred_fallthru
      _
    // Predicated region
    $region14: #{transformer_decoder_forward.17} parent=1 // pred_check
      _
    $region15: #{transformer_decoder_forward.17} parent=1 // pred_check_branch
      %25 = sbr.rel (0) target = $region17
    $region16: #{transformer_decoder_forward.17} parent=1 // pred_region
      _
    $region17: #{transformer_decoder_forward.17} parent=1 // pred_fallthru
      _
    // Predicated region
    $region18: #{transformer_decoder_forward.17} parent=1 // pred_check
      _
    $region19: #{transformer_decoder_forward.17} parent=1 // pred_check_branch
      %27 = sbr.rel (0) target = $region21
    $region20: #{transformer_decoder_forward.17} parent=1 // pred_region
      %s29 = ssub.s32 2048, 2048
      %30 = vsyncadd [#allocation3], %s29
      %s31 = sshll.u32 [#allocation2], 4
      %s32 = int_to_ptr.vmem [resolvable:$true] %s31
      %37 = dma.hbm_to_vmem [thread:$0]  %s4, 2048, %s32, [#allocation3], 128, 128, 8
    $region21: #{transformer_decoder_forward.17} parent=1 // pred_fallthru
      _
    // Predicated region
    $region22: #{transformer_decoder_forward.17} parent=1 // pred_check
      _
    $region23: #{transformer_decoder_forward.17} parent=1 // pred_check_branch
      %39 = sbr.rel (0) target = $region25
    $region24: #{transformer_decoder_forward.17} parent=1 // pred_region
      _
    $region25: #{transformer_decoder_forward.17} parent=1 // pred_fallthru
      _
    // Predicated region
    $region26: #{transformer_decoder_forward.17} parent=1 // pred_check
      _
    $region27: #{transformer_decoder_forward.17} parent=1 // pred_check_branch
      %41 = sbr.rel (0) target = $region29
    $region28: #{transformer_decoder_forward.17} parent=1 // pred_region
      %s43 = ssub.s32 2048, 2048
      %44 = vsyncadd [#allocation5], %s43
      %s45 = sshll.u32 [#allocation4], 4
      %s46 = int_to_ptr.vmem [resolvable:$true] %s45
      %51 = dma.hbm_to_vmem [thread:$0]  %s6, 2048, %s46, [#allocation5], 128, 128, 8
    $region29: #{transformer_decoder_forward.17} parent=1 // pred_fallthru
      _
    // Predicated region
    $region30: #{transformer_decoder_forward.17} parent=1 // pred_check
      _
    $region31: #{transformer_decoder_forward.17} parent=1 // pred_check_branch
      %53 = sbr.rel (0) target = $region33
    $region32: #{transformer_decoder_forward.17} parent=1 // pred_region
      _
    $region33: #{transformer_decoder_forward.17} parent=1 // pred_fallthru
      _
    // Predicated region
    $region34: #{transformer_decoder_forward.17} parent=1 // pred_check
      _
    $region35: #{transformer_decoder_forward.17} parent=1 // pred_check_branch
      %55 = sbr.rel (0) target = $region37
    $region36: #{transformer_decoder_forward.17} parent=1 // pred_region
      %56 = dma.done [#allocation3], 2048
    $region37: #{transformer_decoder_forward.17} parent=1 // pred_fallthru
      _
    // Predicated region
    $region38: #{transformer_decoder_forward.17} parent=1 // pred_check
      _
    $region39: #{transformer_decoder_forward.17} parent=1 // pred_check_branch
      %58 = sbr.rel (0) target = $region41
    $region40: #{transformer_decoder_forward.17} parent=1 // pred_region
      %59 = dma.done [#allocation5], 2048
    $region41: #{transformer_decoder_forward.17} parent=1 // pred_fallthru
      _
    %v60 = vld [vmem:[%s0] sm:$0xff]
    %v61 = vld [vmem:[%s0 + $0x8] sm:$0xff]
    %v62 = vld [vmem:[%s1] sm:$0xff]
    %v63 = vld [vmem:[%s1 + $0x8] sm:$0xff]
    %v64 = vadd.f32 %v60, %v62
    %v65 = vadd.f32 %v61, %v63
    %v66 = vld [vmem:[%s2] sm:$0xff]
    %v67 = vld [vmem:[%s2 + $0x8] sm:$0xff]
    %v68 = vld [vmem:[%s2 + $0x10] sm:$0xff]
    %v69 = vld [vmem:[%s2 + $0x18] sm:$0xff]
    %v70 = vld [vmem:[%s2 + $0x20] sm:$0xff]
    %v71 = vld [vmem:[%s2 + $0x28] sm:$0xff]
    %v72 = vld [vmem:[%s2 + $0x30] sm:$0xff]
    %v73 = vld [vmem:[%s2 + $0x38] sm:$0xff]
    %v74 = vld [vmem:[%s2 + $0x40] sm:$0xff]
    %v75 = vld [vmem:[%s2 + $0x48] sm:$0xff]
    %v76 = vld [vmem:[%s2 + $0x50] sm:$0xff]
    %v77 = vld [vmem:[%s2 + $0x58] sm:$0xff]
    %v78 = vld [vmem:[%s2 + $0x60] sm:$0xff]
    %v79 = vld [vmem:[%s2 + $0x68] sm:$0xff]
    %v80 = vld [vmem:[%s2 + $0x70] sm:$0xff]
    %v81 = vld [vmem:[%s2 + $0x78] sm:$0xff]
    %v82 = vld [vmem:[%s3] sm:$0x1]
    %v84 = vlaneseq
    %v85 = vshrl.u32 %v84, 7
    %v86 = vsub.s32 0, %v85
    %v87 = vrot.slane %v82, %v86
    %89 = vmatprep.subr.mxu0 0.0
    %90 = vmatpush1.msra.mxu0 %v66
    %91 = vmatprep.subr.mxu0 0.0
    %92 = vmatpush1.msra.mxu0 %v67
    %93 = vmatprep.subr.mxu0 0.0
    %94 = vmatpush1.msra.mxu0 %v68
    %95 = vmatprep.subr.mxu0 0.0
    %96 = vmatpush1.msra.mxu0 %v69
    %97 = vmatprep.subr.mxu0 0.0
    %98 = vmatpush1.msra.mxu0 %v70
    %99 = vmatprep.subr.mxu0 0.0
    %100 = vmatpush1.msra.mxu0 %v71
    %101 = vmatprep.subr.mxu0 0.0
    %102 = vmatpush1.msra.mxu0 %v72
    %103 = vmatprep.subr.mxu0 0.0
    %104 = vmatpush1.msra.mxu0 %v73
    %105 = vmatprep.subr.mxu0 0.0
    %106 = vmatpush1.msra.mxu0 %v74
    %107 = vmatprep.subr.mxu0 0.0
    %108 = vmatpush1.msra.mxu0 %v75
    %109 = vmatprep.subr.mxu0 0.0
    %110 = vmatpush1.msra.mxu0 %v76
    %111 = vmatprep.subr.mxu0 0.0
    %112 = vmatpush1.msra.mxu0 %v77
    %113 = vmatprep.subr.mxu0 0.0
    %114 = vmatpush1.msra.mxu0 %v78
    %115 = vmatprep.subr.mxu0 0.0
    %116 = vmatpush1.msra.mxu0 %v79
    %117 = vmatprep.subr.mxu0 0.0
    %118 = vmatpush1.msra.mxu0 %v80
    %119 = vmatprep.subr.mxu0 0.0
    %120 = vmatpush1.msra.mxu0 %v81
    %121 = vmatprep.subr.mxu0 0.0
    %122 = vmatpush1.msra.mxu0 0.0
    %123 = vmatprep.subr.mxu0 0.0
    %124 = vmatpush1.msra.mxu0 0.0
    %125 = vmatprep.subr.mxu0 0.0
    %126 = vmatpush1.msra.mxu0 0.0
    %127 = vmatprep.subr.mxu0 0.0
    %128 = vmatpush1.msra.mxu0 0.0
    %129 = vmatprep.subr.mxu0 0.0
    %130 = vmatpush1.msra.mxu0 0.0
    %131 = vmatprep.subr.mxu0 0.0
    %132 = vmatpush1.msra.mxu0 0.0
    %133 = vmatprep.subr.mxu0 0.0
    %134 = vmatpush1.msra.mxu0 0.0
    %135 = vmatprep.subr.mxu0 0.0
    %136 = vmatpush1.msra.mxu0 0.0
    %137 = vmatprep.subr.mxu0 0.0
    %138 = vmatpush1.msra.mxu0 0.0
    %139 = vmatprep.subr.mxu0 0.0
    %140 = vmatpush1.msra.mxu0 0.0
    %141 = vmatprep.subr.mxu0 0.0
    %142 = vmatpush1.msra.mxu0 0.0
    %143 = vmatprep.subr.mxu0 0.0
    %144 = vmatpush1.msra.mxu0 0.0
    %145 = vmatprep.subr.mxu0 0.0
    %146 = vmatpush1.msra.mxu0 0.0
    %147 = vmatprep.subr.mxu0 0.0
    %148 = vmatpush1.msra.mxu0 0.0
    %149 = vmatprep.subr.mxu0 0.0
    %150 = vmatpush1.msra.mxu0 0.0
    %151 = vmatprep.subr.mxu0 0.0
    %152 = vmatpush1.msra.mxu0 0.0
    %153 = vmatprep.mubr.f32.mxu0 0.0
    %154 = vmatmul.mubr.f32.gmra.mrb[0].mxu0 %v64
    %v155 = vpop.f32.mrb[0].mxu0
    %v156 = vadd.f32 %v87, %v155
    %v157 = vpop.f32.mrb[0].mxu0
    %158 = vmatprep.mubr.f32.mxu0 0.0
    %159 = vmatmul.mubr.f32.gmra.mrb[0].mxu0 %v65
    %v160 = vpop.f32.mrb[0].mxu0
    %v161 = vadd.f32 %v87, %v160
    %v162 = vpop.f32.mrb[0].mxu0
    %163 = vdwg.mxu0
    %164 = vst [vmem:[%s8] sm:$0xff] %v156
    %165 = vst [vmem:[%s8 + $0x8] sm:$0xff] %v161
    %v166 = vld [vmem:[#allocation2] sm:$0xff]
    %v167 = vld [vmem:[#allocation2 + $0x8] sm:$0xff]
    %v168 = vld [vmem:[#allocation2 + $0x10] sm:$0xff]
    %v169 = vld [vmem:[#allocation2 + $0x18] sm:$0xff]
    %v170 = vld [vmem:[#allocation2 + $0x20] sm:$0xff]
    %v171 = vld [vmem:[#allocation2 + $0x28] sm:$0xff]
    %v172 = vld [vmem:[#allocation2 + $0x30] sm:$0xff]
    %v173 = vld [vmem:[#allocation2 + $0x38] sm:$0xff]
    %v174 = vld [vmem:[#allocation2 + $0x40] sm:$0xff]
    %v175 = vld [vmem:[#allocation2 + $0x48] sm:$0xff]
    %v176 = vld [vmem:[#allocation2 + $0x50] sm:$0xff]
    %v177 = vld [vmem:[#allocation2 + $0x58] sm:$0xff]
    %v178 = vld [vmem:[#allocation2 + $0x60] sm:$0xff]
    %v179 = vld [vmem:[#allocation2 + $0x68] sm:$0xff]
    %v180 = vld [vmem:[#allocation2 + $0x70] sm:$0xff]
    %v181 = vld [vmem:[#allocation2 + $0x78] sm:$0xff]
    %v182 = vld [vmem:[%s5] sm:$0x1]
    %v184 = vlaneseq
    %v185 = vshrl.u32 %v184, 7
    %v186 = vsub.s32 0, %v185
    %v187 = vrot.slane %v182, %v186
    %189 = vmatprep.subr.mxu0 0.0
    %190 = vmatpush1.msra.mxu0 %v166
    %191 = vmatprep.subr.mxu0 0.0
    %192 = vmatpush1.msra.mxu0 %v167
    %193 = vmatprep.subr.mxu0 0.0
    %194 = vmatpush1.msra.mxu0 %v168
    %195 = vmatprep.subr.mxu0 0.0
    %196 = vmatpush1.msra.mxu0 %v169
    %197 = vmatprep.subr.mxu0 0.0
    %198 = vmatpush1.msra.mxu0 %v170
    %199 = vmatprep.subr.mxu0 0.0
    %200 = vmatpush1.msra.mxu0 %v171
    %201 = vmatprep.subr.mxu0 0.0
    %202 = vmatpush1.msra.mxu0 %v172
    %203 = vmatprep.subr.mxu0 0.0
    %204 = vmatpush1.msra.mxu0 %v173
    %205 = vmatprep.subr.mxu0 0.0
    %206 = vmatpush1.msra.mxu0 %v174
    %207 = vmatprep.subr.mxu0 0.0
    %208 = vmatpush1.msra.mxu0 %v175
    %209 = vmatprep.subr.mxu0 0.0
    %210 = vmatpush1.msra.mxu0 %v176
    %211 = vmatprep.subr.mxu0 0.0
    %212 = vmatpush1.msra.mxu0 %v177
    %213 = vmatprep.subr.mxu0 0.0
    %214 = vmatpush1.msra.mxu0 %v178
    %215 = vmatprep.subr.mxu0 0.0
    %216 = vmatpush1.msra.mxu0 %v179
    %217 = vmatprep.subr.mxu0 0.0
    %218 = vmatpush1.msra.mxu0 %v180
    %219 = vmatprep.subr.mxu0 0.0
    %220 = vmatpush1.msra.mxu0 %v181
    %221 = vmatprep.subr.mxu0 0.0
    %222 = vmatpush1.msra.mxu0 0.0
    %223 = vmatprep.subr.mxu0 0.0
    %224 = vmatpush1.msra.mxu0 0.0
    %225 = vmatprep.subr.mxu0 0.0
    %226 = vmatpush1.msra.mxu0 0.0
    %227 = vmatprep.subr.mxu0 0.0
    %228 = vmatpush1.msra.mxu0 0.0
    %229 = vmatprep.subr.mxu0 0.0
    %230 = vmatpush1.msra.mxu0 0.0
    %231 = vmatprep.subr.mxu0 0.0
    %232 = vmatpush1.msra.mxu0 0.0
    %233 = vmatprep.subr.mxu0 0.0
    %234 = vmatpush1.msra.mxu0 0.0
    %235 = vmatprep.subr.mxu0 0.0
    %236 = vmatpush1.msra.mxu0 0.0
    %237 = vmatprep.subr.mxu0 0.0
    %238 = vmatpush1.msra.mxu0 0.0
    %239 = vmatprep.subr.mxu0 0.0
    %240 = vmatpush1.msra.mxu0 0.0
    %241 = vmatprep.subr.mxu0 0.0
    %242 = vmatpush1.msra.mxu0 0.0
    %243 = vmatprep.subr.mxu0 0.0
    %244 = vmatpush1.msra.mxu0 0.0
    %245 = vmatprep.subr.mxu0 0.0
    %246 = vmatpush1.msra.mxu0 0.0
    %247 = vmatprep.subr.mxu0 0.0
    %248 = vmatpush1.msra.mxu0 0.0
    %249 = vmatprep.subr.mxu0 0.0
    %250 = vmatpush1.msra.mxu0 0.0
    %251 = vmatprep.subr.mxu0 0.0
    %252 = vmatpush1.msra.mxu0 0.0
    %253 = vmatprep.mubr.f32.mxu0 0.0
    %254 = vmatmul.mubr.f32.gmra.mrb[0].mxu0 %v64
    %v255 = vpop.f32.mrb[0].mxu0
    %v256 = vadd.f32 %v187, %v255
    %v257 = vpop.f32.mrb[0].mxu0
    %258 = vmatprep.mubr.f32.mxu0 0.0
    %259 = vmatmul.mubr.f32.gmra.mrb[0].mxu0 %v65
    %v260 = vpop.f32.mrb[0].mxu0
    %v261 = vadd.f32 %v187, %v260
    %v262 = vpop.f32.mrb[0].mxu0
    %263 = vdwg.mxu0
    %264 = vst [vmem:[%s9] sm:$0xff] %v256
    %265 = vst [vmem:[%s9 + $0x8] sm:$0xff] %v261
    %v266 = vld [vmem:[#allocation4] sm:$0xff]
    %v267 = vld [vmem:[#allocation4 + $0x8] sm:$0xff]
    %v268 = vld [vmem:[#allocation4 + $0x10] sm:$0xff]
    %v269 = vld [vmem:[#allocation4 + $0x18] sm:$0xff]
    %v270 = vld [vmem:[#allocation4 + $0x20] sm:$0xff]
    %v271 = vld [vmem:[#allocation4 + $0x28] sm:$0xff]
    %v272 = vld [vmem:[#allocation4 + $0x30] sm:$0xff]
    %v273 = vld [vmem:[#allocation4 + $0x38] sm:$0xff]
    %v274 = vld [vmem:[#allocation4 + $0x40] sm:$0xff]
    %v275 = vld [vmem:[#allocation4 + $0x48] sm:$0xff]
    %v276 = vld [vmem:[#allocation4 + $0x50] sm:$0xff]
    %v277 = vld [vmem:[#allocation4 + $0x58] sm:$0xff]
    %v278 = vld [vmem:[#allocation4 + $0x60] sm:$0xff]
    %v279 = vld [vmem:[#allocation4 + $0x68] sm:$0xff]
    %v280 = vld [vmem:[#allocation4 + $0x70] sm:$0xff]
    %v281 = vld [vmem:[#allocation4 + $0x78] sm:$0xff]
    %v282 = vld [vmem:[%s7] sm:$0x1]
    %v284 = vlaneseq
    %v285 = vshrl.u32 %v284, 7
    %v286 = vsub.s32 0, %v285
    %v287 = vrot.slane %v282, %v286
    %289 = vmatprep.subr.mxu0 0.0
    %290 = vmatpush1.msra.mxu0 %v266
    %291 = vmatprep.subr.mxu0 0.0
    %292 = vmatpush1.msra.mxu0 %v267
    %293 = vmatprep.subr.mxu0 0.0
    %294 = vmatpush1.msra.mxu0 %v268
    %295 = vmatprep.subr.mxu0 0.0
    %296 = vmatpush1.msra.mxu0 %v269
    %297 = vmatprep.subr.mxu0 0.0
    %298 = vmatpush1.msra.mxu0 %v270
    %299 = vmatprep.subr.mxu0 0.0
    %300 = vmatpush1.msra.mxu0 %v271
    %301 = vmatprep.subr.mxu0 0.0
    %302 = vmatpush1.msra.mxu0 %v272
    %303 = vmatprep.subr.mxu0 0.0
    %304 = vmatpush1.msra.mxu0 %v273
    %305 = vmatprep.subr.mxu0 0.0
    %306 = vmatpush1.msra.mxu0 %v274
    %307 = vmatprep.subr.mxu0 0.0
    %308 = vmatpush1.msra.mxu0 %v275
    %309 = vmatprep.subr.mxu0 0.0
    %310 = vmatpush1.msra.mxu0 %v276
    %311 = vmatprep.subr.mxu0 0.0
    %312 = vmatpush1.msra.mxu0 %v277
    %313 = vmatprep.subr.mxu0 0.0
    %314 = vmatpush1.msra.mxu0 %v278
    %315 = vmatprep.subr.mxu0 0.0
    %316 = vmatpush1.msra.mxu0 %v279
    %317 = vmatprep.subr.mxu0 0.0
    %318 = vmatpush1.msra.mxu0 %v280
    %319 = vmatprep.subr.mxu0 0.0
    %320 = vmatpush1.msra.mxu0 %v281
    %321 = vmatprep.subr.mxu0 0.0
    %322 = vmatpush1.msra.mxu0 0.0
    %323 = vmatprep.subr.mxu0 0.0
    %324 = vmatpush1.msra.mxu0 0.0
    %325 = vmatprep.subr.mxu0 0.0
    %326 = vmatpush1.msra.mxu0 0.0
    %327 = vmatprep.subr.mxu0 0.0
    %328 = vmatpush1.msra.mxu0 0.0
    %329 = vmatprep.subr.mxu0 0.0
    %330 = vmatpush1.msra.mxu0 0.0
    %331 = vmatprep.subr.mxu0 0.0
    %332 = vmatpush1.msra.mxu0 0.0
    %333 = vmatprep.subr.mxu0 0.0
    %334 = vmatpush1.msra.mxu0 0.0
    %335 = vmatprep.subr.mxu0 0.0
    %336 = vmatpush1.msra.mxu0 0.0
    %337 = vmatprep.subr.mxu0 0.0
    %338 = vmatpush1.msra.mxu0 0.0
    %339 = vmatprep.subr.mxu0 0.0
    %340 = vmatpush1.msra.mxu0 0.0
    %341 = vmatprep.subr.mxu0 0.0
    %342 = vmatpush1.msra.mxu0 0.0
    %343 = vmatprep.subr.mxu0 0.0
    %344 = vmatpush1.msra.mxu0 0.0
    %345 = vmatprep.subr.mxu0 0.0
    %346 = vmatpush1.msra.mxu0 0.0
    %347 = vmatprep.subr.mxu0 0.0
    %348 = vmatpush1.msra.mxu0 0.0
    %349 = vmatprep.subr.mxu0 0.0
    %350 = vmatpush1.msra.mxu0 0.0
    %351 = vmatprep.subr.mxu0 0.0
    %352 = vmatpush1.msra.mxu0 0.0
    %353 = vmatprep.mubr.f32.mxu0 0.0
    %354 = vmatmul.mubr.f32.gmra.mrb[0].mxu0 %v60
    %v355 = vpop.f32.mrb[0].mxu0
    %v356 = vadd.f32 %v287, %v355
    %v357 = vpop.f32.mrb[0].mxu0
    %358 = vmatprep.mubr.f32.mxu0 0.0
    %359 = vmatmul.mubr.f32.gmra.mrb[0].mxu0 %v61
    %v360 = vpop.f32.mrb[0].mxu0
    %v361 = vadd.f32 %v287, %v360
    %v362 = vpop.f32.mrb[0].mxu0
    %363 = vdwg.mxu0
    %364 = vst [vmem:[%s10] sm:$0xff] %v356
    %365 = vst [vmem:[%s10 + $0x8] sm:$0xff] %v361
    // Predicated region
    $region42: #{transformer_decoder_forward.17} parent=1 // pred_check
      _
    $region43: #{transformer_decoder_forward.17} parent=1 // pred_check_branch
      %367 = sbr.rel (0) target = $region45
    $region44: #{transformer_decoder_forward.17} parent=1 // pred_region
      _
    $region45: #{transformer_decoder_forward.17} parent=1 // pred_fallthru
      _
    // Predicated region
    $region46: #{transformer_decoder_forward.17} parent=1 // pred_check
      _
    $region47: #{transformer_decoder_forward.17} parent=1 // pred_check_branch
      %369 = sbr.rel (0) target = $region49
    $region48: #{transformer_decoder_forward.17} parent=1 // pred_region
      _
    $region49: #{transformer_decoder_forward.17} parent=1 // pred_fallthru
      _
    // Predicated region
    $region50: #{transformer_decoder_forward.17} parent=1 // pred_check
      _
    $region51: #{transformer_decoder_forward.17} parent=1 // pred_check_branch
      %371 = sbr.rel (0) target = $region53
    $region52: #{transformer_decoder_forward.17} parent=1 // pred_region
      _
    $region53: #{transformer_decoder_forward.17} parent=1 // pred_fallthru
      _
    // Predicated region
    $region54: #{transformer_decoder_forward.17} parent=1 // pred_check
      _
    $region55: #{transformer_decoder_forward.17} parent=1 // pred_check_branch
      %373 = sbr.rel (0) target = $region57
    $region56: #{transformer_decoder_forward.17} parent=1 // pred_region
      _
    $region57: #{transformer_decoder_forward.17} parent=1 // pred_fallthru
      _
    // Predicated region
    $region58: #{transformer_decoder_forward.17} parent=1 // pred_check
      _
    $region59: #{transformer_decoder_forward.17} parent=1 // pred_check_branch
      %375 = sbr.rel (0) target = $region61
    $region60: #{transformer_decoder_forward.17} parent=1 // pred_region
      _
    $region61: #{transformer_decoder_forward.17} parent=1 // pred_fallthru
      _
    // Predicated region
    $region62: #{transformer_decoder_forward.17} parent=1 // pred_check
      _
    $region63: #{transformer_decoder_forward.17} parent=1 // pred_check_branch
      %377 = sbr.rel (0) target = $region65
    $region64: #{transformer_decoder_forward.17} parent=1 // pred_region
      _
    $region65: #{transformer_decoder_forward.17} parent=1 // pred_fallthru
      _
    %378 = vsyncpa [#allocation3], 1
    %379 = vsyncpa [#allocation5], 1

// kernel: transformer_decoder_forward.18
$region0: #{transformer_decoder_forward.18}
  #allocation0 [shape = 'u32[]', space=smem, size = 0x4, offset = 0x4, fixed_abs, tag = 'smem constant byte address 0x4 - core index']
  #allocation1 [shape = 'u32[144,128]{1,0:T(1,128)}', space=vmem, size = 0x12000, scoped, tag = 'internal scratch']
  %s0 = inlined_call_operand.vmem [shape: f32[2,4,8,32], index: 0, kind: input, shape index: {}]
  %s1 = inlined_call_operand.vmem [shape: f32[2,4,8,32], index: 1, kind: input, shape index: {}]
  %s2 = inlined_call_operand.vmem [shape: f32[2,4,8,32], index: 2, kind: input, shape index: {}]
  %s3 = inlined_call_operand.vmem [shape: f32[2,4,8,32], index: 3, kind: output, shape index: {}]
  %s4 = sld [smem:[#allocation0]]
  $region45: #{transformer_decoder_forward.18} parent=0
    _
  %s6 = ssub.s32 1, %s4
  %s7 = scalar_select 0, %s6, %s4
  loop: start=0, step=1, limit=4
  $region2: #{transformer_decoder_forward.18} parent=0 // loop_pre_header
    _
  $region3: #{transformer_decoder_forward.18} parent=0 // loop_header
    %s9 = sphi 0, %s13
    %p10 = scmp.ge.s32.totalorder %s9, 4
    %s19 = sphi 0, %s21
    %s22 = sphi 0, %s19
    %s23 = sphi 0, %s22
    %s39 = sphi 0, %s23
    %s45 = sphi 0, %s47
    %s48 = sphi 0, %s45
    %s49 = sphi 0, %s48
    %s65 = sphi 0, %s49
    %s71 = sphi 0, %s73
    %s74 = sphi 0, %s71
    %s75 = sphi 0, %s74
    %s91 = sphi 0, %s75
    %s97 = sphi 0, %s99
    %s100 = sphi 0, %s97
    %s101 = sphi 0, %s100
    %s117 = sphi 0, %s101
  $region4: #{transformer_decoder_forward.18} parent=0 // loop_header_branch
    %12 = sbr.rel (%p10) target = $region8
  $region5: #{transformer_decoder_forward.18} parent=0 // loop_body
    %s14 = ssub.s32 %s9, 1
    %s15 = ssub.s32 %s9, 2
    %s16 = sadd.s32 %s9, 1
    %s17 = ssub.s32 %s9, %s16
    %p18 = scmp.eq.s32.totalorder %s17, 0
    %s20 = sadd.s32 %s19, 1
    %s21 = scalar_select %p18, %s19, %s20
    %p24 = pneg %p18
    %p25 = scmp.eq.s32.totalorder %s9, 1
    %p26 = por %p24, %p25
    %p27 = scmp.ne.s32.totalorder %s19, %s22
    %p28 = scmp.eq.s32.totalorder %s9, 0
    %p29 = por %p27, %p28
    %p30 = scmp.ne.s32.totalorder %s19, %s22
    %p31 = scmp.eq.s32.totalorder %s14, 1
    %p32 = por %p30, %p31
    %p33 = scmp.ne.s32.totalorder %s22, %s23
    %p34 = scmp.eq.s32.totalorder %s14, 0
    %p35 = por %p33, %p34
    %p36 = scmp.ne.s32.totalorder %s22, %s23
    %p37 = scmp.eq.s32.totalorder %s15, 1
    %p38 = por %p36, %p37
    %p40 = scmp.ne.s32.totalorder %s23, %s39
    %p41 = scmp.eq.s32.totalorder %s15, 0
    %p42 = por %p40, %p41
    %s43 = ssub.s32 %s9, %s16
    %p44 = scmp.eq.s32.totalorder %s43, 0
    %s46 = sadd.s32 %s45, 1
    %s47 = scalar_select %p44, %s45, %s46
    %p50 = pneg %p44
    %p51 = scmp.eq.s32.totalorder %s9, 1
    %p52 = por %p50, %p51
    %p53 = scmp.ne.s32.totalorder %s45, %s48
    %p54 = scmp.eq.s32.totalorder %s9, 0
    %p55 = por %p53, %p54
    %p56 = scmp.ne.s32.totalorder %s45, %s48
    %p57 = scmp.eq.s32.totalorder %s14, 1
    %p58 = por %p56, %p57
    %p59 = scmp.ne.s32.totalorder %s48, %s49
    %p60 = scmp.eq.s32.totalorder %s14, 0
    %p61 = por %p59, %p60
    %p62 = scmp.ne.s32.totalorder %s48, %s49
    %p63 = scmp.eq.s32.totalorder %s15, 1
    %p64 = por %p62, %p63
    %p66 = scmp.ne.s32.totalorder %s49, %s65
    %p67 = scmp.eq.s32.totalorder %s15, 0
    %p68 = por %p66, %p67
    %s69 = ssub.s32 %s9, %s16
    %p70 = scmp.eq.s32.totalorder %s69, 0
    %s72 = sadd.s32 %s71, 1
    %s73 = scalar_select %p70, %s71, %s72
    %p76 = pneg %p70
    %p77 = scmp.eq.s32.totalorder %s9, 1
    %p78 = por %p76, %p77
    %p79 = scmp.ne.s32.totalorder %s71, %s74
    %p80 = scmp.eq.s32.totalorder %s9, 0
    %p81 = por %p79, %p80
    %p82 = scmp.ne.s32.totalorder %s71, %s74
    %p83 = scmp.eq.s32.totalorder %s14, 1
    %p84 = por %p82, %p83
    %p85 = scmp.ne.s32.totalorder %s74, %s75
    %p86 = scmp.eq.s32.totalorder %s14, 0
    %p87 = por %p85, %p86
    %p88 = scmp.ne.s32.totalorder %s74, %s75
    %p89 = scmp.eq.s32.totalorder %s15, 1
    %p90 = por %p88, %p89
    %p92 = scmp.ne.s32.totalorder %s75, %s91
    %p93 = scmp.eq.s32.totalorder %s15, 0
    %p94 = por %p92, %p93
    %s95 = ssub.s32 %s9, %s16
    %p96 = scmp.eq.s32.totalorder %s95, 0
    %s98 = sadd.s32 %s97, 1
    %s99 = scalar_select %p96, %s97, %s98
    %p102 = pneg %p96
    %p103 = scmp.eq.s32.totalorder %s9, 1
    %p104 = por %p102, %p103
    %p105 = scmp.ne.s32.totalorder %s97, %s100
    %p106 = scmp.eq.s32.totalorder %s9, 0
    %p107 = por %p105, %p106
    %p108 = scmp.ne.s32.totalorder %s97, %s100
    %p109 = scmp.eq.s32.totalorder %s14, 1
    %p110 = por %p108, %p109
    %p111 = scmp.ne.s32.totalorder %s100, %s101
    %p112 = scmp.eq.s32.totalorder %s14, 0
    %p113 = por %p111, %p112
    %p114 = scmp.ne.s32.totalorder %s100, %s101
    %p115 = scmp.eq.s32.totalorder %s15, 1
    %p116 = por %p114, %p115
    %p118 = scmp.ne.s32.totalorder %s101, %s117
    %p119 = scmp.eq.s32.totalorder %s15, 0
    %p120 = por %p118, %p119
    %p121 = scmp.le.s32.totalorder 1, %s9
    %p122 = scmp.lt.s32.totalorder %s9, 3
    %p123 = pnand %p121, %p122
    %p124 = pneg %p123
    // Predicated region
    $region9: #{transformer_decoder_forward.18} parent=5 // pred_check
      _
    $region10: #{transformer_decoder_forward.18} parent=5 // pred_check_branch
      %126 = sbr.rel (%p123) target = $region12
    $region11: #{transformer_decoder_forward.18} parent=5 // pred_region
      %s127 = ssub.s32 %s9, 1
    $region12: #{transformer_decoder_forward.18} parent=5 // pred_fallthru
      _
    %p128 = scmp.lt.s32.totalorder %s9, 2
    // Predicated region
    $region13: #{transformer_decoder_forward.18} parent=5 // pred_check
      %p129 = pneg %p128
    $region14: #{transformer_decoder_forward.18} parent=5 // pred_check_branch
      %131 = sbr.rel (%p129) target = $region16
    $region15: #{transformer_decoder_forward.18} parent=5 // pred_region
      // Predicated region
      $region17: #{transformer_decoder_forward.18} parent=15 // pred_check
        %p132 = pneg %p29
      $region18: #{transformer_decoder_forward.18} parent=15 // pred_check_branch
        %134 = sbr.rel (%p132) target = $region20
      $region19: #{transformer_decoder_forward.18} parent=15 // pred_region
        %p135 = scmp.lt.s32.totalorder %s9, 1
        %s136 = scalar_select %p135, %s9, 1
        %s137 = smul.addr %s136, 4
        %s138 = smul.addr %s137, 8
        %s139 = scalar_lea.vmem %s0, %s138
      $region20: #{transformer_decoder_forward.18} parent=15 // pred_fallthru
        _
      // Predicated region
      $region21: #{transformer_decoder_forward.18} parent=15 // pred_check
        %p140 = pneg %p55
      $region22: #{transformer_decoder_forward.18} parent=15 // pred_check_branch
        %142 = sbr.rel (%p140) target = $region24
      $region23: #{transformer_decoder_forward.18} parent=15 // pred_region
        %p143 = scmp.lt.s32.totalorder %s9, 1
        %s144 = scalar_select %p143, %s9, 1
        %s145 = smul.addr %s144, 4
        %s146 = smul.addr %s145, 8
        %s147 = scalar_lea.vmem %s1, %s146
      $region24: #{transformer_decoder_forward.18} parent=15 // pred_fallthru
        _
      // Predicated region
      $region25: #{transformer_decoder_forward.18} parent=15 // pred_check
        %p148 = pneg %p81
      $region26: #{transformer_decoder_forward.18} parent=15 // pred_check_branch
        %150 = sbr.rel (%p148) target = $region28
      $region27: #{transformer_decoder_forward.18} parent=15 // pred_region
        %p151 = scmp.lt.s32.totalorder %s9, 1
        %s152 = scalar_select %p151, %s9, 1
        %s153 = smul.addr %s152, 4
        %s154 = smul.addr %s153, 8
        %s155 = scalar_lea.vmem %s2, %s154
      $region28: #{transformer_decoder_forward.18} parent=15 // pred_fallthru
        _
    $region16: #{transformer_decoder_forward.18} parent=5 // pred_fallthru
      _
    %p156 = scmp.le.s32.totalorder 1, %s9
    %p157 = scmp.lt.s32.totalorder %s9, 3
    %p158 = pnand %p156, %p157
    %p159 = pneg %p158
    // Predicated region
    $region29: #{transformer_decoder_forward.18} parent=5 // pred_check
      _
    $region30: #{transformer_decoder_forward.18} parent=5 // pred_check_branch
      %161 = sbr.rel (%p158) target = $region32
    $region31: #{transformer_decoder_forward.18} parent=5 // pred_region
      %s162 = ssub.s32 %s9, 1
      %p163 = scmp.lt.s32.totalorder %s14, 1
      %s164 = scalar_select %p163, %s14, 1
      %s165 = smul.addr %s164, 4
      %s166 = smul.addr %s165, 8
      %s167 = scalar_lea.vmem %s0, %s166
      %p168 = pneg %p35
      %p169 = pneg %p32
      %p170 = scmp.lt.s32.totalorder %s14, 1
      %s171 = scalar_select %p170, %s14, 1
      %s172 = smul.addr %s171, 4
      %s173 = smul.addr %s172, 8
      %s174 = scalar_lea.vmem %s1, %s173
      %p175 = pneg %p61
      %p176 = pneg %p58
      %p177 = scmp.lt.s32.totalorder %s14, 1
      %s178 = scalar_select %p177, %s14, 1
      %s179 = smul.addr %s178, 4
      %s180 = smul.addr %s179, 8
      %s181 = scalar_lea.vmem %s2, %s180
      %p182 = pneg %p87
      %p183 = pneg %p84
      %p184 = pneg %p113
      %p185 = pneg %p110
      %p186 = scmp.lt.s32.totalorder %s14, 1
      %s187 = scalar_select %p186, %s14, 1
      %s188 = smul.addr %s187, 4
      %s189 = smul.addr %s188, 8
      %s190 = scalar_lea.vmem %s3, %s189
      %p191 = scmp.lt.s32.totalorder %s14, 1
      %s192 = scalar_select %p191, %s14, 1
      %s193 = smul.addr %s192, 4
      %s194 = smul.addr %s193, 8
      %s195 = scalar_lea.vmem %s0, %s194
      %p196 = scmp.lt.s32.totalorder %s14, 1
      %s197 = scalar_select %p196, %s14, 1
      %s198 = smul.addr %s197, 4
      %s199 = smul.addr %s198, 8
      %s200 = scalar_lea.vmem %s1, %s199
      %p201 = scmp.lt.s32.totalorder %s14, 1
      %s202 = scalar_select %p201, %s14, 1
      %s203 = smul.addr %s202, 4
      %s204 = smul.addr %s203, 8
      %s205 = scalar_lea.vmem %s2, %s204
      %p206 = scmp.lt.s32.totalorder %s14, 1
      %s207 = scalar_select %p206, %s14, 1
      %s208 = smul.addr %s207, 4
      %s209 = smul.addr %s208, 8
      %s210 = scalar_lea.vmem %s3, %s209
      %v211 = vld [vmem:[%s195] sm:$0xff]
      %v212 = vld [vmem:[%s195 + $0x8] sm:$0xff]
      %v213 = vld [vmem:[%s195 + $0x10] sm:$0xff]
      %v214 = vld [vmem:[%s195 + $0x18] sm:$0xff]
      %v215 = vmul.f32 %v211, 0.17677669
      %v216 = vmul.f32 %v212, 0.17677669
      %v217 = vmul.f32 %v213, 0.17677669
      %v218 = vmul.f32 %v214, 0.17677669
      %v219 = vld [vmem:[%s200] sm:$0xff]
      %v220 = vld [vmem:[%s200 + $0x8] sm:$0xff]
      %v221 = vld [vmem:[%s200 + $0x10] sm:$0xff]
      %v222 = vld [vmem:[%s200 + $0x18] sm:$0xff]
      %v223 = vld [vmem:[%s205] sm:$0xff]
      %v224 = vld [vmem:[%s205 + $0x8] sm:$0xff]
      %v225 = vld [vmem:[%s205 + $0x10] sm:$0xff]
      %v226 = vld [vmem:[%s205 + $0x18] sm:$0xff]
      %vm227 = vcmask 261120
      %v229 = vsel %vm227, %v215, 0
      %v232 = vsel %vm227, %v219, 0
      %234 = vmatprep.subr.mxu0 0.0
      %235 = vmatpush1.xpose.msra.mxu0 %v232
      %236 = vmatprep.subr.mxu0 0.0
      %237 = vmatpush1.xpose.msra.mxu0 0.0
      %238 = vmatprep.subr.mxu0 0.0
      %239 = vmatpush1.xpose.msra.mxu0 0.0
      %240 = vmatprep.subr.mxu0 0.0
      %241 = vmatpush1.xpose.msra.mxu0 0.0
      %242 = vmatprep.subr.mxu0 0.0
      %243 = vmatpush1.xpose.msra.mxu0 0.0
      %244 = vmatprep.subr.mxu0 0.0
      %245 = vmatpush1.xpose.msra.mxu0 0.0
      %246 = vmatprep.subr.mxu0 0.0
      %247 = vmatpush1.xpose.msra.mxu0 0.0
      %248 = vmatprep.subr.mxu0 0.0
      %249 = vmatpush1.xpose.msra.mxu0 0.0
      %250 = vmatprep.subr.mxu0 0.0
      %251 = vmatpush1.xpose.msra.mxu0 0.0
      %252 = vmatprep.subr.mxu0 0.0
      %253 = vmatpush1.xpose.msra.mxu0 0.0
      %254 = vmatprep.subr.mxu0 0.0
      %255 = vmatpush1.xpose.msra.mxu0 0.0
      %256 = vmatprep.subr.mxu0 0.0
      %257 = vmatpush1.xpose.msra.mxu0 0.0
      %258 = vmatprep.subr.mxu0 0.0
      %259 = vmatpush1.xpose.msra.mxu0 0.0
      %260 = vmatprep.subr.mxu0 0.0
      %261 = vmatpush1.xpose.msra.mxu0 0.0
      %262 = vmatprep.subr.mxu0 0.0
      %263 = vmatpush1.xpose.msra.mxu0 0.0
      %264 = vmatprep.subr.mxu0 0.0
      %265 = vmatpush1.xpose.msra.mxu0 0.0
      %266 = vmatprep.subr.mxu0 0.0
      %267 = vmatpush1.xpose.msra.mxu0 0.0
      %268 = vmatprep.subr.mxu0 0.0
      %269 = vmatpush1.xpose.msra.mxu0 0.0
      %270 = vmatprep.subr.mxu0 0.0
      %271 = vmatpush1.xpose.msra.mxu0 0.0
      %272 = vmatprep.subr.mxu0 0.0
      %273 = vmatpush1.xpose.msra.mxu0 0.0
      %274 = vmatprep.subr.mxu0 0.0
      %275 = vmatpush1.xpose.msra.mxu0 0.0
      %276 = vmatprep.subr.mxu0 0.0
      %277 = vmatpush1.xpose.msra.mxu0 0.0
      %278 = vmatprep.subr.mxu0 0.0
      %279 = vmatpush1.xpose.msra.mxu0 0.0
      %280 = vmatprep.subr.mxu0 0.0
      %281 = vmatpush1.xpose.msra.mxu0 0.0
      %282 = vmatprep.subr.mxu0 0.0
      %283 = vmatpush1.xpose.msra.mxu0 0.0
      %284 = vmatprep.subr.mxu0 0.0
      %285 = vmatpush1.xpose.msra.mxu0 0.0
      %286 = vmatprep.subr.mxu0 0.0
      %287 = vmatpush1.xpose.msra.mxu0 0.0
      %288 = vmatprep.subr.mxu0 0.0
      %289 = vmatpush1.xpose.msra.mxu0 0.0
      %290 = vmatprep.subr.mxu0 0.0
      %291 = vmatpush1.xpose.msra.mxu0 0.0
      %292 = vmatprep.subr.mxu0 0.0
      %293 = vmatpush1.xpose.msra.mxu0 0.0
      %294 = vmatprep.subr.mxu0 0.0
      %295 = vmatpush1.xpose.msra.mxu0 0.0
      %296 = vmatprep.subr.mxu0 0.0
      %297 = vmatpush1.xpose.msra.mxu0 0.0
      %298 = vmatprep.mubr.f32.mxu0 0.0
      %299 = vmatmul.mubr.f32.gmra.mrb[0].mxu0 %v229
      %v300 = vpop.f32.mrb[0].mxu0
      %v301 = vadd.f32 0.0, %v300
      %v302 = vpop.f32.mrb[0].mxu0
      %303 = vdwg.mxu0
      %v305 = vsel %vm227, %v216, 0
      %v308 = vsel %vm227, %v220, 0
      %310 = vmatprep.subr.mxu0 0.0
      %311 = vmatpush1.xpose.msra.mxu0 %v308
      %312 = vmatprep.subr.mxu0 0.0
      %313 = vmatpush1.xpose.msra.mxu0 0.0
      %314 = vmatprep.subr.mxu0 0.0
      %315 = vmatpush1.xpose.msra.mxu0 0.0
      %316 = vmatprep.subr.mxu0 0.0
      %317 = vmatpush1.xpose.msra.mxu0 0.0
      %318 = vmatprep.subr.mxu0 0.0
      %319 = vmatpush1.xpose.msra.mxu0 0.0
      %320 = vmatprep.subr.mxu0 0.0
      %321 = vmatpush1.xpose.msra.mxu0 0.0
      %322 = vmatprep.subr.mxu0 0.0
      %323 = vmatpush1.xpose.msra.mxu0 0.0
      %324 = vmatprep.subr.mxu0 0.0
      %325 = vmatpush1.xpose.msra.mxu0 0.0
      %326 = vmatprep.subr.mxu0 0.0
      %327 = vmatpush1.xpose.msra.mxu0 0.0
      %328 = vmatprep.subr.mxu0 0.0
      %329 = vmatpush1.xpose.msra.mxu0 0.0
      %330 = vmatprep.subr.mxu0 0.0
      %331 = vmatpush1.xpose.msra.mxu0 0.0
      %332 = vmatprep.subr.mxu0 0.0
      %333 = vmatpush1.xpose.msra.mxu0 0.0
      %334 = vmatprep.subr.mxu0 0.0
      %335 = vmatpush1.xpose.msra.mxu0 0.0
      %336 = vmatprep.subr.mxu0 0.0
      %337 = vmatpush1.xpose.msra.mxu0 0.0
      %338 = vmatprep.subr.mxu0 0.0
      %339 = vmatpush1.xpose.msra.mxu0 0.0
      %340 = vmatprep.subr.mxu0 0.0
      %341 = vmatpush1.xpose.msra.mxu0 0.0
      %342 = vmatprep.subr.mxu0 0.0
      %343 = vmatpush1.xpose.msra.mxu0 0.0
      %344 = vmatprep.subr.mxu0 0.0
      %345 = vmatpush1.xpose.msra.mxu0 0.0
      %346 = vmatprep.subr.mxu0 0.0
      %347 = vmatpush1.xpose.msra.mxu0 0.0
      %348 = vmatprep.subr.mxu0 0.0
      %349 = vmatpush1.xpose.msra.mxu0 0.0
      %350 = vmatprep.subr.mxu0 0.0
      %351 = vmatpush1.xpose.msra.mxu0 0.0
      %352 = vmatprep.subr.mxu0 0.0
      %353 = vmatpush1.xpose.msra.mxu0 0.0
      %354 = vmatprep.subr.mxu0 0.0
      %355 = vmatpush1.xpose.msra.mxu0 0.0
      %356 = vmatprep.subr.mxu0 0.0
      %357 = vmatpush1.xpose.msra.mxu0 0.0
      %358 = vmatprep.subr.mxu0 0.0
      %359 = vmatpush1.xpose.msra.mxu0 0.0
      %360 = vmatprep.subr.mxu0 0.0
      %361 = vmatpush1.xpose.msra.mxu0 0.0
      %362 = vmatprep.subr.mxu0 0.0
      %363 = vmatpush1.xpose.msra.mxu0 0.0
      %364 = vmatprep.subr.mxu0 0.0
      %365 = vmatpush1.xpose.msra.mxu0 0.0
      %366 = vmatprep.subr.mxu0 0.0
      %367 = vmatpush1.xpose.msra.mxu0 0.0
      %368 = vmatprep.subr.mxu0 0.0
      %369 = vmatpush1.xpose.msra.mxu0 0.0
      %370 = vmatprep.subr.mxu0 0.0
      %371 = vmatpush1.xpose.msra.mxu0 0.0
      %372 = vmatprep.subr.mxu0 0.0
      %373 = vmatpush1.xpose.msra.mxu0 0.0
      %374 = vmatprep.mubr.f32.mxu0 0.0
      %375 = vmatmul.mubr.f32.gmra.mrb[0].mxu0 %v305
      %v376 = vpop.f32.mrb[0].mxu0
      %v377 = vadd.f32 0.0, %v376
      %v378 = vpop.f32.mrb[0].mxu0
      %379 = vdwg.mxu0
      %v381 = vsel %vm227, %v217, 0
      %v384 = vsel %vm227, %v221, 0
      %386 = vmatprep.subr.mxu0 0.0
      %387 = vmatpush1.xpose.msra.mxu0 %v384
      %388 = vmatprep.subr.mxu0 0.0
      %389 = vmatpush1.xpose.msra.mxu0 0.0
      %390 = vmatprep.subr.mxu0 0.0
      %391 = vmatpush1.xpose.msra.mxu0 0.0
      %392 = vmatprep.subr.mxu0 0.0
      %393 = vmatpush1.xpose.msra.mxu0 0.0
      %394 = vmatprep.subr.mxu0 0.0
      %395 = vmatpush1.xpose.msra.mxu0 0.0
      %396 = vmatprep.subr.mxu0 0.0
      %397 = vmatpush1.xpose.msra.mxu0 0.0
      %398 = vmatprep.subr.mxu0 0.0
      %399 = vmatpush1.xpose.msra.mxu0 0.0
      %400 = vmatprep.subr.mxu0 0.0
      %401 = vmatpush1.xpose.msra.mxu0 0.0
      %402 = vmatprep.subr.mxu0 0.0
      %403 = vmatpush1.xpose.msra.mxu0 0.0
      %404 = vmatprep.subr.mxu0 0.0
      %405 = vmatpush1.xpose.msra.mxu0 0.0
      %406 = vmatprep.subr.mxu0 0.0
      %407 = vmatpush1.xpose.msra.mxu0 0.0
      %408 = vmatprep.subr.mxu0 0.0
      %409 = vmatpush1.xpose.msra.mxu0 0.0
      %410 = vmatprep.subr.mxu0 0.0
      %411 = vmatpush1.xpose.msra.mxu0 0.0
      %412 = vmatprep.subr.mxu0 0.0
      %413 = vmatpush1.xpose.msra.mxu0 0.0
      %414 = vmatprep.subr.mxu0 0.0
      %415 = vmatpush1.xpose.msra.mxu0 0.0
      %416 = vmatprep.subr.mxu0 0.0
      %417 = vmatpush1.xpose.msra.mxu0 0.0
      %418 = vmatprep.subr.mxu0 0.0
      %419 = vmatpush1.xpose.msra.mxu0 0.0
      %420 = vmatprep.subr.mxu0 0.0
      %421 = vmatpush1.xpose.msra.mxu0 0.0
      %422 = vmatprep.subr.mxu0 0.0
      %423 = vmatpush1.xpose.msra.mxu0 0.0
      %424 = vmatprep.subr.mxu0 0.0
      %425 = vmatpush1.xpose.msra.mxu0 0.0
      %426 = vmatprep.subr.mxu0 0.0
      %427 = vmatpush1.xpose.msra.mxu0 0.0
      %428 = vmatprep.subr.mxu0 0.0
      %429 = vmatpush1.xpose.msra.mxu0 0.0
      %430 = vmatprep.subr.mxu0 0.0
      %431 = vmatpush1.xpose.msra.mxu0 0.0
      %432 = vmatprep.subr.mxu0 0.0
      %433 = vmatpush1.xpose.msra.mxu0 0.0
      %434 = vmatprep.subr.mxu0 0.0
      %435 = vmatpush1.xpose.msra.mxu0 0.0
      %436 = vmatprep.subr.mxu0 0.0
      %437 = vmatpush1.xpose.msra.mxu0 0.0
      %438 = vmatprep.subr.mxu0 0.0
      %439 = vmatpush1.xpose.msra.mxu0 0.0
      %440 = vmatprep.subr.mxu0 0.0
      %441 = vmatpush1.xpose.msra.mxu0 0.0
      %442 = vmatprep.subr.mxu0 0.0
      %443 = vmatpush1.xpose.msra.mxu0 0.0
      %444 = vmatprep.subr.mxu0 0.0
      %445 = vmatpush1.xpose.msra.mxu0 0.0
      %446 = vmatprep.subr.mxu0 0.0
      %447 = vmatpush1.xpose.msra.mxu0 0.0
      %448 = vmatprep.subr.mxu0 0.0
      %449 = vmatpush1.xpose.msra.mxu0 0.0
      %450 = vmatprep.mubr.f32.mxu0 0.0
      %451 = vmatmul.mubr.f32.gmra.mrb[0].mxu0 %v381
      %v452 = vpop.f32.mrb[0].mxu0
      %v453 = vadd.f32 0.0, %v452
      %v454 = vpop.f32.mrb[0].mxu0
      %455 = vdwg.mxu0
      %v457 = vsel %vm227, %v218, 0
      %v460 = vsel %vm227, %v222, 0
      %462 = vmatprep.subr.mxu0 0.0
      %463 = vmatpush1.xpose.msra.mxu0 %v460
      %464 = vmatprep.subr.mxu0 0.0
      %465 = vmatpush1.xpose.msra.mxu0 0.0
      %466 = vmatprep.subr.mxu0 0.0
      %467 = vmatpush1.xpose.msra.mxu0 0.0
      %468 = vmatprep.subr.mxu0 0.0
      %469 = vmatpush1.xpose.msra.mxu0 0.0
      %470 = vmatprep.subr.mxu0 0.0
      %471 = vmatpush1.xpose.msra.mxu0 0.0
      %472 = vmatprep.subr.mxu0 0.0
      %473 = vmatpush1.xpose.msra.mxu0 0.0
      %474 = vmatprep.subr.mxu0 0.0
      %475 = vmatpush1.xpose.msra.mxu0 0.0
      %476 = vmatprep.subr.mxu0 0.0
      %477 = vmatpush1.xpose.msra.mxu0 0.0
      %478 = vmatprep.subr.mxu0 0.0
      %479 = vmatpush1.xpose.msra.mxu0 0.0
      %480 = vmatprep.subr.mxu0 0.0
      %481 = vmatpush1.xpose.msra.mxu0 0.0
      %482 = vmatprep.subr.mxu0 0.0
      %483 = vmatpush1.xpose.msra.mxu0 0.0
      %484 = vmatprep.subr.mxu0 0.0
      %485 = vmatpush1.xpose.msra.mxu0 0.0
      %486 = vmatprep.subr.mxu0 0.0
      %487 = vmatpush1.xpose.msra.mxu0 0.0
      %488 = vmatprep.subr.mxu0 0.0
      %489 = vmatpush1.xpose.msra.mxu0 0.0
      %490 = vmatprep.subr.mxu0 0.0
      %491 = vmatpush1.xpose.msra.mxu0 0.0
      %492 = vmatprep.subr.mxu0 0.0
      %493 = vmatpush1.xpose.msra.mxu0 0.0
      %494 = vmatprep.subr.mxu0 0.0
      %495 = vmatpush1.xpose.msra.mxu0 0.0
      %496 = vmatprep.subr.mxu0 0.0
      %497 = vmatpush1.xpose.msra.mxu0 0.0
      %498 = vmatprep.subr.mxu0 0.0
      %499 = vmatpush1.xpose.msra.mxu0 0.0
      %500 = vmatprep.subr.mxu0 0.0
      %501 = vmatpush1.xpose.msra.mxu0 0.0
      %502 = vmatprep.subr.mxu0 0.0
      %503 = vmatpush1.xpose.msra.mxu0 0.0
      %504 = vmatprep.subr.mxu0 0.0
      %505 = vmatpush1.xpose.msra.mxu0 0.0
      %506 = vmatprep.subr.mxu0 0.0
      %507 = vmatpush1.xpose.msra.mxu0 0.0
      %508 = vmatprep.subr.mxu0 0.0
      %509 = vmatpush1.xpose.msra.mxu0 0.0
      %510 = vmatprep.subr.mxu0 0.0
      %511 = vmatpush1.xpose.msra.mxu0 0.0
      %512 = vmatprep.subr.mxu0 0.0
      %513 = vmatpush1.xpose.msra.mxu0 0.0
      %514 = vmatprep.subr.mxu0 0.0
      %515 = vmatpush1.xpose.msra.mxu0 0.0
      %516 = vmatprep.subr.mxu0 0.0
      %517 = vmatpush1.xpose.msra.mxu0 0.0
      %518 = vmatprep.subr.mxu0 0.0
      %519 = vmatpush1.xpose.msra.mxu0 0.0
      %520 = vmatprep.subr.mxu0 0.0
      %521 = vmatpush1.xpose.msra.mxu0 0.0
      %522 = vmatprep.subr.mxu0 0.0
      %523 = vmatpush1.xpose.msra.mxu0 0.0
      %524 = vmatprep.subr.mxu0 0.0
      %525 = vmatpush1.xpose.msra.mxu0 0.0
      %526 = vmatprep.mubr.f32.mxu0 0.0
      %527 = vmatmul.mubr.f32.gmra.mrb[0].mxu0 %v457
      %v528 = vpop.f32.mrb[0].mxu0
      %v529 = vadd.f32 0.0, %v528
      %v530 = vpop.f32.mrb[0].mxu0
      %531 = vdwg.mxu0
      %vm532 = vcmask 64512
      %v533 = vsel %vm532, %v301, -inf
      %534 = vmax.xlane.f32.xlu0 %v533
      %v535 = vpop.xlane.xlu0 %534
      %v536 = vsel %vm532, %v377, -inf
      %537 = vmax.xlane.f32.xlu0 %v536
      %v538 = vpop.xlane.xlu0 %537
      %v539 = vsel %vm532, %v453, -inf
      %540 = vmax.xlane.f32.xlu0 %v539
      %v541 = vpop.xlane.xlu0 %540
      %v542 = vsel %vm532, %v529, -inf
      %543 = vmax.xlane.f32.xlu0 %v542
      %v544 = vpop.xlane.xlu0 %543
      %v545 = vsub.f32 %v301, %v535
      %v546 = vsub.f32 %v377, %v538
      %v547 = vsub.f32 %v453, %v541
      %v548 = vsub.f32 %v529, %v544
      %v549 = vmul.f32 %v545, 1.442695
      %v550 = vpow.pop %v549
      %v551 = vmul.f32 %v546, 1.442695
      %v552 = vpow.pop %v551
      %v553 = vmul.f32 %v547, 1.442695
      %v554 = vpow.pop %v553
      %v555 = vmul.f32 %v548, 1.442695
      %v556 = vpow.pop %v555
      %v557 = vsel %vm532, %v550, 0.0
      %558 = vadd.xlane.f32.xlu0 %v557
      %v559 = vpop.xlane.xlu0 %558
      %v560 = vsel %vm532, %v552, 0.0
      %561 = vadd.xlane.f32.xlu0 %v560
      %v562 = vpop.xlane.xlu0 %561
      %v563 = vsel %vm532, %v554, 0.0
      %564 = vadd.xlane.f32.xlu0 %v563
      %v565 = vpop.xlane.xlu0 %564
      %v566 = vsel %vm532, %v556, 0.0
      %567 = vadd.xlane.f32.xlu0 %v566
      %v568 = vpop.xlane.xlu0 %567
      %v569 = vrcp.pop %v559
      %v570 = vmul.f32 %v550, %v569
      %v571 = vrcp.pop %v562
      %v572 = vmul.f32 %v552, %v571
      %v573 = vrcp.pop %v565
      %v574 = vmul.f32 %v554, %v573
      %v575 = vrcp.pop %v568
      %v576 = vmul.f32 %v556, %v575
      %v578 = vsel %vm532, %v570, 0
      %580 = vmatprep.subr.mxu0 0.0
      %581 = vmatpush1.msra.mxu0 %v223
      %582 = vmatprep.subr.mxu0 0.0
      %583 = vmatpush1.msra.mxu0 0.0
      %584 = vmatprep.subr.mxu0 0.0
      %585 = vmatpush1.msra.mxu0 0.0
      %586 = vmatprep.subr.mxu0 0.0
      %587 = vmatpush1.msra.mxu0 0.0
      %588 = vmatprep.subr.mxu0 0.0
      %589 = vmatpush1.msra.mxu0 0.0
      %590 = vmatprep.subr.mxu0 0.0
      %591 = vmatpush1.msra.mxu0 0.0
      %592 = vmatprep.subr.mxu0 0.0
      %593 = vmatpush1.msra.mxu0 0.0
      %594 = vmatprep.subr.mxu0 0.0
      %595 = vmatpush1.msra.mxu0 0.0
      %596 = vmatprep.subr.mxu0 0.0
      %597 = vmatpush1.msra.mxu0 0.0
      %598 = vmatprep.subr.mxu0 0.0
      %599 = vmatpush1.msra.mxu0 0.0
      %600 = vmatprep.subr.mxu0 0.0
      %601 = vmatpush1.msra.mxu0 0.0
      %602 = vmatprep.subr.mxu0 0.0
      %603 = vmatpush1.msra.mxu0 0.0
      %604 = vmatprep.subr.mxu0 0.0
      %605 = vmatpush1.msra.mxu0 0.0
      %606 = vmatprep.subr.mxu0 0.0
      %607 = vmatpush1.msra.mxu0 0.0
      %608 = vmatprep.subr.mxu0 0.0
      %609 = vmatpush1.msra.mxu0 0.0
      %610 = vmatprep.subr.mxu0 0.0
      %611 = vmatpush1.msra.mxu0 0.0
      %612 = vmatprep.subr.mxu0 0.0
      %613 = vmatpush1.msra.mxu0 0.0
      %614 = vmatprep.subr.mxu0 0.0
      %615 = vmatpush1.msra.mxu0 0.0
      %616 = vmatprep.subr.mxu0 0.0
      %617 = vmatpush1.msra.mxu0 0.0
      %618 = vmatprep.subr.mxu0 0.0
      %619 = vmatpush1.msra.mxu0 0.0
      %620 = vmatprep.subr.mxu0 0.0
      %621 = vmatpush1.msra.mxu0 0.0
      %622 = vmatprep.subr.mxu0 0.0
      %623 = vmatpush1.msra.mxu0 0.0
      %624 = vmatprep.subr.mxu0 0.0
      %625 = vmatpush1.msra.mxu0 0.0
      %626 = vmatprep.subr.mxu0 0.0
      %627 = vmatpush1.msra.mxu0 0.0
      %628 = vmatprep.subr.mxu0 0.0
      %629 = vmatpush1.msra.mxu0 0.0
      %630 = vmatprep.subr.mxu0 0.0
      %631 = vmatpush1.msra.mxu0 0.0
      %632 = vmatprep.subr.mxu0 0.0
      %633 = vmatpush1.msra.mxu0 0.0
      %634 = vmatprep.subr.mxu0 0.0
      %635 = vmatpush1.msra.mxu0 0.0
      %636 = vmatprep.subr.mxu0 0.0
      %637 = vmatpush1.msra.mxu0 0.0
      %638 = vmatprep.subr.mxu0 0.0
      %639 = vmatpush1.msra.mxu0 0.0
      %640 = vmatprep.subr.mxu0 0.0
      %641 = vmatpush1.msra.mxu0 0.0
      %642 = vmatprep.subr.mxu0 0.0
      %643 = vmatpush1.msra.mxu0 0.0
      %644 = vmatprep.mubr.f32.mxu0 0.0
      %645 = vmatmul.mubr.f32.gmra.mrb[0].mxu0 %v578
      %v646 = vpop.f32.mrb[0].mxu0
      %v647 = vadd.f32 0.0, %v646
      %v648 = vpop.f32.mrb[0].mxu0
      %649 = vdwg.mxu0
      %v651 = vsel %vm532, %v572, 0
      %653 = vmatprep.subr.mxu0 0.0
      %654 = vmatpush1.msra.mxu0 %v224
      %655 = vmatprep.subr.mxu0 0.0
      %656 = vmatpush1.msra.mxu0 0.0
      %657 = vmatprep.subr.mxu0 0.0
      %658 = vmatpush1.msra.mxu0 0.0
      %659 = vmatprep.subr.mxu0 0.0
      %660 = vmatpush1.msra.mxu0 0.0
      %661 = vmatprep.subr.mxu0 0.0
      %662 = vmatpush1.msra.mxu0 0.0
      %663 = vmatprep.subr.mxu0 0.0
      %664 = vmatpush1.msra.mxu0 0.0
      %665 = vmatprep.subr.mxu0 0.0
      %666 = vmatpush1.msra.mxu0 0.0
      %667 = vmatprep.subr.mxu0 0.0
      %668 = vmatpush1.msra.mxu0 0.0
      %669 = vmatprep.subr.mxu0 0.0
      %670 = vmatpush1.msra.mxu0 0.0
      %671 = vmatprep.subr.mxu0 0.0
      %672 = vmatpush1.msra.mxu0 0.0
      %673 = vmatprep.subr.mxu0 0.0
      %674 = vmatpush1.msra.mxu0 0.0
      %675 = vmatprep.subr.mxu0 0.0
      %676 = vmatpush1.msra.mxu0 0.0
      %677 = vmatprep.subr.mxu0 0.0
      %678 = vmatpush1.msra.mxu0 0.0
      %679 = vmatprep.subr.mxu0 0.0
      %680 = vmatpush1.msra.mxu0 0.0
      %681 = vmatprep.subr.mxu0 0.0
      %682 = vmatpush1.msra.mxu0 0.0
      %683 = vmatprep.subr.mxu0 0.0
      %684 = vmatpush1.msra.mxu0 0.0
      %685 = vmatprep.subr.mxu0 0.0
      %686 = vmatpush1.msra.mxu0 0.0
      %687 = vmatprep.subr.mxu0 0.0
      %688 = vmatpush1.msra.mxu0 0.0
      %689 = vmatprep.subr.mxu0 0.0
      %690 = vmatpush1.msra.mxu0 0.0
      %691 = vmatprep.subr.mxu0 0.0
      %692 = vmatpush1.msra.mxu0 0.0
      %693 = vmatprep.subr.mxu0 0.0
      %694 = vmatpush1.msra.mxu0 0.0
      %695 = vmatprep.subr.mxu0 0.0
      %696 = vmatpush1.msra.mxu0 0.0
      %697 = vmatprep.subr.mxu0 0.0
      %698 = vmatpush1.msra.mxu0 0.0
      %699 = vmatprep.subr.mxu0 0.0
      %700 = vmatpush1.msra.mxu0 0.0
      %701 = vmatprep.subr.mxu0 0.0
      %702 = vmatpush1.msra.mxu0 0.0
      %703 = vmatprep.subr.mxu0 0.0
      %704 = vmatpush1.msra.mxu0 0.0
      %705 = vmatprep.subr.mxu0 0.0
      %706 = vmatpush1.msra.mxu0 0.0
      %707 = vmatprep.subr.mxu0 0.0
      %708 = vmatpush1.msra.mxu0 0.0
      %709 = vmatprep.subr.mxu0 0.0
      %710 = vmatpush1.msra.mxu0 0.0
      %711 = vmatprep.subr.mxu0 0.0
      %712 = vmatpush1.msra.mxu0 0.0
      %713 = vmatprep.subr.mxu0 0.0
      %714 = vmatpush1.msra.mxu0 0.0
      %715 = vmatprep.subr.mxu0 0.0
      %716 = vmatpush1.msra.mxu0 0.0
      %717 = vmatprep.mubr.f32.mxu0 0.0
      %718 = vmatmul.mubr.f32.gmra.mrb[0].mxu0 %v651
      %v719 = vpop.f32.mrb[0].mxu0
      %v720 = vadd.f32 0.0, %v719
      %v721 = vpop.f32.mrb[0].mxu0
      %722 = vdwg.mxu0
      %v724 = vsel %vm532, %v574, 0
      %726 = vmatprep.subr.mxu0 0.0
      %727 = vmatpush1.msra.mxu0 %v225
      %728 = vmatprep.subr.mxu0 0.0
      %729 = vmatpush1.msra.mxu0 0.0
      %730 = vmatprep.subr.mxu0 0.0
      %731 = vmatpush1.msra.mxu0 0.0
      %732 = vmatprep.subr.mxu0 0.0
      %733 = vmatpush1.msra.mxu0 0.0
      %734 = vmatprep.subr.mxu0 0.0
      %735 = vmatpush1.msra.mxu0 0.0
      %736 = vmatprep.subr.mxu0 0.0
      %737 = vmatpush1.msra.mxu0 0.0
      %738 = vmatprep.subr.mxu0 0.0
      %739 = vmatpush1.msra.mxu0 0.0
      %740 = vmatprep.subr.mxu0 0.0
      %741 = vmatpush1.msra.mxu0 0.0
      %742 = vmatprep.subr.mxu0 0.0
      %743 = vmatpush1.msra.mxu0 0.0
      %744 = vmatprep.subr.mxu0 0.0
      %745 = vmatpush1.msra.mxu0 0.0
      %746 = vmatprep.subr.mxu0 0.0
      %747 = vmatpush1.msra.mxu0 0.0
      %748 = vmatprep.subr.mxu0 0.0
      %749 = vmatpush1.msra.mxu0 0.0
      %750 = vmatprep.subr.mxu0 0.0
      %751 = vmatpush1.msra.mxu0 0.0
      %752 = vmatprep.subr.mxu0 0.0
      %753 = vmatpush1.msra.mxu0 0.0
      %754 = vmatprep.subr.mxu0 0.0
      %755 = vmatpush1.msra.mxu0 0.0
      %756 = vmatprep.subr.mxu0 0.0
      %757 = vmatpush1.msra.mxu0 0.0
      %758 = vmatprep.subr.mxu0 0.0
      %759 = vmatpush1.msra.mxu0 0.0
      %760 = vmatprep.subr.mxu0 0.0
      %761 = vmatpush1.msra.mxu0 0.0
      %762 = vmatprep.subr.mxu0 0.0
      %763 = vmatpush1.msra.mxu0 0.0
      %764 = vmatprep.subr.mxu0 0.0
      %765 = vmatpush1.msra.mxu0 0.0
      %766 = vmatprep.subr.mxu0 0.0
      %767 = vmatpush1.msra.mxu0 0.0
      %768 = vmatprep.subr.mxu0 0.0
      %769 = vmatpush1.msra.mxu0 0.0
      %770 = vmatprep.subr.mxu0 0.0
      %771 = vmatpush1.msra.mxu0 0.0
      %772 = vmatprep.subr.mxu0 0.0
      %773 = vmatpush1.msra.mxu0 0.0
      %774 = vmatprep.subr.mxu0 0.0
      %775 = vmatpush1.msra.mxu0 0.0
      %776 = vmatprep.subr.mxu0 0.0
      %777 = vmatpush1.msra.mxu0 0.0
      %778 = vmatprep.subr.mxu0 0.0
      %779 = vmatpush1.msra.mxu0 0.0
      %780 = vmatprep.subr.mxu0 0.0
      %781 = vmatpush1.msra.mxu0 0.0
      %782 = vmatprep.subr.mxu0 0.0
      %783 = vmatpush1.msra.mxu0 0.0
      %784 = vmatprep.subr.mxu0 0.0
      %785 = vmatpush1.msra.mxu0 0.0
      %786 = vmatprep.subr.mxu0 0.0
      %787 = vmatpush1.msra.mxu0 0.0
      %788 = vmatprep.subr.mxu0 0.0
      %789 = vmatpush1.msra.mxu0 0.0
      %790 = vmatprep.mubr.f32.mxu0 0.0
      %791 = vmatmul.mubr.f32.gmra.mrb[0].mxu0 %v724
      %v792 = vpop.f32.mrb[0].mxu0
      %v793 = vadd.f32 0.0, %v792
      %v794 = vpop.f32.mrb[0].mxu0
      %795 = vdwg.mxu0
      %v797 = vsel %vm532, %v576, 0
      %799 = vmatprep.subr.mxu0 0.0
      %800 = vmatpush1.msra.mxu0 %v226
      %801 = vmatprep.subr.mxu0 0.0
      %802 = vmatpush1.msra.mxu0 0.0
      %803 = vmatprep.subr.mxu0 0.0
      %804 = vmatpush1.msra.mxu0 0.0
      %805 = vmatprep.subr.mxu0 0.0
      %806 = vmatpush1.msra.mxu0 0.0
      %807 = vmatprep.subr.mxu0 0.0
      %808 = vmatpush1.msra.mxu0 0.0
      %809 = vmatprep.subr.mxu0 0.0
      %810 = vmatpush1.msra.mxu0 0.0
      %811 = vmatprep.subr.mxu0 0.0
      %812 = vmatpush1.msra.mxu0 0.0
      %813 = vmatprep.subr.mxu0 0.0
      %814 = vmatpush1.msra.mxu0 0.0
      %815 = vmatprep.subr.mxu0 0.0
      %816 = vmatpush1.msra.mxu0 0.0
      %817 = vmatprep.subr.mxu0 0.0
      %818 = vmatpush1.msra.mxu0 0.0
      %819 = vmatprep.subr.mxu0 0.0
      %820 = vmatpush1.msra.mxu0 0.0
      %821 = vmatprep.subr.mxu0 0.0
      %822 = vmatpush1.msra.mxu0 0.0
      %823 = vmatprep.subr.mxu0 0.0
      %824 = vmatpush1.msra.mxu0 0.0
      %825 = vmatprep.subr.mxu0 0.0
      %826 = vmatpush1.msra.mxu0 0.0
      %827 = vmatprep.subr.mxu0 0.0
      %828 = vmatpush1.msra.mxu0 0.0
      %829 = vmatprep.subr.mxu0 0.0
      %830 = vmatpush1.msra.mxu0 0.0
      %831 = vmatprep.subr.mxu0 0.0
      %832 = vmatpush1.msra.mxu0 0.0
      %833 = vmatprep.subr.mxu0 0.0
      %834 = vmatpush1.msra.mxu0 0.0
      %835 = vmatprep.subr.mxu0 0.0
      %836 = vmatpush1.msra.mxu0 0.0
      %837 = vmatprep.subr.mxu0 0.0
      %838 = vmatpush1.msra.mxu0 0.0
      %839 = vmatprep.subr.mxu0 0.0
      %840 = vmatpush1.msra.mxu0 0.0
      %841 = vmatprep.subr.mxu0 0.0
      %842 = vmatpush1.msra.mxu0 0.0
      %843 = vmatprep.subr.mxu0 0.0
      %844 = vmatpush1.msra.mxu0 0.0
      %845 = vmatprep.subr.mxu0 0.0
      %846 = vmatpush1.msra.mxu0 0.0
      %847 = vmatprep.subr.mxu0 0.0
      %848 = vmatpush1.msra.mxu0 0.0
      %849 = vmatprep.subr.mxu0 0.0
      %850 = vmatpush1.msra.mxu0 0.0
      %851 = vmatprep.subr.mxu0 0.0
      %852 = vmatpush1.msra.mxu0 0.0
      %853 = vmatprep.subr.mxu0 0.0
      %854 = vmatpush1.msra.mxu0 0.0
      %855 = vmatprep.subr.mxu0 0.0
      %856 = vmatpush1.msra.mxu0 0.0
      %857 = vmatprep.subr.mxu0 0.0
      %858 = vmatpush1.msra.mxu0 0.0
      %859 = vmatprep.subr.mxu0 0.0
      %860 = vmatpush1.msra.mxu0 0.0
      %861 = vmatprep.subr.mxu0 0.0
      %862 = vmatpush1.msra.mxu0 0.0
      %863 = vmatprep.mubr.f32.mxu0 0.0
      %864 = vmatmul.mubr.f32.gmra.mrb[0].mxu0 %v797
      %v865 = vpop.f32.mrb[0].mxu0
      %v866 = vadd.f32 0.0, %v865
      %v867 = vpop.f32.mrb[0].mxu0
      %868 = vdwg.mxu0
      %869 = vst.msk [vmem:[%s210] sm:$0xff] %vm227, %v647
      %870 = vst.msk [vmem:[%s210 + $0x8] sm:$0xff] %vm227, %v720
      %871 = vst.msk [vmem:[%s210 + $0x10] sm:$0xff] %vm227, %v793
      %872 = vst.msk [vmem:[%s210 + $0x18] sm:$0xff] %vm227, %v866
      %p873 = scmp.lt.s32.totalorder %s14, 1
      %s874 = scalar_select %p873, %s14, 1
      %s875 = smul.addr %s874, 4
      %s876 = smul.addr %s875, 8
      %s877 = scalar_lea.vmem %s3, %s876
      // Predicated region
      $region33: #{transformer_decoder_forward.18} parent=31 // pred_check
        %p878 = pneg %p110
      $region34: #{transformer_decoder_forward.18} parent=31 // pred_check_branch
        %880 = sbr.rel (%p878) target = $region36
      $region35: #{transformer_decoder_forward.18} parent=31 // pred_region
        _
      $region36: #{transformer_decoder_forward.18} parent=31 // pred_fallthru
        _
    $region32: #{transformer_decoder_forward.18} parent=5 // pred_fallthru
      _
    %p881 = scmp.le.s32.totalorder 2, %s9
    // Predicated region
    $region37: #{transformer_decoder_forward.18} parent=5 // pred_check
      %p882 = pneg %p881
    $region38: #{transformer_decoder_forward.18} parent=5 // pred_check_branch
      %884 = sbr.rel (%p882) target = $region40
    $region39: #{transformer_decoder_forward.18} parent=5 // pred_region
      %s885 = ssub.s32 %s9, 2
      // Predicated region
      $region41: #{transformer_decoder_forward.18} parent=39 // pred_check
        %p886 = pneg %p116
      $region42: #{transformer_decoder_forward.18} parent=39 // pred_check_branch
        %888 = sbr.rel (%p886) target = $region44
      $region43: #{transformer_decoder_forward.18} parent=39 // pred_region
        %p889 = scmp.lt.s32.totalorder %s15, 1
        %s890 = scalar_select %p889, %s15, 1
        %s891 = smul.addr %s890, 4
        %s892 = smul.addr %s891, 8
        %s893 = scalar_lea.vmem %s3, %s892
      $region44: #{transformer_decoder_forward.18} parent=39 // pred_fallthru
        _
    $region40: #{transformer_decoder_forward.18} parent=5 // pred_fallthru
      _
  $region6: #{transformer_decoder_forward.18} parent=0 // loop_footer
    %s13 = sadd.s32 1, %s9
  $region7: #{transformer_decoder_forward.18} parent=0 // loop_footer_branch
    %8 = sbr.rel target = $region3
  $region8: #{transformer_decoder_forward.18} parent=0 // loop_exit
    _

// kernel: transformer_decoder_forward.21
$region0: #{transformer_decoder_forward.21}
  #allocation0 [shape = 'u32[]', space=smem, size = 0x4, offset = 0x4, fixed_abs, tag = 'smem constant byte address 0x4 - core index']
  #allocation1 [shape = 'u32[144,128]{1,0:T(1,128)}', space=vmem, size = 0x12000, scoped, tag = 'internal scratch']
  %s0 = inlined_call_operand.vmem [shape: f32[32,128], index: 0, kind: input, shape index: {}]
  %s1 = inlined_call_operand.vmem [shape: f32[32,128], index: 1, kind: input, shape index: {}]
  %s2 = inlined_call_operand.vmem [shape: f32[128,128], index: 2, kind: input, shape index: {}]
  %s3 = inlined_call_operand.vmem [shape: f32[1,128], index: 3, kind: input, shape index: {}]
  %s4 = inlined_call_operand.vmem [shape: f32[128,128], index: 4, kind: input, shape index: {}]
  %s5 = inlined_call_operand.vmem [shape: f32[1,128], index: 5, kind: input, shape index: {}]
  %s6 = inlined_call_operand.vmem [shape: f32[32,128], index: 6, kind: output, shape index: {0}]
  %s7 = inlined_call_operand.vmem [shape: f32[32,128], index: 7, kind: output, shape index: {1}]
  %8 = xla_tuple %s6, %s7
  %s9 = sld [smem:[#allocation0]]
  $region42: #{transformer_decoder_forward.21} parent=0
    _
  %s11 = ssub.s32 1, %s9
  %s12 = scalar_select 0, %s11, %s9
  // Predicated region
  $region2: #{transformer_decoder_forward.21} parent=0 // pred_check
    _
  $region3: #{transformer_decoder_forward.21} parent=0 // pred_check_branch
    %14 = sbr.rel (0) target = $region5
  $region4: #{transformer_decoder_forward.21} parent=0 // pred_region
    _
  $region5: #{transformer_decoder_forward.21} parent=0 // pred_fallthru
    _
  // Predicated region
  $region6: #{transformer_decoder_forward.21} parent=0 // pred_check
    _
  $region7: #{transformer_decoder_forward.21} parent=0 // pred_check_branch
    %16 = sbr.rel (0) target = $region9
  $region8: #{transformer_decoder_forward.21} parent=0 // pred_region
    _
  $region9: #{transformer_decoder_forward.21} parent=0 // pred_fallthru
    _
  // Predicated region
  $region10: #{transformer_decoder_forward.21} parent=0 // pred_check
    _
  $region11: #{transformer_decoder_forward.21} parent=0 // pred_check_branch
    %18 = sbr.rel (0) target = $region13
  $region12: #{transformer_decoder_forward.21} parent=0 // pred_region
    _
  $region13: #{transformer_decoder_forward.21} parent=0 // pred_fallthru
    _
  // Predicated region
  $region14: #{transformer_decoder_forward.21} parent=0 // pred_check
    _
  $region15: #{transformer_decoder_forward.21} parent=0 // pred_check_branch
    %20 = sbr.rel (0) target = $region17
  $region16: #{transformer_decoder_forward.21} parent=0 // pred_region
    _
  $region17: #{transformer_decoder_forward.21} parent=0 // pred_fallthru
    _
  // Predicated region
  $region18: #{transformer_decoder_forward.21} parent=0 // pred_check
    _
  $region19: #{transformer_decoder_forward.21} parent=0 // pred_check_branch
    %22 = sbr.rel (0) target = $region21
  $region20: #{transformer_decoder_forward.21} parent=0 // pred_region
    _
  $region21: #{transformer_decoder_forward.21} parent=0 // pred_fallthru
    _
  // Predicated region
  $region22: #{transformer_decoder_forward.21} parent=0 // pred_check
    _
  $region23: #{transformer_decoder_forward.21} parent=0 // pred_check_branch
    %24 = sbr.rel (0) target = $region25
  $region24: #{transformer_decoder_forward.21} parent=0 // pred_region
    _
  $region25: #{transformer_decoder_forward.21} parent=0 // pred_fallthru
    _
  %v25 = vld [vmem:[%s0] sm:$0xff]
  %v26 = vld [vmem:[%s0 + $0x8] sm:$0xff]
  %v27 = vld [vmem:[%s0 + $0x10] sm:$0xff]
  %v28 = vld [vmem:[%s0 + $0x18] sm:$0xff]
  %v29 = vld [vmem:[%s1] sm:$0xff]
  %v30 = vld [vmem:[%s1 + $0x8] sm:$0xff]
  %v31 = vld [vmem:[%s1 + $0x10] sm:$0xff]
  %v32 = vld [vmem:[%s1 + $0x18] sm:$0xff]
  %v33 = vadd.f32 %v25, %v29
  %v34 = vadd.f32 %v26, %v30
  %v35 = vadd.f32 %v27, %v31
  %v36 = vadd.f32 %v28, %v32
  %v37 = vld [vmem:[%s2] sm:$0xff]
  %v38 = vld [vmem:[%s2 + $0x8] sm:$0xff]
  %v39 = vld [vmem:[%s2 + $0x10] sm:$0xff]
  %v40 = vld [vmem:[%s2 + $0x18] sm:$0xff]
  %v41 = vld [vmem:[%s2 + $0x20] sm:$0xff]
  %v42 = vld [vmem:[%s2 + $0x28] sm:$0xff]
  %v43 = vld [vmem:[%s2 + $0x30] sm:$0xff]
  %v44 = vld [vmem:[%s2 + $0x38] sm:$0xff]
  %v45 = vld [vmem:[%s2 + $0x40] sm:$0xff]
  %v46 = vld [vmem:[%s2 + $0x48] sm:$0xff]
  %v47 = vld [vmem:[%s2 + $0x50] sm:$0xff]
  %v48 = vld [vmem:[%s2 + $0x58] sm:$0xff]
  %v49 = vld [vmem:[%s2 + $0x60] sm:$0xff]
  %v50 = vld [vmem:[%s2 + $0x68] sm:$0xff]
  %v51 = vld [vmem:[%s2 + $0x70] sm:$0xff]
  %v52 = vld [vmem:[%s2 + $0x78] sm:$0xff]
  %v53 = vld [vmem:[%s3] sm:$0x1]
  %v55 = vlaneseq
  %v56 = vshrl.u32 %v55, 7
  %v57 = vsub.s32 0, %v56
  %v58 = vrot.slane %v53, %v57
  %60 = vmatprep.subr.mxu0 0.0
  %61 = vmatpush1.msra.mxu0 %v37
  %62 = vmatprep.subr.mxu0 0.0
  %63 = vmatpush1.msra.mxu0 %v38
  %64 = vmatprep.subr.mxu0 0.0
  %65 = vmatpush1.msra.mxu0 %v39
  %66 = vmatprep.subr.mxu0 0.0
  %67 = vmatpush1.msra.mxu0 %v40
  %68 = vmatprep.subr.mxu0 0.0
  %69 = vmatpush1.msra.mxu0 %v41
  %70 = vmatprep.subr.mxu0 0.0
  %71 = vmatpush1.msra.mxu0 %v42
  %72 = vmatprep.subr.mxu0 0.0
  %73 = vmatpush1.msra.mxu0 %v43
  %74 = vmatprep.subr.mxu0 0.0
  %75 = vmatpush1.msra.mxu0 %v44
  %76 = vmatprep.subr.mxu0 0.0
  %77 = vmatpush1.msra.mxu0 %v45
  %78 = vmatprep.subr.mxu0 0.0
  %79 = vmatpush1.msra.mxu0 %v46
  %80 = vmatprep.subr.mxu0 0.0
  %81 = vmatpush1.msra.mxu0 %v47
  %82 = vmatprep.subr.mxu0 0.0
  %83 = vmatpush1.msra.mxu0 %v48
  %84 = vmatprep.subr.mxu0 0.0
  %85 = vmatpush1.msra.mxu0 %v49
  %86 = vmatprep.subr.mxu0 0.0
  %87 = vmatpush1.msra.mxu0 %v50
  %88 = vmatprep.subr.mxu0 0.0
  %89 = vmatpush1.msra.mxu0 %v51
  %90 = vmatprep.subr.mxu0 0.0
  %91 = vmatpush1.msra.mxu0 %v52
  %92 = vmatprep.subr.mxu0 0.0
  %93 = vmatpush1.msra.mxu0 0.0
  %94 = vmatprep.subr.mxu0 0.0
  %95 = vmatpush1.msra.mxu0 0.0
  %96 = vmatprep.subr.mxu0 0.0
  %97 = vmatpush1.msra.mxu0 0.0
  %98 = vmatprep.subr.mxu0 0.0
  %99 = vmatpush1.msra.mxu0 0.0
  %100 = vmatprep.subr.mxu0 0.0
  %101 = vmatpush1.msra.mxu0 0.0
  %102 = vmatprep.subr.mxu0 0.0
  %103 = vmatpush1.msra.mxu0 0.0
  %104 = vmatprep.subr.mxu0 0.0
  %105 = vmatpush1.msra.mxu0 0.0
  %106 = vmatprep.subr.mxu0 0.0
  %107 = vmatpush1.msra.mxu0 0.0
  %108 = vmatprep.subr.mxu0 0.0
  %109 = vmatpush1.msra.mxu0 0.0
  %110 = vmatprep.subr.mxu0 0.0
  %111 = vmatpush1.msra.mxu0 0.0
  %112 = vmatprep.subr.mxu0 0.0
  %113 = vmatpush1.msra.mxu0 0.0
  %114 = vmatprep.subr.mxu0 0.0
  %115 = vmatpush1.msra.mxu0 0.0
  %116 = vmatprep.subr.mxu0 0.0
  %117 = vmatpush1.msra.mxu0 0.0
  %118 = vmatprep.subr.mxu0 0.0
  %119 = vmatpush1.msra.mxu0 0.0
  %120 = vmatprep.subr.mxu0 0.0
  %121 = vmatpush1.msra.mxu0 0.0
  %122 = vmatprep.subr.mxu0 0.0
  %123 = vmatpush1.msra.mxu0 0.0
  %124 = vmatprep.mubr.f32.mxu0 0.0
  %125 = vmatmul.mubr.f32.gmra.mrb[0].mxu0 %v33
  %v126 = vpop.f32.mrb[0].mxu0
  %v127 = vadd.f32 %v58, %v126
  %v128 = vpop.f32.mrb[0].mxu0
  %129 = vmatprep.mubr.f32.mxu0 0.0
  %130 = vmatmul.mubr.f32.gmra.mrb[0].mxu0 %v34
  %v131 = vpop.f32.mrb[0].mxu0
  %v132 = vadd.f32 %v58, %v131
  %v133 = vpop.f32.mrb[0].mxu0
  %134 = vmatprep.mubr.f32.mxu0 0.0
  %135 = vmatmul.mubr.f32.gmra.mrb[0].mxu0 %v35
  %v136 = vpop.f32.mrb[0].mxu0
  %v137 = vadd.f32 %v58, %v136
  %v138 = vpop.f32.mrb[0].mxu0
  %139 = vmatprep.mubr.f32.mxu0 0.0
  %140 = vmatmul.mubr.f32.gmra.mrb[0].mxu0 %v36
  %v141 = vpop.f32.mrb[0].mxu0
  %v142 = vadd.f32 %v58, %v141
  %v143 = vpop.f32.mrb[0].mxu0
  %144 = vdwg.mxu0
  %145 = vst [vmem:[%s6] sm:$0xff] %v127
  %146 = vst [vmem:[%s6 + $0x8] sm:$0xff] %v132
  %147 = vst [vmem:[%s6 + $0x10] sm:$0xff] %v137
  %148 = vst [vmem:[%s6 + $0x18] sm:$0xff] %v142
  %v149 = vld [vmem:[%s4] sm:$0xff]
  %v150 = vld [vmem:[%s4 + $0x8] sm:$0xff]
  %v151 = vld [vmem:[%s4 + $0x10] sm:$0xff]
  %v152 = vld [vmem:[%s4 + $0x18] sm:$0xff]
  %v153 = vld [vmem:[%s4 + $0x20] sm:$0xff]
  %v154 = vld [vmem:[%s4 + $0x28] sm:$0xff]
  %v155 = vld [vmem:[%s4 + $0x30] sm:$0xff]
  %v156 = vld [vmem:[%s4 + $0x38] sm:$0xff]
  %v157 = vld [vmem:[%s4 + $0x40] sm:$0xff]
  %v158 = vld [vmem:[%s4 + $0x48] sm:$0xff]
  %v159 = vld [vmem:[%s4 + $0x50] sm:$0xff]
  %v160 = vld [vmem:[%s4 + $0x58] sm:$0xff]
  %v161 = vld [vmem:[%s4 + $0x60] sm:$0xff]
  %v162 = vld [vmem:[%s4 + $0x68] sm:$0xff]
  %v163 = vld [vmem:[%s4 + $0x70] sm:$0xff]
  %v164 = vld [vmem:[%s4 + $0x78] sm:$0xff]
  %v165 = vld [vmem:[%s5] sm:$0x1]
  %v167 = vlaneseq
  %v168 = vshrl.u32 %v167, 7
  %v169 = vsub.s32 0, %v168
  %v170 = vrot.slane %v165, %v169
  %172 = vmatprep.subr.mxu0 0.0
  %173 = vmatpush1.msra.mxu0 %v149
  %174 = vmatprep.subr.mxu0 0.0
  %175 = vmatpush1.msra.mxu0 %v150
  %176 = vmatprep.subr.mxu0 0.0
  %177 = vmatpush1.msra.mxu0 %v151
  %178 = vmatprep.subr.mxu0 0.0
  %179 = vmatpush1.msra.mxu0 %v152
  %180 = vmatprep.subr.mxu0 0.0
  %181 = vmatpush1.msra.mxu0 %v153
  %182 = vmatprep.subr.mxu0 0.0
  %183 = vmatpush1.msra.mxu0 %v154
  %184 = vmatprep.subr.mxu0 0.0
  %185 = vmatpush1.msra.mxu0 %v155
  %186 = vmatprep.subr.mxu0 0.0
  %187 = vmatpush1.msra.mxu0 %v156
  %188 = vmatprep.subr.mxu0 0.0
  %189 = vmatpush1.msra.mxu0 %v157
  %190 = vmatprep.subr.mxu0 0.0
  %191 = vmatpush1.msra.mxu0 %v158
  %192 = vmatprep.subr.mxu0 0.0
  %193 = vmatpush1.msra.mxu0 %v159
  %194 = vmatprep.subr.mxu0 0.0
  %195 = vmatpush1.msra.mxu0 %v160
  %196 = vmatprep.subr.mxu0 0.0
  %197 = vmatpush1.msra.mxu0 %v161
  %198 = vmatprep.subr.mxu0 0.0
  %199 = vmatpush1.msra.mxu0 %v162
  %200 = vmatprep.subr.mxu0 0.0
  %201 = vmatpush1.msra.mxu0 %v163
  %202 = vmatprep.subr.mxu0 0.0
  %203 = vmatpush1.msra.mxu0 %v164
  %204 = vmatprep.subr.mxu0 0.0
  %205 = vmatpush1.msra.mxu0 0.0
  %206 = vmatprep.subr.mxu0 0.0
  %207 = vmatpush1.msra.mxu0 0.0
  %208 = vmatprep.subr.mxu0 0.0
  %209 = vmatpush1.msra.mxu0 0.0
  %210 = vmatprep.subr.mxu0 0.0
  %211 = vmatpush1.msra.mxu0 0.0
  %212 = vmatprep.subr.mxu0 0.0
  %213 = vmatpush1.msra.mxu0 0.0
  %214 = vmatprep.subr.mxu0 0.0
  %215 = vmatpush1.msra.mxu0 0.0
  %216 = vmatprep.subr.mxu0 0.0
  %217 = vmatpush1.msra.mxu0 0.0
  %218 = vmatprep.subr.mxu0 0.0
  %219 = vmatpush1.msra.mxu0 0.0
  %220 = vmatprep.subr.mxu0 0.0
  %221 = vmatpush1.msra.mxu0 0.0
  %222 = vmatprep.subr.mxu0 0.0
  %223 = vmatpush1.msra.mxu0 0.0
  %224 = vmatprep.subr.mxu0 0.0
  %225 = vmatpush1.msra.mxu0 0.0
  %226 = vmatprep.subr.mxu0 0.0
  %227 = vmatpush1.msra.mxu0 0.0
  %228 = vmatprep.subr.mxu0 0.0
  %229 = vmatpush1.msra.mxu0 0.0
  %230 = vmatprep.subr.mxu0 0.0
  %231 = vmatpush1.msra.mxu0 0.0
  %232 = vmatprep.subr.mxu0 0.0
  %233 = vmatpush1.msra.mxu0 0.0
  %234 = vmatprep.subr.mxu0 0.0
  %235 = vmatpush1.msra.mxu0 0.0
  %236 = vmatprep.mubr.f32.mxu0 0.0
  %237 = vmatmul.mubr.f32.gmra.mrb[0].mxu0 %v25
  %v238 = vpop.f32.mrb[0].mxu0
  %v239 = vadd.f32 %v170, %v238
  %v240 = vpop.f32.mrb[0].mxu0
  %241 = vmatprep.mubr.f32.mxu0 0.0
  %242 = vmatmul.mubr.f32.gmra.mrb[0].mxu0 %v26
  %v243 = vpop.f32.mrb[0].mxu0
  %v244 = vadd.f32 %v170, %v243
  %v245 = vpop.f32.mrb[0].mxu0
  %246 = vmatprep.mubr.f32.mxu0 0.0
  %247 = vmatmul.mubr.f32.gmra.mrb[0].mxu0 %v27
  %v248 = vpop.f32.mrb[0].mxu0
  %v249 = vadd.f32 %v170, %v248
  %v250 = vpop.f32.mrb[0].mxu0
  %251 = vmatprep.mubr.f32.mxu0 0.0
  %252 = vmatmul.mubr.f32.gmra.mrb[0].mxu0 %v28
  %v253 = vpop.f32.mrb[0].mxu0
  %v254 = vadd.f32 %v170, %v253
  %v255 = vpop.f32.mrb[0].mxu0
  %256 = vdwg.mxu0
  %257 = vst [vmem:[%s7] sm:$0xff] %v239
  %258 = vst [vmem:[%s7 + $0x8] sm:$0xff] %v244
  %259 = vst [vmem:[%s7 + $0x10] sm:$0xff] %v249
  %260 = vst [vmem:[%s7 + $0x18] sm:$0xff] %v254
  // Predicated region
  $region26: #{transformer_decoder_forward.21} parent=0 // pred_check
    _
  $region27: #{transformer_decoder_forward.21} parent=0 // pred_check_branch
    %262 = sbr.rel (0) target = $region29
  $region28: #{transformer_decoder_forward.21} parent=0 // pred_region
    _
  $region29: #{transformer_decoder_forward.21} parent=0 // pred_fallthru
    _
  // Predicated region
  $region30: #{transformer_decoder_forward.21} parent=0 // pred_check
    _
  $region31: #{transformer_decoder_forward.21} parent=0 // pred_check_branch
    %264 = sbr.rel (0) target = $region33
  $region32: #{transformer_decoder_forward.21} parent=0 // pred_region
    _
  $region33: #{transformer_decoder_forward.21} parent=0 // pred_fallthru
    _
  // Predicated region
  $region34: #{transformer_decoder_forward.21} parent=0 // pred_check
    _
  $region35: #{transformer_decoder_forward.21} parent=0 // pred_check_branch
    %266 = sbr.rel (0) target = $region37
  $region36: #{transformer_decoder_forward.21} parent=0 // pred_region
    _
  $region37: #{transformer_decoder_forward.21} parent=0 // pred_fallthru
    _
  // Predicated region
  $region38: #{transformer_decoder_forward.21} parent=0 // pred_check
    _
  $region39: #{transformer_decoder_forward.21} parent=0 // pred_check_branch
    %268 = sbr.rel (0) target = $region41
  $region40: #{transformer_decoder_forward.21} parent=0 // pred_region
    _
  $region41: #{transformer_decoder_forward.21} parent=0 // pred_fallthru
    _

// kernel: transformer_decoder_forward.25
$region0: #{transformer_decoder_forward.25}
  #allocation0 [shape = 'u32[]', space=smem, size = 0x4, offset = 0x4, fixed_abs, tag = 'smem constant byte address 0x4 - core index']
  #allocation1 [shape = 'u32[144,128]{1,0:T(1,128)}', space=vmem, size = 0x12000, scoped, tag = 'internal scratch']
  %s0 = inlined_call_operand.vmem [shape: f32[16,128], index: 0, kind: input, shape index: {}]
  %s1 = inlined_call_operand.vmem [shape: f32[16,128], index: 1, kind: input, shape index: {}]
  %s2 = inlined_call_operand.vmem [shape: f32[128,128], index: 2, kind: input, shape index: {}]
  %s3 = inlined_call_operand.vmem [shape: f32[1,128], index: 3, kind: input, shape index: {}]
  %s4 = inlined_call_operand.vmem [shape: f32[128,128], index: 4, kind: input, shape index: {}]
  %s5 = inlined_call_operand.vmem [shape: f32[1,128], index: 5, kind: input, shape index: {}]
  %s6 = inlined_call_operand.vmem [shape: f32[128,128], index: 6, kind: input, shape index: {}]
  %s7 = inlined_call_operand.vmem [shape: f32[1,128], index: 7, kind: input, shape index: {}]
  %s8 = inlined_call_operand.vmem [shape: f32[16,128], index: 8, kind: output, shape index: {0}]
  %s9 = inlined_call_operand.vmem [shape: f32[16,128], index: 9, kind: output, shape index: {1}]
  %s10 = inlined_call_operand.vmem [shape: f32[16,128], index: 10, kind: output, shape index: {2}]
  %11 = xla_tuple %s8, %s9, %s10
  %s12 = sld [smem:[#allocation0]]
  $region58: #{transformer_decoder_forward.25} parent=0
    _
  %s14 = ssub.s32 1, %s12
  %s15 = scalar_select 0, %s14, %s12
  // Predicated region
  $region2: #{transformer_decoder_forward.25} parent=0 // pred_check
    _
  $region3: #{transformer_decoder_forward.25} parent=0 // pred_check_branch
    %17 = sbr.rel (0) target = $region5
  $region4: #{transformer_decoder_forward.25} parent=0 // pred_region
    _
  $region5: #{transformer_decoder_forward.25} parent=0 // pred_fallthru
    _
  // Predicated region
  $region6: #{transformer_decoder_forward.25} parent=0 // pred_check
    _
  $region7: #{transformer_decoder_forward.25} parent=0 // pred_check_branch
    %19 = sbr.rel (0) target = $region9
  $region8: #{transformer_decoder_forward.25} parent=0 // pred_region
    _
  $region9: #{transformer_decoder_forward.25} parent=0 // pred_fallthru
    _
  // Predicated region
  $region10: #{transformer_decoder_forward.25} parent=0 // pred_check
    _
  $region11: #{transformer_decoder_forward.25} parent=0 // pred_check_branch
    %21 = sbr.rel (0) target = $region13
  $region12: #{transformer_decoder_forward.25} parent=0 // pred_region
    _
  $region13: #{transformer_decoder_forward.25} parent=0 // pred_fallthru
    _
  // Predicated region
  $region14: #{transformer_decoder_forward.25} parent=0 // pred_check
    _
  $region15: #{transformer_decoder_forward.25} parent=0 // pred_check_branch
    %23 = sbr.rel (0) target = $region17
  $region16: #{transformer_decoder_forward.25} parent=0 // pred_region
    _
  $region17: #{transformer_decoder_forward.25} parent=0 // pred_fallthru
    _
  // Predicated region
  $region18: #{transformer_decoder_forward.25} parent=0 // pred_check
    _
  $region19: #{transformer_decoder_forward.25} parent=0 // pred_check_branch
    %25 = sbr.rel (0) target = $region21
  $region20: #{transformer_decoder_forward.25} parent=0 // pred_region
    _
  $region21: #{transformer_decoder_forward.25} parent=0 // pred_fallthru
    _
  // Predicated region
  $region22: #{transformer_decoder_forward.25} parent=0 // pred_check
    _
  $region23: #{transformer_decoder_forward.25} parent=0 // pred_check_branch
    %27 = sbr.rel (0) target = $region25
  $region24: #{transformer_decoder_forward.25} parent=0 // pred_region
    _
  $region25: #{transformer_decoder_forward.25} parent=0 // pred_fallthru
    _
  // Predicated region
  $region26: #{transformer_decoder_forward.25} parent=0 // pred_check
    _
  $region27: #{transformer_decoder_forward.25} parent=0 // pred_check_branch
    %29 = sbr.rel (0) target = $region29
  $region28: #{transformer_decoder_forward.25} parent=0 // pred_region
    _
  $region29: #{transformer_decoder_forward.25} parent=0 // pred_fallthru
    _
  // Predicated region
  $region30: #{transformer_decoder_forward.25} parent=0 // pred_check
    _
  $region31: #{transformer_decoder_forward.25} parent=0 // pred_check_branch
    %31 = sbr.rel (0) target = $region33
  $region32: #{transformer_decoder_forward.25} parent=0 // pred_region
    _
  $region33: #{transformer_decoder_forward.25} parent=0 // pred_fallthru
    _
  %v32 = vld [vmem:[%s0] sm:$0xff]
  %v33 = vld [vmem:[%s0 + $0x8] sm:$0xff]
  %v34 = vld [vmem:[%s1] sm:$0xff]
  %v35 = vld [vmem:[%s1 + $0x8] sm:$0xff]
  %v36 = vadd.f32 %v32, %v34
  %v37 = vadd.f32 %v33, %v35
  %v38 = vld [vmem:[%s2] sm:$0xff]
  %v39 = vld [vmem:[%s2 + $0x8] sm:$0xff]
  %v40 = vld [vmem:[%s2 + $0x10] sm:$0xff]
  %v41 = vld [vmem:[%s2 + $0x18] sm:$0xff]
  %v42 = vld [vmem:[%s2 + $0x20] sm:$0xff]
  %v43 = vld [vmem:[%s2 + $0x28] sm:$0xff]
  %v44 = vld [vmem:[%s2 + $0x30] sm:$0xff]
  %v45 = vld [vmem:[%s2 + $0x38] sm:$0xff]
  %v46 = vld [vmem:[%s2 + $0x40] sm:$0xff]
  %v47 = vld [vmem:[%s2 + $0x48] sm:$0xff]
  %v48 = vld [vmem:[%s2 + $0x50] sm:$0xff]
  %v49 = vld [vmem:[%s2 + $0x58] sm:$0xff]
  %v50 = vld [vmem:[%s2 + $0x60] sm:$0xff]
  %v51 = vld [vmem:[%s2 + $0x68] sm:$0xff]
  %v52 = vld [vmem:[%s2 + $0x70] sm:$0xff]
  %v53 = vld [vmem:[%s2 + $0x78] sm:$0xff]
  %v54 = vld [vmem:[%s3] sm:$0x1]
  %v56 = vlaneseq
  %v57 = vshrl.u32 %v56, 7
  %v58 = vsub.s32 0, %v57
  %v59 = vrot.slane %v54, %v58
  %61 = vmatprep.subr.mxu0 0.0
  %62 = vmatpush1.msra.mxu0 %v38
  %63 = vmatprep.subr.mxu0 0.0
  %64 = vmatpush1.msra.mxu0 %v39
  %65 = vmatprep.subr.mxu0 0.0
  %66 = vmatpush1.msra.mxu0 %v40
  %67 = vmatprep.subr.mxu0 0.0
  %68 = vmatpush1.msra.mxu0 %v41
  %69 = vmatprep.subr.mxu0 0.0
  %70 = vmatpush1.msra.mxu0 %v42
  %71 = vmatprep.subr.mxu0 0.0
  %72 = vmatpush1.msra.mxu0 %v43
  %73 = vmatprep.subr.mxu0 0.0
  %74 = vmatpush1.msra.mxu0 %v44
  %75 = vmatprep.subr.mxu0 0.0
  %76 = vmatpush1.msra.mxu0 %v45
  %77 = vmatprep.subr.mxu0 0.0
  %78 = vmatpush1.msra.mxu0 %v46
  %79 = vmatprep.subr.mxu0 0.0
  %80 = vmatpush1.msra.mxu0 %v47
  %81 = vmatprep.subr.mxu0 0.0
  %82 = vmatpush1.msra.mxu0 %v48
  %83 = vmatprep.subr.mxu0 0.0
  %84 = vmatpush1.msra.mxu0 %v49
  %85 = vmatprep.subr.mxu0 0.0
  %86 = vmatpush1.msra.mxu0 %v50
  %87 = vmatprep.subr.mxu0 0.0
  %88 = vmatpush1.msra.mxu0 %v51
  %89 = vmatprep.subr.mxu0 0.0
  %90 = vmatpush1.msra.mxu0 %v52
  %91 = vmatprep.subr.mxu0 0.0
  %92 = vmatpush1.msra.mxu0 %v53
  %93 = vmatprep.subr.mxu0 0.0
  %94 = vmatpush1.msra.mxu0 0.0
  %95 = vmatprep.subr.mxu0 0.0
  %96 = vmatpush1.msra.mxu0 0.0
  %97 = vmatprep.subr.mxu0 0.0
  %98 = vmatpush1.msra.mxu0 0.0
  %99 = vmatprep.subr.mxu0 0.0
  %100 = vmatpush1.msra.mxu0 0.0
  %101 = vmatprep.subr.mxu0 0.0
  %102 = vmatpush1.msra.mxu0 0.0
  %103 = vmatprep.subr.mxu0 0.0
  %104 = vmatpush1.msra.mxu0 0.0
  %105 = vmatprep.subr.mxu0 0.0
  %106 = vmatpush1.msra.mxu0 0.0
  %107 = vmatprep.subr.mxu0 0.0
  %108 = vmatpush1.msra.mxu0 0.0
  %109 = vmatprep.subr.mxu0 0.0
  %110 = vmatpush1.msra.mxu0 0.0
  %111 = vmatprep.subr.mxu0 0.0
  %112 = vmatpush1.msra.mxu0 0.0
  %113 = vmatprep.subr.mxu0 0.0
  %114 = vmatpush1.msra.mxu0 0.0
  %115 = vmatprep.subr.mxu0 0.0
  %116 = vmatpush1.msra.mxu0 0.0
  %117 = vmatprep.subr.mxu0 0.0
  %118 = vmatpush1.msra.mxu0 0.0
  %119 = vmatprep.subr.mxu0 0.0
  %120 = vmatpush1.msra.mxu0 0.0
  %121 = vmatprep.subr.mxu0 0.0
  %122 = vmatpush1.msra.mxu0 0.0
  %123 = vmatprep.subr.mxu0 0.0
  %124 = vmatpush1.msra.mxu0 0.0
  %125 = vmatprep.mubr.f32.mxu0 0.0
  %126 = vmatmul.mubr.f32.gmra.mrb[0].mxu0 %v36
  %v127 = vpop.f32.mrb[0].mxu0
  %v128 = vadd.f32 %v59, %v127
  %v129 = vpop.f32.mrb[0].mxu0
  %130 = vmatprep.mubr.f32.mxu0 0.0
  %131 = vmatmul.mubr.f32.gmra.mrb[0].mxu0 %v37
  %v132 = vpop.f32.mrb[0].mxu0
  %v133 = vadd.f32 %v59, %v132
  %v134 = vpop.f32.mrb[0].mxu0
  %135 = vdwg.mxu0
  %136 = vst [vmem:[%s8] sm:$0xff] %v128
  %137 = vst [vmem:[%s8 + $0x8] sm:$0xff] %v133
  %v138 = vld [vmem:[%s4] sm:$0xff]
  %v139 = vld [vmem:[%s4 + $0x8] sm:$0xff]
  %v140 = vld [vmem:[%s4 + $0x10] sm:$0xff]
  %v141 = vld [vmem:[%s4 + $0x18] sm:$0xff]
  %v142 = vld [vmem:[%s4 + $0x20] sm:$0xff]
  %v143 = vld [vmem:[%s4 + $0x28] sm:$0xff]
  %v144 = vld [vmem:[%s4 + $0x30] sm:$0xff]
  %v145 = vld [vmem:[%s4 + $0x38] sm:$0xff]
  %v146 = vld [vmem:[%s4 + $0x40] sm:$0xff]
  %v147 = vld [vmem:[%s4 + $0x48] sm:$0xff]
  %v148 = vld [vmem:[%s4 + $0x50] sm:$0xff]
  %v149 = vld [vmem:[%s4 + $0x58] sm:$0xff]
  %v150 = vld [vmem:[%s4 + $0x60] sm:$0xff]
  %v151 = vld [vmem:[%s4 + $0x68] sm:$0xff]
  %v152 = vld [vmem:[%s4 + $0x70] sm:$0xff]
  %v153 = vld [vmem:[%s4 + $0x78] sm:$0xff]
  %v154 = vld [vmem:[%s5] sm:$0x1]
  %v156 = vlaneseq
  %v157 = vshrl.u32 %v156, 7
  %v158 = vsub.s32 0, %v157
  %v159 = vrot.slane %v154, %v158
  %161 = vmatprep.subr.mxu0 0.0
  %162 = vmatpush1.msra.mxu0 %v138
  %163 = vmatprep.subr.mxu0 0.0
  %164 = vmatpush1.msra.mxu0 %v139
  %165 = vmatprep.subr.mxu0 0.0
  %166 = vmatpush1.msra.mxu0 %v140
  %167 = vmatprep.subr.mxu0 0.0
  %168 = vmatpush1.msra.mxu0 %v141
  %169 = vmatprep.subr.mxu0 0.0
  %170 = vmatpush1.msra.mxu0 %v142
  %171 = vmatprep.subr.mxu0 0.0
  %172 = vmatpush1.msra.mxu0 %v143
  %173 = vmatprep.subr.mxu0 0.0
  %174 = vmatpush1.msra.mxu0 %v144
  %175 = vmatprep.subr.mxu0 0.0
  %176 = vmatpush1.msra.mxu0 %v145
  %177 = vmatprep.subr.mxu0 0.0
  %178 = vmatpush1.msra.mxu0 %v146
  %179 = vmatprep.subr.mxu0 0.0
  %180 = vmatpush1.msra.mxu0 %v147
  %181 = vmatprep.subr.mxu0 0.0
  %182 = vmatpush1.msra.mxu0 %v148
  %183 = vmatprep.subr.mxu0 0.0
  %184 = vmatpush1.msra.mxu0 %v149
  %185 = vmatprep.subr.mxu0 0.0
  %186 = vmatpush1.msra.mxu0 %v150
  %187 = vmatprep.subr.mxu0 0.0
  %188 = vmatpush1.msra.mxu0 %v151
  %189 = vmatprep.subr.mxu0 0.0
  %190 = vmatpush1.msra.mxu0 %v152
  %191 = vmatprep.subr.mxu0 0.0
  %192 = vmatpush1.msra.mxu0 %v153
  %193 = vmatprep.subr.mxu0 0.0
  %194 = vmatpush1.msra.mxu0 0.0
  %195 = vmatprep.subr.mxu0 0.0
  %196 = vmatpush1.msra.mxu0 0.0
  %197 = vmatprep.subr.mxu0 0.0
  %198 = vmatpush1.msra.mxu0 0.0
  %199 = vmatprep.subr.mxu0 0.0
  %200 = vmatpush1.msra.mxu0 0.0
  %201 = vmatprep.subr.mxu0 0.0
  %202 = vmatpush1.msra.mxu0 0.0
  %203 = vmatprep.subr.mxu0 0.0
  %204 = vmatpush1.msra.mxu0 0.0
  %205 = vmatprep.subr.mxu0 0.0
  %206 = vmatpush1.msra.mxu0 0.0
  %207 = vmatprep.subr.mxu0 0.0
  %208 = vmatpush1.msra.mxu0 0.0
  %209 = vmatprep.subr.mxu0 0.0
  %210 = vmatpush1.msra.mxu0 0.0
  %211 = vmatprep.subr.mxu0 0.0
  %212 = vmatpush1.msra.mxu0 0.0
  %213 = vmatprep.subr.mxu0 0.0
  %214 = vmatpush1.msra.mxu0 0.0
  %215 = vmatprep.subr.mxu0 0.0
  %216 = vmatpush1.msra.mxu0 0.0
  %217 = vmatprep.subr.mxu0 0.0
  %218 = vmatpush1.msra.mxu0 0.0
  %219 = vmatprep.subr.mxu0 0.0
  %220 = vmatpush1.msra.mxu0 0.0
  %221 = vmatprep.subr.mxu0 0.0
  %222 = vmatpush1.msra.mxu0 0.0
  %223 = vmatprep.subr.mxu0 0.0
  %224 = vmatpush1.msra.mxu0 0.0
  %225 = vmatprep.mubr.f32.mxu0 0.0
  %226 = vmatmul.mubr.f32.gmra.mrb[0].mxu0 %v36
  %v227 = vpop.f32.mrb[0].mxu0
  %v228 = vadd.f32 %v159, %v227
  %v229 = vpop.f32.mrb[0].mxu0
  %230 = vmatprep.mubr.f32.mxu0 0.0
  %231 = vmatmul.mubr.f32.gmra.mrb[0].mxu0 %v37
  %v232 = vpop.f32.mrb[0].mxu0
  %v233 = vadd.f32 %v159, %v232
  %v234 = vpop.f32.mrb[0].mxu0
  %235 = vdwg.mxu0
  %236 = vst [vmem:[%s9] sm:$0xff] %v228
  %237 = vst [vmem:[%s9 + $0x8] sm:$0xff] %v233
  %v238 = vld [vmem:[%s6] sm:$0xff]
  %v239 = vld [vmem:[%s6 + $0x8] sm:$0xff]
  %v240 = vld [vmem:[%s6 + $0x10] sm:$0xff]
  %v241 = vld [vmem:[%s6 + $0x18] sm:$0xff]
  %v242 = vld [vmem:[%s6 + $0x20] sm:$0xff]
  %v243 = vld [vmem:[%s6 + $0x28] sm:$0xff]
  %v244 = vld [vmem:[%s6 + $0x30] sm:$0xff]
  %v245 = vld [vmem:[%s6 + $0x38] sm:$0xff]
  %v246 = vld [vmem:[%s6 + $0x40] sm:$0xff]
  %v247 = vld [vmem:[%s6 + $0x48] sm:$0xff]
  %v248 = vld [vmem:[%s6 + $0x50] sm:$0xff]
  %v249 = vld [vmem:[%s6 + $0x58] sm:$0xff]
  %v250 = vld [vmem:[%s6 + $0x60] sm:$0xff]
  %v251 = vld [vmem:[%s6 + $0x68] sm:$0xff]
  %v252 = vld [vmem:[%s6 + $0x70] sm:$0xff]
  %v253 = vld [vmem:[%s6 + $0x78] sm:$0xff]
  %v254 = vld [vmem:[%s7] sm:$0x1]
  %v256 = vlaneseq
  %v257 = vshrl.u32 %v256, 7
  %v258 = vsub.s32 0, %v257
  %v259 = vrot.slane %v254, %v258
  %261 = vmatprep.subr.mxu0 0.0
  %262 = vmatpush1.msra.mxu0 %v238
  %263 = vmatprep.subr.mxu0 0.0
  %264 = vmatpush1.msra.mxu0 %v239
  %265 = vmatprep.subr.mxu0 0.0
  %266 = vmatpush1.msra.mxu0 %v240
  %267 = vmatprep.subr.mxu0 0.0
  %268 = vmatpush1.msra.mxu0 %v241
  %269 = vmatprep.subr.mxu0 0.0
  %270 = vmatpush1.msra.mxu0 %v242
  %271 = vmatprep.subr.mxu0 0.0
  %272 = vmatpush1.msra.mxu0 %v243
  %273 = vmatprep.subr.mxu0 0.0
  %274 = vmatpush1.msra.mxu0 %v244
  %275 = vmatprep.subr.mxu0 0.0
  %276 = vmatpush1.msra.mxu0 %v245
  %277 = vmatprep.subr.mxu0 0.0
  %278 = vmatpush1.msra.mxu0 %v246
  %279 = vmatprep.subr.mxu0 0.0
  %280 = vmatpush1.msra.mxu0 %v247
  %281 = vmatprep.subr.mxu0 0.0
  %282 = vmatpush1.msra.mxu0 %v248
  %283 = vmatprep.subr.mxu0 0.0
  %284 = vmatpush1.msra.mxu0 %v249
  %285 = vmatprep.subr.mxu0 0.0
  %286 = vmatpush1.msra.mxu0 %v250
  %287 = vmatprep.subr.mxu0 0.0
  %288 = vmatpush1.msra.mxu0 %v251
  %289 = vmatprep.subr.mxu0 0.0
  %290 = vmatpush1.msra.mxu0 %v252
  %291 = vmatprep.subr.mxu0 0.0
  %292 = vmatpush1.msra.mxu0 %v253
  %293 = vmatprep.subr.mxu0 0.0
  %294 = vmatpush1.msra.mxu0 0.0
  %295 = vmatprep.subr.mxu0 0.0
  %296 = vmatpush1.msra.mxu0 0.0
  %297 = vmatprep.subr.mxu0 0.0
  %298 = vmatpush1.msra.mxu0 0.0
  %299 = vmatprep.subr.mxu0 0.0
  %300 = vmatpush1.msra.mxu0 0.0
  %301 = vmatprep.subr.mxu0 0.0
  %302 = vmatpush1.msra.mxu0 0.0
  %303 = vmatprep.subr.mxu0 0.0
  %304 = vmatpush1.msra.mxu0 0.0
  %305 = vmatprep.subr.mxu0 0.0
  %306 = vmatpush1.msra.mxu0 0.0
  %307 = vmatprep.subr.mxu0 0.0
  %308 = vmatpush1.msra.mxu0 0.0
  %309 = vmatprep.subr.mxu0 0.0
  %310 = vmatpush1.msra.mxu0 0.0
  %311 = vmatprep.subr.mxu0 0.0
  %312 = vmatpush1.msra.mxu0 0.0
  %313 = vmatprep.subr.mxu0 0.0
  %314 = vmatpush1.msra.mxu0 0.0
  %315 = vmatprep.subr.mxu0 0.0
  %316 = vmatpush1.msra.mxu0 0.0
  %317 = vmatprep.subr.mxu0 0.0
  %318 = vmatpush1.msra.mxu0 0.0
  %319 = vmatprep.subr.mxu0 0.0
  %320 = vmatpush1.msra.mxu0 0.0
  %321 = vmatprep.subr.mxu0 0.0
  %322 = vmatpush1.msra.mxu0 0.0
  %323 = vmatprep.subr.mxu0 0.0
  %324 = vmatpush1.msra.mxu0 0.0
  %325 = vmatprep.mubr.f32.mxu0 0.0
  %326 = vmatmul.mubr.f32.gmra.mrb[0].mxu0 %v32
  %v327 = vpop.f32.mrb[0].mxu0
  %v328 = vadd.f32 %v259, %v327
  %v329 = vpop.f32.mrb[0].mxu0
  %330 = vmatprep.mubr.f32.mxu0 0.0
  %331 = vmatmul.mubr.f32.gmra.mrb[0].mxu0 %v33
  %v332 = vpop.f32.mrb[0].mxu0
  %v333 = vadd.f32 %v259, %v332
  %v334 = vpop.f32.mrb[0].mxu0
  %335 = vdwg.mxu0
  %336 = vst [vmem:[%s10] sm:$0xff] %v328
  %337 = vst [vmem:[%s10 + $0x8] sm:$0xff] %v333
  // Predicated region
  $region34: #{transformer_decoder_forward.25} parent=0 // pred_check
    _
  $region35: #{transformer_decoder_forward.25} parent=0 // pred_check_branch
    %339 = sbr.rel (0) target = $region37
  $region36: #{transformer_decoder_forward.25} parent=0 // pred_region
    _
  $region37: #{transformer_decoder_forward.25} parent=0 // pred_fallthru
    _
  // Predicated region
  $region38: #{transformer_decoder_forward.25} parent=0 // pred_check
    _
  $region39: #{transformer_decoder_forward.25} parent=0 // pred_check_branch
    %341 = sbr.rel (0) target = $region41
  $region40: #{transformer_decoder_forward.25} parent=0 // pred_region
    _
  $region41: #{transformer_decoder_forward.25} parent=0 // pred_fallthru
    _
  // Predicated region
  $region42: #{transformer_decoder_forward.25} parent=0 // pred_check
    _
  $region43: #{transformer_decoder_forward.25} parent=0 // pred_check_branch
    %343 = sbr.rel (0) target = $region45
  $region44: #{transformer_decoder_forward.25} parent=0 // pred_region
    _
  $region45: #{transformer_decoder_forward.25} parent=0 // pred_fallthru
    _
  // Predicated region
  $region46: #{transformer_decoder_forward.25} parent=0 // pred_check
    _
  $region47: #{transformer_decoder_forward.25} parent=0 // pred_check_branch
    %345 = sbr.rel (0) target = $region49
  $region48: #{transformer_decoder_forward.25} parent=0 // pred_region
    _
  $region49: #{transformer_decoder_forward.25} parent=0 // pred_fallthru
    _
  // Predicated region
  $region50: #{transformer_decoder_forward.25} parent=0 // pred_check
    _
  $region51: #{transformer_decoder_forward.25} parent=0 // pred_check_branch
    %347 = sbr.rel (0) target = $region53
  $region52: #{transformer_decoder_forward.25} parent=0 // pred_region
    _
  $region53: #{transformer_decoder_forward.25} parent=0 // pred_fallthru
    _
  // Predicated region
  $region54: #{transformer_decoder_forward.25} parent=0 // pred_check
    _
  $region55: #{transformer_decoder_forward.25} parent=0 // pred_check_branch
    %349 = sbr.rel (0) target = $region57
  $region56: #{transformer_decoder_forward.25} parent=0 // pred_region
    _
  $region57: #{transformer_decoder_forward.25} parent=0 // pred_fallthru
    _

// kernel: transformer_decoder_forward.22
$region0: #{transformer_decoder_forward.22}
  #allocation0 [shape = 'u32[]', space=smem, size = 0x4, offset = 0x4, fixed_abs, tag = 'smem constant byte address 0x4 - core index']
  #allocation1 [shape = 'u32[144,128]{1,0:T(1,128)}', space=vmem, size = 0x12000, scoped, tag = 'internal scratch']
  %s0 = inlined_call_operand.vmem [shape: f32[2,4,8,32], index: 0, kind: input, shape index: {}]
  %s1 = inlined_call_operand.vmem [shape: f32[2,4,16,32], index: 1, kind: input, shape index: {}]
  %s2 = inlined_call_operand.vmem [shape: f32[2,4,16,32], index: 2, kind: input, shape index: {}]
  %s3 = inlined_call_operand.vmem [shape: f32[2,4,8,32], index: 3, kind: output, shape index: {}]
  %s4 = sld [smem:[#allocation0]]
  $region45: #{transformer_decoder_forward.22} parent=0
    _
  %s6 = ssub.s32 1, %s4
  %s7 = scalar_select 0, %s6, %s4
  loop: start=0, step=1, limit=4
  $region2: #{transformer_decoder_forward.22} parent=0 // loop_pre_header
    _
  $region3: #{transformer_decoder_forward.22} parent=0 // loop_header
    %s9 = sphi 0, %s13
    %p10 = scmp.ge.s32.totalorder %s9, 4
    %s19 = sphi 0, %s21
    %s22 = sphi 0, %s19
    %s23 = sphi 0, %s22
    %s39 = sphi 0, %s23
    %s45 = sphi 0, %s47
    %s48 = sphi 0, %s45
    %s49 = sphi 0, %s48
    %s65 = sphi 0, %s49
    %s71 = sphi 0, %s73
    %s74 = sphi 0, %s71
    %s75 = sphi 0, %s74
    %s91 = sphi 0, %s75
    %s97 = sphi 0, %s99
    %s100 = sphi 0, %s97
    %s101 = sphi 0, %s100
    %s117 = sphi 0, %s101
  $region4: #{transformer_decoder_forward.22} parent=0 // loop_header_branch
    %12 = sbr.rel (%p10) target = $region8
  $region5: #{transformer_decoder_forward.22} parent=0 // loop_body
    %s14 = ssub.s32 %s9, 1
    %s15 = ssub.s32 %s9, 2
    %s16 = sadd.s32 %s9, 1
    %s17 = ssub.s32 %s9, %s16
    %p18 = scmp.eq.s32.totalorder %s17, 0
    %s20 = sadd.s32 %s19, 1
    %s21 = scalar_select %p18, %s19, %s20
    %p24 = pneg %p18
    %p25 = scmp.eq.s32.totalorder %s9, 1
    %p26 = por %p24, %p25
    %p27 = scmp.ne.s32.totalorder %s19, %s22
    %p28 = scmp.eq.s32.totalorder %s9, 0
    %p29 = por %p27, %p28
    %p30 = scmp.ne.s32.totalorder %s19, %s22
    %p31 = scmp.eq.s32.totalorder %s14, 1
    %p32 = por %p30, %p31
    %p33 = scmp.ne.s32.totalorder %s22, %s23
    %p34 = scmp.eq.s32.totalorder %s14, 0
    %p35 = por %p33, %p34
    %p36 = scmp.ne.s32.totalorder %s22, %s23
    %p37 = scmp.eq.s32.totalorder %s15, 1
    %p38 = por %p36, %p37
    %p40 = scmp.ne.s32.totalorder %s23, %s39
    %p41 = scmp.eq.s32.totalorder %s15, 0
    %p42 = por %p40, %p41
    %s43 = ssub.s32 %s9, %s16
    %p44 = scmp.eq.s32.totalorder %s43, 0
    %s46 = sadd.s32 %s45, 1
    %s47 = scalar_select %p44, %s45, %s46
    %p50 = pneg %p44
    %p51 = scmp.eq.s32.totalorder %s9, 1
    %p52 = por %p50, %p51
    %p53 = scmp.ne.s32.totalorder %s45, %s48
    %p54 = scmp.eq.s32.totalorder %s9, 0
    %p55 = por %p53, %p54
    %p56 = scmp.ne.s32.totalorder %s45, %s48
    %p57 = scmp.eq.s32.totalorder %s14, 1
    %p58 = por %p56, %p57
    %p59 = scmp.ne.s32.totalorder %s48, %s49
    %p60 = scmp.eq.s32.totalorder %s14, 0
    %p61 = por %p59, %p60
    %p62 = scmp.ne.s32.totalorder %s48, %s49
    %p63 = scmp.eq.s32.totalorder %s15, 1
    %p64 = por %p62, %p63
    %p66 = scmp.ne.s32.totalorder %s49, %s65
    %p67 = scmp.eq.s32.totalorder %s15, 0
    %p68 = por %p66, %p67
    %s69 = ssub.s32 %s9, %s16
    %p70 = scmp.eq.s32.totalorder %s69, 0
    %s72 = sadd.s32 %s71, 1
    %s73 = scalar_select %p70, %s71, %s72
    %p76 = pneg %p70
    %p77 = scmp.eq.s32.totalorder %s9, 1
    %p78 = por %p76, %p77
    %p79 = scmp.ne.s32.totalorder %s71, %s74
    %p80 = scmp.eq.s32.totalorder %s9, 0
    %p81 = por %p79, %p80
    %p82 = scmp.ne.s32.totalorder %s71, %s74
    %p83 = scmp.eq.s32.totalorder %s14, 1
    %p84 = por %p82, %p83
    %p85 = scmp.ne.s32.totalorder %s74, %s75
    %p86 = scmp.eq.s32.totalorder %s14, 0
    %p87 = por %p85, %p86
    %p88 = scmp.ne.s32.totalorder %s74, %s75
    %p89 = scmp.eq.s32.totalorder %s15, 1
    %p90 = por %p88, %p89
    %p92 = scmp.ne.s32.totalorder %s75, %s91
    %p93 = scmp.eq.s32.totalorder %s15, 0
    %p94 = por %p92, %p93
    %s95 = ssub.s32 %s9, %s16
    %p96 = scmp.eq.s32.totalorder %s95, 0
    %s98 = sadd.s32 %s97, 1
    %s99 = scalar_select %p96, %s97, %s98
    %p102 = pneg %p96
    %p103 = scmp.eq.s32.totalorder %s9, 1
    %p104 = por %p102, %p103
    %p105 = scmp.ne.s32.totalorder %s97, %s100
    %p106 = scmp.eq.s32.totalorder %s9, 0
    %p107 = por %p105, %p106
    %p108 = scmp.ne.s32.totalorder %s97, %s100
    %p109 = scmp.eq.s32.totalorder %s14, 1
    %p110 = por %p108, %p109
    %p111 = scmp.ne.s32.totalorder %s100, %s101
    %p112 = scmp.eq.s32.totalorder %s14, 0
    %p113 = por %p111, %p112
    %p114 = scmp.ne.s32.totalorder %s100, %s101
    %p115 = scmp.eq.s32.totalorder %s15, 1
    %p116 = por %p114, %p115
    %p118 = scmp.ne.s32.totalorder %s101, %s117
    %p119 = scmp.eq.s32.totalorder %s15, 0
    %p120 = por %p118, %p119
    %p121 = scmp.le.s32.totalorder 1, %s9
    %p122 = scmp.lt.s32.totalorder %s9, 3
    %p123 = pnand %p121, %p122
    %p124 = pneg %p123
    // Predicated region
    $region9: #{transformer_decoder_forward.22} parent=5 // pred_check
      _
    $region10: #{transformer_decoder_forward.22} parent=5 // pred_check_branch
      %126 = sbr.rel (%p123) target = $region12
    $region11: #{transformer_decoder_forward.22} parent=5 // pred_region
      %s127 = ssub.s32 %s9, 1
    $region12: #{transformer_decoder_forward.22} parent=5 // pred_fallthru
      _
    %p128 = scmp.lt.s32.totalorder %s9, 2
    // Predicated region
    $region13: #{transformer_decoder_forward.22} parent=5 // pred_check
      %p129 = pneg %p128
    $region14: #{transformer_decoder_forward.22} parent=5 // pred_check_branch
      %131 = sbr.rel (%p129) target = $region16
    $region15: #{transformer_decoder_forward.22} parent=5 // pred_region
      // Predicated region
      $region17: #{transformer_decoder_forward.22} parent=15 // pred_check
        %p132 = pneg %p29
      $region18: #{transformer_decoder_forward.22} parent=15 // pred_check_branch
        %134 = sbr.rel (%p132) target = $region20
      $region19: #{transformer_decoder_forward.22} parent=15 // pred_region
        %p135 = scmp.lt.s32.totalorder %s9, 1
        %s136 = scalar_select %p135, %s9, 1
        %s137 = smul.addr %s136, 4
        %s138 = smul.addr %s137, 8
        %s139 = scalar_lea.vmem %s0, %s138
      $region20: #{transformer_decoder_forward.22} parent=15 // pred_fallthru
        _
      // Predicated region
      $region21: #{transformer_decoder_forward.22} parent=15 // pred_check
        %p140 = pneg %p55
      $region22: #{transformer_decoder_forward.22} parent=15 // pred_check_branch
        %142 = sbr.rel (%p140) target = $region24
      $region23: #{transformer_decoder_forward.22} parent=15 // pred_region
        %p143 = scmp.lt.s32.totalorder %s9, 1
        %s144 = scalar_select %p143, %s9, 1
        %s145 = smul.addr %s144, 8
        %s146 = smul.addr %s145, 8
        %s147 = scalar_lea.vmem %s1, %s146
      $region24: #{transformer_decoder_forward.22} parent=15 // pred_fallthru
        _
      // Predicated region
      $region25: #{transformer_decoder_forward.22} parent=15 // pred_check
        %p148 = pneg %p81
      $region26: #{transformer_decoder_forward.22} parent=15 // pred_check_branch
        %150 = sbr.rel (%p148) target = $region28
      $region27: #{transformer_decoder_forward.22} parent=15 // pred_region
        %p151 = scmp.lt.s32.totalorder %s9, 1
        %s152 = scalar_select %p151, %s9, 1
        %s153 = smul.addr %s152, 8
        %s154 = smul.addr %s153, 8
        %s155 = scalar_lea.vmem %s2, %s154
      $region28: #{transformer_decoder_forward.22} parent=15 // pred_fallthru
        _
    $region16: #{transformer_decoder_forward.22} parent=5 // pred_fallthru
      _
    %p156 = scmp.le.s32.totalorder 1, %s9
    %p157 = scmp.lt.s32.totalorder %s9, 3
    %p158 = pnand %p156, %p157
    %p159 = pneg %p158
    // Predicated region
    $region29: #{transformer_decoder_forward.22} parent=5 // pred_check
      _
    $region30: #{transformer_decoder_forward.22} parent=5 // pred_check_branch
      %161 = sbr.rel (%p158) target = $region32
    $region31: #{transformer_decoder_forward.22} parent=5 // pred_region
      %s162 = ssub.s32 %s9, 1
      %p163 = scmp.lt.s32.totalorder %s14, 1
      %s164 = scalar_select %p163, %s14, 1
      %s165 = smul.addr %s164, 4
      %s166 = smul.addr %s165, 8
      %s167 = scalar_lea.vmem %s0, %s166
      %p168 = pneg %p35
      %p169 = pneg %p32
      %p170 = scmp.lt.s32.totalorder %s14, 1
      %s171 = scalar_select %p170, %s14, 1
      %s172 = smul.addr %s171, 8
      %s173 = smul.addr %s172, 8
      %s174 = scalar_lea.vmem %s1, %s173
      %p175 = pneg %p61
      %p176 = pneg %p58
      %p177 = scmp.lt.s32.totalorder %s14, 1
      %s178 = scalar_select %p177, %s14, 1
      %s179 = smul.addr %s178, 8
      %s180 = smul.addr %s179, 8
      %s181 = scalar_lea.vmem %s2, %s180
      %p182 = pneg %p87
      %p183 = pneg %p84
      %p184 = pneg %p113
      %p185 = pneg %p110
      %p186 = scmp.lt.s32.totalorder %s14, 1
      %s187 = scalar_select %p186, %s14, 1
      %s188 = smul.addr %s187, 4
      %s189 = smul.addr %s188, 8
      %s190 = scalar_lea.vmem %s3, %s189
      %p191 = scmp.lt.s32.totalorder %s14, 1
      %s192 = scalar_select %p191, %s14, 1
      %s193 = smul.addr %s192, 4
      %s194 = smul.addr %s193, 8
      %s195 = scalar_lea.vmem %s0, %s194
      %p196 = scmp.lt.s32.totalorder %s14, 1
      %s197 = scalar_select %p196, %s14, 1
      %s198 = smul.addr %s197, 8
      %s199 = smul.addr %s198, 8
      %s200 = scalar_lea.vmem %s1, %s199
      %p201 = scmp.lt.s32.totalorder %s14, 1
      %s202 = scalar_select %p201, %s14, 1
      %s203 = smul.addr %s202, 8
      %s204 = smul.addr %s203, 8
      %s205 = scalar_lea.vmem %s2, %s204
      %p206 = scmp.lt.s32.totalorder %s14, 1
      %s207 = scalar_select %p206, %s14, 1
      %s208 = smul.addr %s207, 4
      %s209 = smul.addr %s208, 8
      %s210 = scalar_lea.vmem %s3, %s209
      %v211 = vld [vmem:[%s195] sm:$0xff]
      %v212 = vld [vmem:[%s195 + $0x8] sm:$0xff]
      %v213 = vld [vmem:[%s195 + $0x10] sm:$0xff]
      %v214 = vld [vmem:[%s195 + $0x18] sm:$0xff]
      %v215 = vmul.f32 %v211, 0.17677669
      %v216 = vmul.f32 %v212, 0.17677669
      %v217 = vmul.f32 %v213, 0.17677669
      %v218 = vmul.f32 %v214, 0.17677669
      %v219 = vld [vmem:[%s200] sm:$0xff]
      %v220 = vld [vmem:[%s200 + $0x8] sm:$0xff]
      %v221 = vld [vmem:[%s200 + $0x10] sm:$0xff]
      %v222 = vld [vmem:[%s200 + $0x18] sm:$0xff]
      %v223 = vld [vmem:[%s200 + $0x20] sm:$0xff]
      %v224 = vld [vmem:[%s200 + $0x28] sm:$0xff]
      %v225 = vld [vmem:[%s200 + $0x30] sm:$0xff]
      %v226 = vld [vmem:[%s200 + $0x38] sm:$0xff]
      %v227 = vld [vmem:[%s205] sm:$0xff]
      %v228 = vld [vmem:[%s205 + $0x8] sm:$0xff]
      %v229 = vld [vmem:[%s205 + $0x10] sm:$0xff]
      %v230 = vld [vmem:[%s205 + $0x18] sm:$0xff]
      %v231 = vld [vmem:[%s205 + $0x20] sm:$0xff]
      %v232 = vld [vmem:[%s205 + $0x28] sm:$0xff]
      %v233 = vld [vmem:[%s205 + $0x30] sm:$0xff]
      %v234 = vld [vmem:[%s205 + $0x38] sm:$0xff]
      %vm235 = vcmask 261120
      %v237 = vsel %vm235, %v215, 0
      %v240 = vsel %vm235, %v219, 0
      %v243 = vsel %vm235, %v220, 0
      %245 = vmatprep.subr.mxu0 0.0
      %246 = vmatpush1.xpose.msra.mxu0 %v240
      %247 = vmatprep.subr.mxu0 0.0
      %248 = vmatpush1.xpose.msra.mxu0 %v243
      %249 = vmatprep.subr.mxu0 0.0
      %250 = vmatpush1.xpose.msra.mxu0 0.0
      %251 = vmatprep.subr.mxu0 0.0
      %252 = vmatpush1.xpose.msra.mxu0 0.0
      %253 = vmatprep.subr.mxu0 0.0
      %254 = vmatpush1.xpose.msra.mxu0 0.0
      %255 = vmatprep.subr.mxu0 0.0
      %256 = vmatpush1.xpose.msra.mxu0 0.0
      %257 = vmatprep.subr.mxu0 0.0
      %258 = vmatpush1.xpose.msra.mxu0 0.0
      %259 = vmatprep.subr.mxu0 0.0
      %260 = vmatpush1.xpose.msra.mxu0 0.0
      %261 = vmatprep.subr.mxu0 0.0
      %262 = vmatpush1.xpose.msra.mxu0 0.0
      %263 = vmatprep.subr.mxu0 0.0
      %264 = vmatpush1.xpose.msra.mxu0 0.0
      %265 = vmatprep.subr.mxu0 0.0
      %266 = vmatpush1.xpose.msra.mxu0 0.0
      %267 = vmatprep.subr.mxu0 0.0
      %268 = vmatpush1.xpose.msra.mxu0 0.0
      %269 = vmatprep.subr.mxu0 0.0
      %270 = vmatpush1.xpose.msra.mxu0 0.0
      %271 = vmatprep.subr.mxu0 0.0
      %272 = vmatpush1.xpose.msra.mxu0 0.0
      %273 = vmatprep.subr.mxu0 0.0
      %274 = vmatpush1.xpose.msra.mxu0 0.0
      %275 = vmatprep.subr.mxu0 0.0
      %276 = vmatpush1.xpose.msra.mxu0 0.0
      %277 = vmatprep.subr.mxu0 0.0
      %278 = vmatpush1.xpose.msra.mxu0 0.0
      %279 = vmatprep.subr.mxu0 0.0
      %280 = vmatpush1.xpose.msra.mxu0 0.0
      %281 = vmatprep.subr.mxu0 0.0
      %282 = vmatpush1.xpose.msra.mxu0 0.0
      %283 = vmatprep.subr.mxu0 0.0
      %284 = vmatpush1.xpose.msra.mxu0 0.0
      %285 = vmatprep.subr.mxu0 0.0
      %286 = vmatpush1.xpose.msra.mxu0 0.0
      %287 = vmatprep.subr.mxu0 0.0
      %288 = vmatpush1.xpose.msra.mxu0 0.0
      %289 = vmatprep.subr.mxu0 0.0
      %290 = vmatpush1.xpose.msra.mxu0 0.0
      %291 = vmatprep.subr.mxu0 0.0
      %292 = vmatpush1.xpose.msra.mxu0 0.0
      %293 = vmatprep.subr.mxu0 0.0
      %294 = vmatpush1.xpose.msra.mxu0 0.0
      %295 = vmatprep.subr.mxu0 0.0
      %296 = vmatpush1.xpose.msra.mxu0 0.0
      %297 = vmatprep.subr.mxu0 0.0
      %298 = vmatpush1.xpose.msra.mxu0 0.0
      %299 = vmatprep.subr.mxu0 0.0
      %300 = vmatpush1.xpose.msra.mxu0 0.0
      %301 = vmatprep.subr.mxu0 0.0
      %302 = vmatpush1.xpose.msra.mxu0 0.0
      %303 = vmatprep.subr.mxu0 0.0
      %304 = vmatpush1.xpose.msra.mxu0 0.0
      %305 = vmatprep.subr.mxu0 0.0
      %306 = vmatpush1.xpose.msra.mxu0 0.0
      %307 = vmatprep.subr.mxu0 0.0
      %308 = vmatpush1.xpose.msra.mxu0 0.0
      %309 = vmatprep.mubr.f32.mxu0 0.0
      %310 = vmatmul.mubr.f32.gmra.mrb[0].mxu0 %v237
      %v311 = vpop.f32.mrb[0].mxu0
      %v312 = vadd.f32 0.0, %v311
      %v313 = vpop.f32.mrb[0].mxu0
      %314 = vdwg.mxu0
      %v316 = vsel %vm235, %v216, 0
      %v319 = vsel %vm235, %v221, 0
      %v322 = vsel %vm235, %v222, 0
      %324 = vmatprep.subr.mxu0 0.0
      %325 = vmatpush1.xpose.msra.mxu0 %v319
      %326 = vmatprep.subr.mxu0 0.0
      %327 = vmatpush1.xpose.msra.mxu0 %v322
      %328 = vmatprep.subr.mxu0 0.0
      %329 = vmatpush1.xpose.msra.mxu0 0.0
      %330 = vmatprep.subr.mxu0 0.0
      %331 = vmatpush1.xpose.msra.mxu0 0.0
      %332 = vmatprep.subr.mxu0 0.0
      %333 = vmatpush1.xpose.msra.mxu0 0.0
      %334 = vmatprep.subr.mxu0 0.0
      %335 = vmatpush1.xpose.msra.mxu0 0.0
      %336 = vmatprep.subr.mxu0 0.0
      %337 = vmatpush1.xpose.msra.mxu0 0.0
      %338 = vmatprep.subr.mxu0 0.0
      %339 = vmatpush1.xpose.msra.mxu0 0.0
      %340 = vmatprep.subr.mxu0 0.0
      %341 = vmatpush1.xpose.msra.mxu0 0.0
      %342 = vmatprep.subr.mxu0 0.0
      %343 = vmatpush1.xpose.msra.mxu0 0.0
      %344 = vmatprep.subr.mxu0 0.0
      %345 = vmatpush1.xpose.msra.mxu0 0.0
      %346 = vmatprep.subr.mxu0 0.0
      %347 = vmatpush1.xpose.msra.mxu0 0.0
      %348 = vmatprep.subr.mxu0 0.0
      %349 = vmatpush1.xpose.msra.mxu0 0.0
      %350 = vmatprep.subr.mxu0 0.0
      %351 = vmatpush1.xpose.msra.mxu0 0.0
      %352 = vmatprep.subr.mxu0 0.0
      %353 = vmatpush1.xpose.msra.mxu0 0.0
      %354 = vmatprep.subr.mxu0 0.0
      %355 = vmatpush1.xpose.msra.mxu0 0.0
      %356 = vmatprep.subr.mxu0 0.0
      %357 = vmatpush1.xpose.msra.mxu0 0.0
      %358 = vmatprep.subr.mxu0 0.0
      %359 = vmatpush1.xpose.msra.mxu0 0.0
      %360 = vmatprep.subr.mxu0 0.0
      %361 = vmatpush1.xpose.msra.mxu0 0.0
      %362 = vmatprep.subr.mxu0 0.0
      %363 = vmatpush1.xpose.msra.mxu0 0.0
      %364 = vmatprep.subr.mxu0 0.0
      %365 = vmatpush1.xpose.msra.mxu0 0.0
      %366 = vmatprep.subr.mxu0 0.0
      %367 = vmatpush1.xpose.msra.mxu0 0.0
      %368 = vmatprep.subr.mxu0 0.0
      %369 = vmatpush1.xpose.msra.mxu0 0.0
      %370 = vmatprep.subr.mxu0 0.0
      %371 = vmatpush1.xpose.msra.mxu0 0.0
      %372 = vmatprep.subr.mxu0 0.0
      %373 = vmatpush1.xpose.msra.mxu0 0.0
      %374 = vmatprep.subr.mxu0 0.0
      %375 = vmatpush1.xpose.msra.mxu0 0.0
      %376 = vmatprep.subr.mxu0 0.0
      %377 = vmatpush1.xpose.msra.mxu0 0.0
      %378 = vmatprep.subr.mxu0 0.0
      %379 = vmatpush1.xpose.msra.mxu0 0.0
      %380 = vmatprep.subr.mxu0 0.0
      %381 = vmatpush1.xpose.msra.mxu0 0.0
      %382 = vmatprep.subr.mxu0 0.0
      %383 = vmatpush1.xpose.msra.mxu0 0.0
      %384 = vmatprep.subr.mxu0 0.0
      %385 = vmatpush1.xpose.msra.mxu0 0.0
      %386 = vmatprep.subr.mxu0 0.0
      %387 = vmatpush1.xpose.msra.mxu0 0.0
      %388 = vmatprep.mubr.f32.mxu0 0.0
      %389 = vmatmul.mubr.f32.gmra.mrb[0].mxu0 %v316
      %v390 = vpop.f32.mrb[0].mxu0
      %v391 = vadd.f32 0.0, %v390
      %v392 = vpop.f32.mrb[0].mxu0
      %393 = vdwg.mxu0
      %v395 = vsel %vm235, %v217, 0
      %v398 = vsel %vm235, %v223, 0
      %v401 = vsel %vm235, %v224, 0
      %403 = vmatprep.subr.mxu0 0.0
      %404 = vmatpush1.xpose.msra.mxu0 %v398
      %405 = vmatprep.subr.mxu0 0.0
      %406 = vmatpush1.xpose.msra.mxu0 %v401
      %407 = vmatprep.subr.mxu0 0.0
      %408 = vmatpush1.xpose.msra.mxu0 0.0
      %409 = vmatprep.subr.mxu0 0.0
      %410 = vmatpush1.xpose.msra.mxu0 0.0
      %411 = vmatprep.subr.mxu0 0.0
      %412 = vmatpush1.xpose.msra.mxu0 0.0
      %413 = vmatprep.subr.mxu0 0.0
      %414 = vmatpush1.xpose.msra.mxu0 0.0
      %415 = vmatprep.subr.mxu0 0.0
      %416 = vmatpush1.xpose.msra.mxu0 0.0
      %417 = vmatprep.subr.mxu0 0.0
      %418 = vmatpush1.xpose.msra.mxu0 0.0
      %419 = vmatprep.subr.mxu0 0.0
      %420 = vmatpush1.xpose.msra.mxu0 0.0
      %421 = vmatprep.subr.mxu0 0.0
      %422 = vmatpush1.xpose.msra.mxu0 0.0
      %423 = vmatprep.subr.mxu0 0.0
      %424 = vmatpush1.xpose.msra.mxu0 0.0
      %425 = vmatprep.subr.mxu0 0.0
      %426 = vmatpush1.xpose.msra.mxu0 0.0
      %427 = vmatprep.subr.mxu0 0.0
      %428 = vmatpush1.xpose.msra.mxu0 0.0
      %429 = vmatprep.subr.mxu0 0.0
      %430 = vmatpush1.xpose.msra.mxu0 0.0
      %431 = vmatprep.subr.mxu0 0.0
      %432 = vmatpush1.xpose.msra.mxu0 0.0
      %433 = vmatprep.subr.mxu0 0.0
      %434 = vmatpush1.xpose.msra.mxu0 0.0
      %435 = vmatprep.subr.mxu0 0.0
      %436 = vmatpush1.xpose.msra.mxu0 0.0
      %437 = vmatprep.subr.mxu0 0.0
      %438 = vmatpush1.xpose.msra.mxu0 0.0
      %439 = vmatprep.subr.mxu0 0.0
      %440 = vmatpush1.xpose.msra.mxu0 0.0
      %441 = vmatprep.subr.mxu0 0.0
      %442 = vmatpush1.xpose.msra.mxu0 0.0
      %443 = vmatprep.subr.mxu0 0.0
      %444 = vmatpush1.xpose.msra.mxu0 0.0
      %445 = vmatprep.subr.mxu0 0.0
      %446 = vmatpush1.xpose.msra.mxu0 0.0
      %447 = vmatprep.subr.mxu0 0.0
      %448 = vmatpush1.xpose.msra.mxu0 0.0
      %449 = vmatprep.subr.mxu0 0.0
      %450 = vmatpush1.xpose.msra.mxu0 0.0
      %451 = vmatprep.subr.mxu0 0.0
      %452 = vmatpush1.xpose.msra.mxu0 0.0
      %453 = vmatprep.subr.mxu0 0.0
      %454 = vmatpush1.xpose.msra.mxu0 0.0
      %455 = vmatprep.subr.mxu0 0.0
      %456 = vmatpush1.xpose.msra.mxu0 0.0
      %457 = vmatprep.subr.mxu0 0.0
      %458 = vmatpush1.xpose.msra.mxu0 0.0
      %459 = vmatprep.subr.mxu0 0.0
      %460 = vmatpush1.xpose.msra.mxu0 0.0
      %461 = vmatprep.subr.mxu0 0.0
      %462 = vmatpush1.xpose.msra.mxu0 0.0
      %463 = vmatprep.subr.mxu0 0.0
      %464 = vmatpush1.xpose.msra.mxu0 0.0
      %465 = vmatprep.subr.mxu0 0.0
      %466 = vmatpush1.xpose.msra.mxu0 0.0
      %467 = vmatprep.mubr.f32.mxu0 0.0
      %468 = vmatmul.mubr.f32.gmra.mrb[0].mxu0 %v395
      %v469 = vpop.f32.mrb[0].mxu0
      %v470 = vadd.f32 0.0, %v469
      %v471 = vpop.f32.mrb[0].mxu0
      %472 = vdwg.mxu0
      %v474 = vsel %vm235, %v218, 0
      %v477 = vsel %vm235, %v225, 0
      %v480 = vsel %vm235, %v226, 0
      %482 = vmatprep.subr.mxu0 0.0
      %483 = vmatpush1.xpose.msra.mxu0 %v477
      %484 = vmatprep.subr.mxu0 0.0
      %485 = vmatpush1.xpose.msra.mxu0 %v480
      %486 = vmatprep.subr.mxu0 0.0
      %487 = vmatpush1.xpose.msra.mxu0 0.0
      %488 = vmatprep.subr.mxu0 0.0
      %489 = vmatpush1.xpose.msra.mxu0 0.0
      %490 = vmatprep.subr.mxu0 0.0
      %491 = vmatpush1.xpose.msra.mxu0 0.0
      %492 = vmatprep.subr.mxu0 0.0
      %493 = vmatpush1.xpose.msra.mxu0 0.0
      %494 = vmatprep.subr.mxu0 0.0
      %495 = vmatpush1.xpose.msra.mxu0 0.0
      %496 = vmatprep.subr.mxu0 0.0
      %497 = vmatpush1.xpose.msra.mxu0 0.0
      %498 = vmatprep.subr.mxu0 0.0
      %499 = vmatpush1.xpose.msra.mxu0 0.0
      %500 = vmatprep.subr.mxu0 0.0
      %501 = vmatpush1.xpose.msra.mxu0 0.0
      %502 = vmatprep.subr.mxu0 0.0
      %503 = vmatpush1.xpose.msra.mxu0 0.0
      %504 = vmatprep.subr.mxu0 0.0
      %505 = vmatpush1.xpose.msra.mxu0 0.0
      %506 = vmatprep.subr.mxu0 0.0
      %507 = vmatpush1.xpose.msra.mxu0 0.0
      %508 = vmatprep.subr.mxu0 0.0
      %509 = vmatpush1.xpose.msra.mxu0 0.0
      %510 = vmatprep.subr.mxu0 0.0
      %511 = vmatpush1.xpose.msra.mxu0 0.0
      %512 = vmatprep.subr.mxu0 0.0
      %513 = vmatpush1.xpose.msra.mxu0 0.0
      %514 = vmatprep.subr.mxu0 0.0
      %515 = vmatpush1.xpose.msra.mxu0 0.0
      %516 = vmatprep.subr.mxu0 0.0
      %517 = vmatpush1.xpose.msra.mxu0 0.0
      %518 = vmatprep.subr.mxu0 0.0
      %519 = vmatpush1.xpose.msra.mxu0 0.0
      %520 = vmatprep.subr.mxu0 0.0
      %521 = vmatpush1.xpose.msra.mxu0 0.0
      %522 = vmatprep.subr.mxu0 0.0
      %523 = vmatpush1.xpose.msra.mxu0 0.0
      %524 = vmatprep.subr.mxu0 0.0
      %525 = vmatpush1.xpose.msra.mxu0 0.0
      %526 = vmatprep.subr.mxu0 0.0
      %527 = vmatpush1.xpose.msra.mxu0 0.0
      %528 = vmatprep.subr.mxu0 0.0
      %529 = vmatpush1.xpose.msra.mxu0 0.0
      %530 = vmatprep.subr.mxu0 0.0
      %531 = vmatpush1.xpose.msra.mxu0 0.0
      %532 = vmatprep.subr.mxu0 0.0
      %533 = vmatpush1.xpose.msra.mxu0 0.0
      %534 = vmatprep.subr.mxu0 0.0
      %535 = vmatpush1.xpose.msra.mxu0 0.0
      %536 = vmatprep.subr.mxu0 0.0
      %537 = vmatpush1.xpose.msra.mxu0 0.0
      %538 = vmatprep.subr.mxu0 0.0
      %539 = vmatpush1.xpose.msra.mxu0 0.0
      %540 = vmatprep.subr.mxu0 0.0
      %541 = vmatpush1.xpose.msra.mxu0 0.0
      %542 = vmatprep.subr.mxu0 0.0
      %543 = vmatpush1.xpose.msra.mxu0 0.0
      %544 = vmatprep.subr.mxu0 0.0
      %545 = vmatpush1.xpose.msra.mxu0 0.0
      %546 = vmatprep.mubr.f32.mxu0 0.0
      %547 = vmatmul.mubr.f32.gmra.mrb[0].mxu0 %v474
      %v548 = vpop.f32.mrb[0].mxu0
      %v549 = vadd.f32 0.0, %v548
      %v550 = vpop.f32.mrb[0].mxu0
      %551 = vdwg.mxu0
      %vm552 = vcmask 130048
      %v553 = vsel %vm552, %v312, -inf
      %554 = vmax.xlane.f32.xlu0 %v553
      %v555 = vpop.xlane.xlu0 %554
      %v556 = vsel %vm552, %v391, -inf
      %557 = vmax.xlane.f32.xlu0 %v556
      %v558 = vpop.xlane.xlu0 %557
      %v559 = vsel %vm552, %v470, -inf
      %560 = vmax.xlane.f32.xlu0 %v559
      %v561 = vpop.xlane.xlu0 %560
      %v562 = vsel %vm552, %v549, -inf
      %563 = vmax.xlane.f32.xlu0 %v562
      %v564 = vpop.xlane.xlu0 %563
      %v565 = vsub.f32 %v312, %v555
      %v566 = vsub.f32 %v391, %v558
      %v567 = vsub.f32 %v470, %v561
      %v568 = vsub.f32 %v549, %v564
      %v569 = vmul.f32 %v565, 1.442695
      %v570 = vpow.pop %v569
      %v571 = vmul.f32 %v566, 1.442695
      %v572 = vpow.pop %v571
      %v573 = vmul.f32 %v567, 1.442695
      %v574 = vpow.pop %v573
      %v575 = vmul.f32 %v568, 1.442695
      %v576 = vpow.pop %v575
      %v577 = vsel %vm552, %v570, 0.0
      %578 = vadd.xlane.f32.xlu0 %v577
      %v579 = vpop.xlane.xlu0 %578
      %v580 = vsel %vm552, %v572, 0.0
      %581 = vadd.xlane.f32.xlu0 %v580
      %v582 = vpop.xlane.xlu0 %581
      %v583 = vsel %vm552, %v574, 0.0
      %584 = vadd.xlane.f32.xlu0 %v583
      %v585 = vpop.xlane.xlu0 %584
      %v586 = vsel %vm552, %v576, 0.0
      %587 = vadd.xlane.f32.xlu0 %v586
      %v588 = vpop.xlane.xlu0 %587
      %v589 = vrcp.pop %v579
      %v590 = vmul.f32 %v570, %v589
      %v591 = vrcp.pop %v582
      %v592 = vmul.f32 %v572, %v591
      %v593 = vrcp.pop %v585
      %v594 = vmul.f32 %v574, %v593
      %v595 = vrcp.pop %v588
      %v596 = vmul.f32 %v576, %v595
      %v598 = vsel %vm552, %v590, 0
      %600 = vmatprep.subr.mxu0 0.0
      %601 = vmatpush1.msra.mxu0 %v227
      %602 = vmatprep.subr.mxu0 0.0
      %603 = vmatpush1.msra.mxu0 %v228
      %604 = vmatprep.subr.mxu0 0.0
      %605 = vmatpush1.msra.mxu0 0.0
      %606 = vmatprep.subr.mxu0 0.0
      %607 = vmatpush1.msra.mxu0 0.0
      %608 = vmatprep.subr.mxu0 0.0
      %609 = vmatpush1.msra.mxu0 0.0
      %610 = vmatprep.subr.mxu0 0.0
      %611 = vmatpush1.msra.mxu0 0.0
      %612 = vmatprep.subr.mxu0 0.0
      %613 = vmatpush1.msra.mxu0 0.0
      %614 = vmatprep.subr.mxu0 0.0
      %615 = vmatpush1.msra.mxu0 0.0
      %616 = vmatprep.subr.mxu0 0.0
      %617 = vmatpush1.msra.mxu0 0.0
      %618 = vmatprep.subr.mxu0 0.0
      %619 = vmatpush1.msra.mxu0 0.0
      %620 = vmatprep.subr.mxu0 0.0
      %621 = vmatpush1.msra.mxu0 0.0
      %622 = vmatprep.subr.mxu0 0.0
      %623 = vmatpush1.msra.mxu0 0.0
      %624 = vmatprep.subr.mxu0 0.0
      %625 = vmatpush1.msra.mxu0 0.0
      %626 = vmatprep.subr.mxu0 0.0
      %627 = vmatpush1.msra.mxu0 0.0
      %628 = vmatprep.subr.mxu0 0.0
      %629 = vmatpush1.msra.mxu0 0.0
      %630 = vmatprep.subr.mxu0 0.0
      %631 = vmatpush1.msra.mxu0 0.0
      %632 = vmatprep.subr.mxu0 0.0
      %633 = vmatpush1.msra.mxu0 0.0
      %634 = vmatprep.subr.mxu0 0.0
      %635 = vmatpush1.msra.mxu0 0.0
      %636 = vmatprep.subr.mxu0 0.0
      %637 = vmatpush1.msra.mxu0 0.0
      %638 = vmatprep.subr.mxu0 0.0
      %639 = vmatpush1.msra.mxu0 0.0
      %640 = vmatprep.subr.mxu0 0.0
      %641 = vmatpush1.msra.mxu0 0.0
      %642 = vmatprep.subr.mxu0 0.0
      %643 = vmatpush1.msra.mxu0 0.0
      %644 = vmatprep.subr.mxu0 0.0
      %645 = vmatpush1.msra.mxu0 0.0
      %646 = vmatprep.subr.mxu0 0.0
      %647 = vmatpush1.msra.mxu0 0.0
      %648 = vmatprep.subr.mxu0 0.0
      %649 = vmatpush1.msra.mxu0 0.0
      %650 = vmatprep.subr.mxu0 0.0
      %651 = vmatpush1.msra.mxu0 0.0
      %652 = vmatprep.subr.mxu0 0.0
      %653 = vmatpush1.msra.mxu0 0.0
      %654 = vmatprep.subr.mxu0 0.0
      %655 = vmatpush1.msra.mxu0 0.0
      %656 = vmatprep.subr.mxu0 0.0
      %657 = vmatpush1.msra.mxu0 0.0
      %658 = vmatprep.subr.mxu0 0.0
      %659 = vmatpush1.msra.mxu0 0.0
      %660 = vmatprep.subr.mxu0 0.0
      %661 = vmatpush1.msra.mxu0 0.0
      %662 = vmatprep.subr.mxu0 0.0
      %663 = vmatpush1.msra.mxu0 0.0
      %664 = vmatprep.mubr.f32.mxu0 0.0
      %665 = vmatmul.mubr.f32.gmra.mrb[0].mxu0 %v598
      %v666 = vpop.f32.mrb[0].mxu0
      %v667 = vadd.f32 0.0, %v666
      %v668 = vpop.f32.mrb[0].mxu0
      %669 = vdwg.mxu0
      %v671 = vsel %vm552, %v592, 0
      %673 = vmatprep.subr.mxu0 0.0
      %674 = vmatpush1.msra.mxu0 %v229
      %675 = vmatprep.subr.mxu0 0.0
      %676 = vmatpush1.msra.mxu0 %v230
      %677 = vmatprep.subr.mxu0 0.0
      %678 = vmatpush1.msra.mxu0 0.0
      %679 = vmatprep.subr.mxu0 0.0
      %680 = vmatpush1.msra.mxu0 0.0
      %681 = vmatprep.subr.mxu0 0.0
      %682 = vmatpush1.msra.mxu0 0.0
      %683 = vmatprep.subr.mxu0 0.0
      %684 = vmatpush1.msra.mxu0 0.0
      %685 = vmatprep.subr.mxu0 0.0
      %686 = vmatpush1.msra.mxu0 0.0
      %687 = vmatprep.subr.mxu0 0.0
      %688 = vmatpush1.msra.mxu0 0.0
      %689 = vmatprep.subr.mxu0 0.0
      %690 = vmatpush1.msra.mxu0 0.0
      %691 = vmatprep.subr.mxu0 0.0
      %692 = vmatpush1.msra.mxu0 0.0
      %693 = vmatprep.subr.mxu0 0.0
      %694 = vmatpush1.msra.mxu0 0.0
      %695 = vmatprep.subr.mxu0 0.0
      %696 = vmatpush1.msra.mxu0 0.0
      %697 = vmatprep.subr.mxu0 0.0
      %698 = vmatpush1.msra.mxu0 0.0
      %699 = vmatprep.subr.mxu0 0.0
      %700 = vmatpush1.msra.mxu0 0.0
      %701 = vmatprep.subr.mxu0 0.0
      %702 = vmatpush1.msra.mxu0 0.0
      %703 = vmatprep.subr.mxu0 0.0
      %704 = vmatpush1.msra.mxu0 0.0
      %705 = vmatprep.subr.mxu0 0.0
      %706 = vmatpush1.msra.mxu0 0.0
      %707 = vmatprep.subr.mxu0 0.0
      %708 = vmatpush1.msra.mxu0 0.0
      %709 = vmatprep.subr.mxu0 0.0
      %710 = vmatpush1.msra.mxu0 0.0
      %711 = vmatprep.subr.mxu0 0.0
      %712 = vmatpush1.msra.mxu0 0.0
      %713 = vmatprep.subr.mxu0 0.0
      %714 = vmatpush1.msra.mxu0 0.0
      %715 = vmatprep.subr.mxu0 0.0
      %716 = vmatpush1.msra.mxu0 0.0
      %717 = vmatprep.subr.mxu0 0.0
      %718 = vmatpush1.msra.mxu0 0.0
      %719 = vmatprep.subr.mxu0 0.0
      %720 = vmatpush1.msra.mxu0 0.0
      %721 = vmatprep.subr.mxu0 0.0
      %722 = vmatpush1.msra.mxu0 0.0
      %723 = vmatprep.subr.mxu0 0.0
      %724 = vmatpush1.msra.mxu0 0.0
      %725 = vmatprep.subr.mxu0 0.0
      %726 = vmatpush1.msra.mxu0 0.0
      %727 = vmatprep.subr.mxu0 0.0
      %728 = vmatpush1.msra.mxu0 0.0
      %729 = vmatprep.subr.mxu0 0.0
      %730 = vmatpush1.msra.mxu0 0.0
      %731 = vmatprep.subr.mxu0 0.0
      %732 = vmatpush1.msra.mxu0 0.0
      %733 = vmatprep.subr.mxu0 0.0
      %734 = vmatpush1.msra.mxu0 0.0
      %735 = vmatprep.subr.mxu0 0.0
      %736 = vmatpush1.msra.mxu0 0.0
      %737 = vmatprep.mubr.f32.mxu0 0.0
      %738 = vmatmul.mubr.f32.gmra.mrb[0].mxu0 %v671
      %v739 = vpop.f32.mrb[0].mxu0
      %v740 = vadd.f32 0.0, %v739
      %v741 = vpop.f32.mrb[0].mxu0
      %742 = vdwg.mxu0
      %v744 = vsel %vm552, %v594, 0
      %746 = vmatprep.subr.mxu0 0.0
      %747 = vmatpush1.msra.mxu0 %v231
      %748 = vmatprep.subr.mxu0 0.0
      %749 = vmatpush1.msra.mxu0 %v232
      %750 = vmatprep.subr.mxu0 0.0
      %751 = vmatpush1.msra.mxu0 0.0
      %752 = vmatprep.subr.mxu0 0.0
      %753 = vmatpush1.msra.mxu0 0.0
      %754 = vmatprep.subr.mxu0 0.0
      %755 = vmatpush1.msra.mxu0 0.0
      %756 = vmatprep.subr.mxu0 0.0
      %757 = vmatpush1.msra.mxu0 0.0
      %758 = vmatprep.subr.mxu0 0.0
      %759 = vmatpush1.msra.mxu0 0.0
      %760 = vmatprep.subr.mxu0 0.0
      %761 = vmatpush1.msra.mxu0 0.0
      %762 = vmatprep.subr.mxu0 0.0
      %763 = vmatpush1.msra.mxu0 0.0
      %764 = vmatprep.subr.mxu0 0.0
      %765 = vmatpush1.msra.mxu0 0.0
      %766 = vmatprep.subr.mxu0 0.0
      %767 = vmatpush1.msra.mxu0 0.0
      %768 = vmatprep.subr.mxu0 0.0
      %769 = vmatpush1.msra.mxu0 0.0
      %770 = vmatprep.subr.mxu0 0.0
      %771 = vmatpush1.msra.mxu0 0.0
      %772 = vmatprep.subr.mxu0 0.0
      %773 = vmatpush1.msra.mxu0 0.0
      %774 = vmatprep.subr.mxu0 0.0
      %775 = vmatpush1.msra.mxu0 0.0
      %776 = vmatprep.subr.mxu0 0.0
      %777 = vmatpush1.msra.mxu0 0.0
      %778 = vmatprep.subr.mxu0 0.0
      %779 = vmatpush1.msra.mxu0 0.0
      %780 = vmatprep.subr.mxu0 0.0
      %781 = vmatpush1.msra.mxu0 0.0
      %782 = vmatprep.subr.mxu0 0.0
      %783 = vmatpush1.msra.mxu0 0.0
      %784 = vmatprep.subr.mxu0 0.0
      %785 = vmatpush1.msra.mxu0 0.0
      %786 = vmatprep.subr.mxu0 0.0
      %787 = vmatpush1.msra.mxu0 0.0
      %788 = vmatprep.subr.mxu0 0.0
      %789 = vmatpush1.msra.mxu0 0.0
      %790 = vmatprep.subr.mxu0 0.0
      %791 = vmatpush1.msra.mxu0 0.0
      %792 = vmatprep.subr.mxu0 0.0
      %793 = vmatpush1.msra.mxu0 0.0
      %794 = vmatprep.subr.mxu0 0.0
      %795 = vmatpush1.msra.mxu0 0.0
      %796 = vmatprep.subr.mxu0 0.0
      %797 = vmatpush1.msra.mxu0 0.0
      %798 = vmatprep.subr.mxu0 0.0
      %799 = vmatpush1.msra.mxu0 0.0
      %800 = vmatprep.subr.mxu0 0.0
      %801 = vmatpush1.msra.mxu0 0.0
      %802 = vmatprep.subr.mxu0 0.0
      %803 = vmatpush1.msra.mxu0 0.0
      %804 = vmatprep.subr.mxu0 0.0
      %805 = vmatpush1.msra.mxu0 0.0
      %806 = vmatprep.subr.mxu0 0.0
      %807 = vmatpush1.msra.mxu0 0.0
      %808 = vmatprep.subr.mxu0 0.0
      %809 = vmatpush1.msra.mxu0 0.0
      %810 = vmatprep.mubr.f32.mxu0 0.0
      %811 = vmatmul.mubr.f32.gmra.mrb[0].mxu0 %v744
      %v812 = vpop.f32.mrb[0].mxu0
      %v813 = vadd.f32 0.0, %v812
      %v814 = vpop.f32.mrb[0].mxu0
      %815 = vdwg.mxu0
      %v817 = vsel %vm552, %v596, 0
      %819 = vmatprep.subr.mxu0 0.0
      %820 = vmatpush1.msra.mxu0 %v233
      %821 = vmatprep.subr.mxu0 0.0
      %822 = vmatpush1.msra.mxu0 %v234
      %823 = vmatprep.subr.mxu0 0.0
      %824 = vmatpush1.msra.mxu0 0.0
      %825 = vmatprep.subr.mxu0 0.0
      %826 = vmatpush1.msra.mxu0 0.0
      %827 = vmatprep.subr.mxu0 0.0
      %828 = vmatpush1.msra.mxu0 0.0
      %829 = vmatprep.subr.mxu0 0.0
      %830 = vmatpush1.msra.mxu0 0.0
      %831 = vmatprep.subr.mxu0 0.0
      %832 = vmatpush1.msra.mxu0 0.0
      %833 = vmatprep.subr.mxu0 0.0
      %834 = vmatpush1.msra.mxu0 0.0
      %835 = vmatprep.subr.mxu0 0.0
      %836 = vmatpush1.msra.mxu0 0.0
      %837 = vmatprep.subr.mxu0 0.0
      %838 = vmatpush1.msra.mxu0 0.0
      %839 = vmatprep.subr.mxu0 0.0
      %840 = vmatpush1.msra.mxu0 0.0
      %841 = vmatprep.subr.mxu0 0.0
      %842 = vmatpush1.msra.mxu0 0.0
      %843 = vmatprep.subr.mxu0 0.0
      %844 = vmatpush1.msra.mxu0 0.0
      %845 = vmatprep.subr.mxu0 0.0
      %846 = vmatpush1.msra.mxu0 0.0
      %847 = vmatprep.subr.mxu0 0.0
      %848 = vmatpush1.msra.mxu0 0.0
      %849 = vmatprep.subr.mxu0 0.0
      %850 = vmatpush1.msra.mxu0 0.0
      %851 = vmatprep.subr.mxu0 0.0
      %852 = vmatpush1.msra.mxu0 0.0
      %853 = vmatprep.subr.mxu0 0.0
      %854 = vmatpush1.msra.mxu0 0.0
      %855 = vmatprep.subr.mxu0 0.0
      %856 = vmatpush1.msra.mxu0 0.0
      %857 = vmatprep.subr.mxu0 0.0
      %858 = vmatpush1.msra.mxu0 0.0
      %859 = vmatprep.subr.mxu0 0.0
      %860 = vmatpush1.msra.mxu0 0.0
      %861 = vmatprep.subr.mxu0 0.0
      %862 = vmatpush1.msra.mxu0 0.0
      %863 = vmatprep.subr.mxu0 0.0
      %864 = vmatpush1.msra.mxu0 0.0
      %865 = vmatprep.subr.mxu0 0.0
      %866 = vmatpush1.msra.mxu0 0.0
      %867 = vmatprep.subr.mxu0 0.0
      %868 = vmatpush1.msra.mxu0 0.0
      %869 = vmatprep.subr.mxu0 0.0
      %870 = vmatpush1.msra.mxu0 0.0
      %871 = vmatprep.subr.mxu0 0.0
      %872 = vmatpush1.msra.mxu0 0.0
      %873 = vmatprep.subr.mxu0 0.0
      %874 = vmatpush1.msra.mxu0 0.0
      %875 = vmatprep.subr.mxu0 0.0
      %876 = vmatpush1.msra.mxu0 0.0
      %877 = vmatprep.subr.mxu0 0.0
      %878 = vmatpush1.msra.mxu0 0.0
      %879 = vmatprep.subr.mxu0 0.0
      %880 = vmatpush1.msra.mxu0 0.0
      %881 = vmatprep.subr.mxu0 0.0
      %882 = vmatpush1.msra.mxu0 0.0
      %883 = vmatprep.mubr.f32.mxu0 0.0
      %884 = vmatmul.mubr.f32.gmra.mrb[0].mxu0 %v817
      %v885 = vpop.f32.mrb[0].mxu0
      %v886 = vadd.f32 0.0, %v885
      %v887 = vpop.f32.mrb[0].mxu0
      %888 = vdwg.mxu0
      %889 = vst.msk [vmem:[%s210] sm:$0xff] %vm235, %v667
      %890 = vst.msk [vmem:[%s210 + $0x8] sm:$0xff] %vm235, %v740
      %891 = vst.msk [vmem:[%s210 + $0x10] sm:$0xff] %vm235, %v813
      %892 = vst.msk [vmem:[%s210 + $0x18] sm:$0xff] %vm235, %v886
      %p893 = scmp.lt.s32.totalorder %s14, 1
      %s894 = scalar_select %p893, %s14, 1
      %s895 = smul.addr %s894, 4
      %s896 = smul.addr %s895, 8
      %s897 = scalar_lea.vmem %s3, %s896
      // Predicated region
      $region33: #{transformer_decoder_forward.22} parent=31 // pred_check
        %p898 = pneg %p110
      $region34: #{transformer_decoder_forward.22} parent=31 // pred_check_branch
        %900 = sbr.rel (%p898) target = $region36
      $region35: #{transformer_decoder_forward.22} parent=31 // pred_region
        _
      $region36: #{transformer_decoder_forward.22} parent=31 // pred_fallthru
        _
    $region32: #{transformer_decoder_forward.22} parent=5 // pred_fallthru
      _
    %p901 = scmp.le.s32.totalorder 2, %s9
    // Predicated region
    $region37: #{transformer_decoder_forward.22} parent=5 // pred_check
      %p902 = pneg %p901
    $region38: #{transformer_decoder_forward.22} parent=5 // pred_check_branch
      %904 = sbr.rel (%p902) target = $region40
    $region39: #{transformer_decoder_forward.22} parent=5 // pred_region
      %s905 = ssub.s32 %s9, 2
      // Predicated region
      $region41: #{transformer_decoder_forward.22} parent=39 // pred_check
        %p906 = pneg %p116
      $region42: #{transformer_decoder_forward.22} parent=39 // pred_check_branch
        %908 = sbr.rel (%p906) target = $region44
      $region43: #{transformer_decoder_forward.22} parent=39 // pred_region
        %p909 = scmp.lt.s32.totalorder %s15, 1
        %s910 = scalar_select %p909, %s15, 1
        %s911 = smul.addr %s910, 4
        %s912 = smul.addr %s911, 8
        %s913 = scalar_lea.vmem %s3, %s912
      $region44: #{transformer_decoder_forward.22} parent=39 // pred_fallthru
        _
    $region40: #{transformer_decoder_forward.22} parent=5 // pred_fallthru
      _
  $region6: #{transformer_decoder_forward.22} parent=0 // loop_footer
    %s13 = sadd.s32 1, %s9
  $region7: #{transformer_decoder_forward.22} parent=0 // loop_footer_branch
    %8 = sbr.rel target = $region3
  $region8: #{transformer_decoder_forward.22} parent=0 // loop_exit
    _

// kernel: transformer_decoder_forward.24
$region0: #{transformer_decoder_forward.24}
  #allocation0 [shape = 'u32[]', space=smem, size = 0x4, offset = 0x4, fixed_abs, tag = 'smem constant byte address 0x4 - core index']
  #allocation1 [shape = 'u32[144,128]{1,0:T(1,128)}', space=vmem, size = 0x12000, scoped, tag = 'internal scratch']
  %s0 = inlined_call_operand.vmem [shape: f32[16,128], index: 0, kind: input, shape index: {}]
  %s1 = inlined_call_operand.vmem [shape: f32[128,256], index: 1, kind: input, shape index: {}]
  %s2 = inlined_call_operand.vmem [shape: f32[1,256], index: 2, kind: input, shape index: {}]
  %s3 = inlined_call_operand.vmem [shape: f32[256,128], index: 3, kind: input, shape index: {}]
  %s4 = inlined_call_operand.vmem [shape: f32[1,128], index: 4, kind: input, shape index: {}]
  %s5 = inlined_call_operand.vmem [shape: f32[1,128], index: 5, kind: input, shape index: {}]
  %s6 = inlined_call_operand.vmem [shape: f32[1,128], index: 6, kind: input, shape index: {}]
  %s7 = inlined_call_operand.vmem [shape: f32[16,128], index: 7, kind: output, shape index: {}]
  %s8 = sld [smem:[#allocation0]]
  $region38: #{transformer_decoder_forward.24} parent=0
    _
  %s10 = ssub.s32 1, %s8
  %s11 = scalar_select 0, %s10, %s8
  // Predicated region
  $region2: #{transformer_decoder_forward.24} parent=0 // pred_check
    _
  $region3: #{transformer_decoder_forward.24} parent=0 // pred_check_branch
    %13 = sbr.rel (0) target = $region5
  $region4: #{transformer_decoder_forward.24} parent=0 // pred_region
    _
  $region5: #{transformer_decoder_forward.24} parent=0 // pred_fallthru
    _
  // Predicated region
  $region6: #{transformer_decoder_forward.24} parent=0 // pred_check
    _
  $region7: #{transformer_decoder_forward.24} parent=0 // pred_check_branch
    %15 = sbr.rel (0) target = $region9
  $region8: #{transformer_decoder_forward.24} parent=0 // pred_region
    _
  $region9: #{transformer_decoder_forward.24} parent=0 // pred_fallthru
    _
  // Predicated region
  $region10: #{transformer_decoder_forward.24} parent=0 // pred_check
    _
  $region11: #{transformer_decoder_forward.24} parent=0 // pred_check_branch
    %17 = sbr.rel (0) target = $region13
  $region12: #{transformer_decoder_forward.24} parent=0 // pred_region
    _
  $region13: #{transformer_decoder_forward.24} parent=0 // pred_fallthru
    _
  // Predicated region
  $region14: #{transformer_decoder_forward.24} parent=0 // pred_check
    _
  $region15: #{transformer_decoder_forward.24} parent=0 // pred_check_branch
    %19 = sbr.rel (0) target = $region17
  $region16: #{transformer_decoder_forward.24} parent=0 // pred_region
    _
  $region17: #{transformer_decoder_forward.24} parent=0 // pred_fallthru
    _
  // Predicated region
  $region18: #{transformer_decoder_forward.24} parent=0 // pred_check
    _
  $region19: #{transformer_decoder_forward.24} parent=0 // pred_check_branch
    %21 = sbr.rel (0) target = $region21
  $region20: #{transformer_decoder_forward.24} parent=0 // pred_region
    _
  $region21: #{transformer_decoder_forward.24} parent=0 // pred_fallthru
    _
  // Predicated region
  $region22: #{transformer_decoder_forward.24} parent=0 // pred_check
    _
  $region23: #{transformer_decoder_forward.24} parent=0 // pred_check_branch
    %23 = sbr.rel (0) target = $region25
  $region24: #{transformer_decoder_forward.24} parent=0 // pred_region
    _
  $region25: #{transformer_decoder_forward.24} parent=0 // pred_fallthru
    _
  // Predicated region
  $region26: #{transformer_decoder_forward.24} parent=0 // pred_check
    _
  $region27: #{transformer_decoder_forward.24} parent=0 // pred_check_branch
    %25 = sbr.rel (0) target = $region29
  $region28: #{transformer_decoder_forward.24} parent=0 // pred_region
    _
  $region29: #{transformer_decoder_forward.24} parent=0 // pred_fallthru
    _
  %v26 = vld [vmem:[%s0] sm:$0xff]
  %v27 = vld [vmem:[%s0 + $0x8] sm:$0xff]
  %v28 = vld [vmem:[%s1] sm:$0xff]
  %v29 = vld [vmem:[%s1 + $0x8] sm:$0xff]
  %v30 = vld [vmem:[%s1 + $0x10] sm:$0xff]
  %v31 = vld [vmem:[%s1 + $0x18] sm:$0xff]
  %v32 = vld [vmem:[%s1 + $0x20] sm:$0xff]
  %v33 = vld [vmem:[%s1 + $0x28] sm:$0xff]
  %v34 = vld [vmem:[%s1 + $0x30] sm:$0xff]
  %v35 = vld [vmem:[%s1 + $0x38] sm:$0xff]
  %v36 = vld [vmem:[%s1 + $0x40] sm:$0xff]
  %v37 = vld [vmem:[%s1 + $0x48] sm:$0xff]
  %v38 = vld [vmem:[%s1 + $0x50] sm:$0xff]
  %v39 = vld [vmem:[%s1 + $0x58] sm:$0xff]
  %v40 = vld [vmem:[%s1 + $0x60] sm:$0xff]
  %v41 = vld [vmem:[%s1 + $0x68] sm:$0xff]
  %v42 = vld [vmem:[%s1 + $0x70] sm:$0xff]
  %v43 = vld [vmem:[%s1 + $0x78] sm:$0xff]
  %v44 = vld [vmem:[%s1 + $0x80] sm:$0xff]
  %v45 = vld [vmem:[%s1 + $0x88] sm:$0xff]
  %v46 = vld [vmem:[%s1 + $0x90] sm:$0xff]
  %v47 = vld [vmem:[%s1 + $0x98] sm:$0xff]
  %v48 = vld [vmem:[%s1 + $0xa0] sm:$0xff]
  %v49 = vld [vmem:[%s1 + $0xa8] sm:$0xff]
  %v50 = vld [vmem:[%s1 + $0xb0] sm:$0xff]
  %v51 = vld [vmem:[%s1 + $0xb8] sm:$0xff]
  %v52 = vld [vmem:[%s1 + $0xc0] sm:$0xff]
  %v53 = vld [vmem:[%s1 + $0xc8] sm:$0xff]
  %v54 = vld [vmem:[%s1 + $0xd0] sm:$0xff]
  %v55 = vld [vmem:[%s1 + $0xd8] sm:$0xff]
  %v56 = vld [vmem:[%s1 + $0xe0] sm:$0xff]
  %v57 = vld [vmem:[%s1 + $0xe8] sm:$0xff]
  %v58 = vld [vmem:[%s1 + $0xf0] sm:$0xff]
  %v59 = vld [vmem:[%s1 + $0xf8] sm:$0xff]
  %v60 = vld [vmem:[%s2] sm:$0x3]
  %v62 = vlaneseq
  %v63 = vshrl.u32 %v62, 7
  %v64 = vsub.s32 0, %v63
  %v65 = vrot.slane %v60, %v64
  %v66 = vlaneseq
  %v67 = vshrl.u32 %v66, 7
  %v68 = vsub.s32 1, %v67
  %v69 = vrot.slane %v60, %v68
  %72 = vmatprep.subr.mxu0 %v29
  %73 = vmatpush1.msra.mxu0 %v28
  %74 = vmatprep.subr.mxu0 %v31
  %75 = vmatpush1.msra.mxu0 %v30
  %76 = vmatprep.subr.mxu0 %v33
  %77 = vmatpush1.msra.mxu0 %v32
  %78 = vmatprep.subr.mxu0 %v35
  %79 = vmatpush1.msra.mxu0 %v34
  %80 = vmatprep.subr.mxu0 %v37
  %81 = vmatpush1.msra.mxu0 %v36
  %82 = vmatprep.subr.mxu0 %v39
  %83 = vmatpush1.msra.mxu0 %v38
  %84 = vmatprep.subr.mxu0 %v41
  %85 = vmatpush1.msra.mxu0 %v40
  %86 = vmatprep.subr.mxu0 %v43
  %87 = vmatpush1.msra.mxu0 %v42
  %88 = vmatprep.subr.mxu0 %v45
  %89 = vmatpush1.msra.mxu0 %v44
  %90 = vmatprep.subr.mxu0 %v47
  %91 = vmatpush1.msra.mxu0 %v46
  %92 = vmatprep.subr.mxu0 %v49
  %93 = vmatpush1.msra.mxu0 %v48
  %94 = vmatprep.subr.mxu0 %v51
  %95 = vmatpush1.msra.mxu0 %v50
  %96 = vmatprep.subr.mxu0 %v53
  %97 = vmatpush1.msra.mxu0 %v52
  %98 = vmatprep.subr.mxu0 %v55
  %99 = vmatpush1.msra.mxu0 %v54
  %100 = vmatprep.subr.mxu0 %v57
  %101 = vmatpush1.msra.mxu0 %v56
  %102 = vmatprep.subr.mxu0 %v59
  %103 = vmatpush1.msra.mxu0 %v58
  %104 = vmatprep.subr.mxu0 0.0
  %105 = vmatpush1.msra.mxu0 0.0
  %106 = vmatprep.subr.mxu0 0.0
  %107 = vmatpush1.msra.mxu0 0.0
  %108 = vmatprep.subr.mxu0 0.0
  %109 = vmatpush1.msra.mxu0 0.0
  %110 = vmatprep.subr.mxu0 0.0
  %111 = vmatpush1.msra.mxu0 0.0
  %112 = vmatprep.subr.mxu0 0.0
  %113 = vmatpush1.msra.mxu0 0.0
  %114 = vmatprep.subr.mxu0 0.0
  %115 = vmatpush1.msra.mxu0 0.0
  %116 = vmatprep.subr.mxu0 0.0
  %117 = vmatpush1.msra.mxu0 0.0
  %118 = vmatprep.subr.mxu0 0.0
  %119 = vmatpush1.msra.mxu0 0.0
  %120 = vmatprep.subr.mxu0 0.0
  %121 = vmatpush1.msra.mxu0 0.0
  %122 = vmatprep.subr.mxu0 0.0
  %123 = vmatpush1.msra.mxu0 0.0
  %124 = vmatprep.subr.mxu0 0.0
  %125 = vmatpush1.msra.mxu0 0.0
  %126 = vmatprep.subr.mxu0 0.0
  %127 = vmatpush1.msra.mxu0 0.0
  %128 = vmatprep.subr.mxu0 0.0
  %129 = vmatpush1.msra.mxu0 0.0
  %130 = vmatprep.subr.mxu0 0.0
  %131 = vmatpush1.msra.mxu0 0.0
  %132 = vmatprep.subr.mxu0 0.0
  %133 = vmatpush1.msra.mxu0 0.0
  %134 = vmatprep.subr.mxu0 0.0
  %135 = vmatpush1.msra.mxu0 0.0
  %136 = vmatprep.mubr.f32.mxu0 0.0
  %137 = vmatmul.mubr.f32.gmra.mrb[0].mxu0 %v26
  %v138 = vpop.f32.mrb[0].mxu0
  %v139 = vadd.f32 %v65, %v138
  %v140 = vpop.f32.mrb[0].mxu0
  %v141 = vadd.f32 %v69, %v140
  %142 = vmatprep.mubr.f32.mxu0 0.0
  %143 = vmatmul.mubr.f32.gmra.mrb[0].mxu0 %v27
  %v144 = vpop.f32.mrb[0].mxu0
  %v145 = vadd.f32 %v65, %v144
  %v146 = vpop.f32.mrb[0].mxu0
  %v147 = vadd.f32 %v69, %v146
  %148 = vdwg.mxu0
  %v149 = vmax.f32 %v139, 0.0
  %v150 = vmax.f32 %v141, 0.0
  %v151 = vmax.f32 %v145, 0.0
  %v152 = vmax.f32 %v147, 0.0
  %v153 = vld [vmem:[%s3] sm:$0xff]
  %v154 = vld [vmem:[%s3 + $0x8] sm:$0xff]
  %v155 = vld [vmem:[%s3 + $0x10] sm:$0xff]
  %v156 = vld [vmem:[%s3 + $0x18] sm:$0xff]
  %v157 = vld [vmem:[%s3 + $0x20] sm:$0xff]
  %v158 = vld [vmem:[%s3 + $0x28] sm:$0xff]
  %v159 = vld [vmem:[%s3 + $0x30] sm:$0xff]
  %v160 = vld [vmem:[%s3 + $0x38] sm:$0xff]
  %v161 = vld [vmem:[%s3 + $0x40] sm:$0xff]
  %v162 = vld [vmem:[%s3 + $0x48] sm:$0xff]
  %v163 = vld [vmem:[%s3 + $0x50] sm:$0xff]
  %v164 = vld [vmem:[%s3 + $0x58] sm:$0xff]
  %v165 = vld [vmem:[%s3 + $0x60] sm:$0xff]
  %v166 = vld [vmem:[%s3 + $0x68] sm:$0xff]
  %v167 = vld [vmem:[%s3 + $0x70] sm:$0xff]
  %v168 = vld [vmem:[%s3 + $0x78] sm:$0xff]
  %v169 = vld [vmem:[%s3 + $0x80] sm:$0xff]
  %v170 = vld [vmem:[%s3 + $0x88] sm:$0xff]
  %v171 = vld [vmem:[%s3 + $0x90] sm:$0xff]
  %v172 = vld [vmem:[%s3 + $0x98] sm:$0xff]
  %v173 = vld [vmem:[%s3 + $0xa0] sm:$0xff]
  %v174 = vld [vmem:[%s3 + $0xa8] sm:$0xff]
  %v175 = vld [vmem:[%s3 + $0xb0] sm:$0xff]
  %v176 = vld [vmem:[%s3 + $0xb8] sm:$0xff]
  %v177 = vld [vmem:[%s3 + $0xc0] sm:$0xff]
  %v178 = vld [vmem:[%s3 + $0xc8] sm:$0xff]
  %v179 = vld [vmem:[%s3 + $0xd0] sm:$0xff]
  %v180 = vld [vmem:[%s3 + $0xd8] sm:$0xff]
  %v181 = vld [vmem:[%s3 + $0xe0] sm:$0xff]
  %v182 = vld [vmem:[%s3 + $0xe8] sm:$0xff]
  %v183 = vld [vmem:[%s3 + $0xf0] sm:$0xff]
  %v184 = vld [vmem:[%s3 + $0xf8] sm:$0xff]
  %v185 = vld [vmem:[%s4] sm:$0x1]
  %v187 = vlaneseq
  %v188 = vshrl.u32 %v187, 7
  %v189 = vsub.s32 0, %v188
  %v190 = vrot.slane %v185, %v189
  %192 = vmatprep.subr.mxu0 0.0
  %193 = vmatpush1.msra.mxu0 %v153
  %194 = vmatprep.subr.mxu0 0.0
  %195 = vmatpush1.msra.mxu0 %v154
  %196 = vmatprep.subr.mxu0 0.0
  %197 = vmatpush1.msra.mxu0 %v155
  %198 = vmatprep.subr.mxu0 0.0
  %199 = vmatpush1.msra.mxu0 %v156
  %200 = vmatprep.subr.mxu0 0.0
  %201 = vmatpush1.msra.mxu0 %v157
  %202 = vmatprep.subr.mxu0 0.0
  %203 = vmatpush1.msra.mxu0 %v158
  %204 = vmatprep.subr.mxu0 0.0
  %205 = vmatpush1.msra.mxu0 %v159
  %206 = vmatprep.subr.mxu0 0.0
  %207 = vmatpush1.msra.mxu0 %v160
  %208 = vmatprep.subr.mxu0 0.0
  %209 = vmatpush1.msra.mxu0 %v161
  %210 = vmatprep.subr.mxu0 0.0
  %211 = vmatpush1.msra.mxu0 %v162
  %212 = vmatprep.subr.mxu0 0.0
  %213 = vmatpush1.msra.mxu0 %v163
  %214 = vmatprep.subr.mxu0 0.0
  %215 = vmatpush1.msra.mxu0 %v164
  %216 = vmatprep.subr.mxu0 0.0
  %217 = vmatpush1.msra.mxu0 %v165
  %218 = vmatprep.subr.mxu0 0.0
  %219 = vmatpush1.msra.mxu0 %v166
  %220 = vmatprep.subr.mxu0 0.0
  %221 = vmatpush1.msra.mxu0 %v167
  %222 = vmatprep.subr.mxu0 0.0
  %223 = vmatpush1.msra.mxu0 %v168
  %224 = vmatprep.subr.mxu0 0.0
  %225 = vmatpush1.msra.mxu0 %v169
  %226 = vmatprep.subr.mxu0 0.0
  %227 = vmatpush1.msra.mxu0 %v170
  %228 = vmatprep.subr.mxu0 0.0
  %229 = vmatpush1.msra.mxu0 %v171
  %230 = vmatprep.subr.mxu0 0.0
  %231 = vmatpush1.msra.mxu0 %v172
  %232 = vmatprep.subr.mxu0 0.0
  %233 = vmatpush1.msra.mxu0 %v173
  %234 = vmatprep.subr.mxu0 0.0
  %235 = vmatpush1.msra.mxu0 %v174
  %236 = vmatprep.subr.mxu0 0.0
  %237 = vmatpush1.msra.mxu0 %v175
  %238 = vmatprep.subr.mxu0 0.0
  %239 = vmatpush1.msra.mxu0 %v176
  %240 = vmatprep.subr.mxu0 0.0
  %241 = vmatpush1.msra.mxu0 %v177
  %242 = vmatprep.subr.mxu0 0.0
  %243 = vmatpush1.msra.mxu0 %v178
  %244 = vmatprep.subr.mxu0 0.0
  %245 = vmatpush1.msra.mxu0 %v179
  %246 = vmatprep.subr.mxu0 0.0
  %247 = vmatpush1.msra.mxu0 %v180
  %248 = vmatprep.subr.mxu0 0.0
  %249 = vmatpush1.msra.mxu0 %v181
  %250 = vmatprep.subr.mxu0 0.0
  %251 = vmatpush1.msra.mxu0 %v182
  %252 = vmatprep.subr.mxu0 0.0
  %253 = vmatpush1.msra.mxu0 %v183
  %254 = vmatprep.subr.mxu0 0.0
  %255 = vmatpush1.msra.mxu0 %v184
  %256 = vmatprep.mubr.f32.mxu0 %v150
  %257 = vmatmul.mubr.f32.gmra.mrb[0].mxu0 %v149
  %v258 = vpop.f32.mrb[0].mxu0
  %v259 = vadd.f32 %v190, %v258
  %v260 = vpop.f32.mrb[0].mxu0
  %261 = vmatprep.mubr.f32.mxu0 %v152
  %262 = vmatmul.mubr.f32.gmra.mrb[0].mxu0 %v151
  %v263 = vpop.f32.mrb[0].mxu0
  %v264 = vadd.f32 %v190, %v263
  %v265 = vpop.f32.mrb[0].mxu0
  %266 = vdwg.mxu0
  %v267 = vadd.f32 %v259, %v26
  %v268 = vadd.f32 %v264, %v27
  %269 = vadd.xlane.f32.xlu0 %v267
  %v270 = vpop.xlane.xlu0 %269
  %271 = vadd.xlane.f32.xlu0 %v268
  %v272 = vpop.xlane.xlu0 %271
  %v273 = vrcp.pop 128.0
  %v274 = vmul.f32 %v270, %v273
  %v275 = vmul.f32 %v272, %v273
  %v276 = vsub.f32 %v267, %v274
  %v277 = vsub.f32 %v268, %v275
  %v278 = vmul.f32 %v276, %v276
  %v279 = vmul.f32 %v277, %v277
  %280 = vadd.xlane.f32.xlu0 %v278
  %v281 = vpop.xlane.xlu0 %280
  %282 = vadd.xlane.f32.xlu0 %v279
  %v283 = vpop.xlane.xlu0 %282
  %v284 = vmul.f32 %v281, %v273
  %v285 = vmul.f32 %v283, %v273
  %v286 = vadd.f32 %v284, 1e-05
  %v287 = vadd.f32 %v285, 1e-05
  %v288 = vrsqrt.pop %v286
  %v289 = vrsqrt.pop %v287
  %v290 = vmul.f32 %v276, %v288
  %v291 = vmul.f32 %v277, %v289
  %v292 = vld [vmem:[%s5] sm:$0x1]
  %v294 = vlaneseq
  %v295 = vshrl.u32 %v294, 7
  %v296 = vsub.s32 0, %v295
  %v297 = vrot.slane %v292, %v296
  %v299 = vmul.f32 %v290, %v297
  %v300 = vmul.f32 %v291, %v297
  %v301 = vld [vmem:[%s6] sm:$0x1]
  %v303 = vlaneseq
  %v304 = vshrl.u32 %v303, 7
  %v305 = vsub.s32 0, %v304
  %v306 = vrot.slane %v301, %v305
  %v308 = vadd.f32 %v299, %v306
  %v309 = vadd.f32 %v300, %v306
  %310 = vst [vmem:[%s7] sm:$0xff] %v308
  %311 = vst [vmem:[%s7 + $0x8] sm:$0xff] %v309
  // Predicated region
  $region30: #{transformer_decoder_forward.24} parent=0 // pred_check
    _
  $region31: #{transformer_decoder_forward.24} parent=0 // pred_check_branch
    %313 = sbr.rel (0) target = $region33
  $region32: #{transformer_decoder_forward.24} parent=0 // pred_region
    _
  $region33: #{transformer_decoder_forward.24} parent=0 // pred_fallthru
    _
  // Predicated region
  $region34: #{transformer_decoder_forward.24} parent=0 // pred_check
    _
  $region35: #{transformer_decoder_forward.24} parent=0 // pred_check_branch
    %315 = sbr.rel (0) target = $region37
  $region36: #{transformer_decoder_forward.24} parent=0 // pred_region
    _
  $region37: #{transformer_decoder_forward.24} parent=0 // pred_fallthru
    _

// kernel: transformer_decoder_forward.33
$region0: #{transformer_decoder_forward.33}
  #allocation0 [shape = 'u32[]', space=smem, size = 0x4, offset = 0x4, fixed_abs, tag = 'smem constant byte address 0x4 - core index']
  #allocation1 [shape = 'u32[144,128]{1,0:T(1,128)}', space=vmem, size = 0x12000, scoped, tag = 'internal scratch']
  %s0 = inlined_call_operand.vmem [shape: f32[16,128], index: 0, kind: input, shape index: {}]
  %s1 = inlined_call_operand.vmem [shape: f32[1,128], index: 1, kind: input, shape index: {}]
  %s2 = inlined_call_operand.vmem [shape: f32[1,128], index: 2, kind: input, shape index: {}]
  %s3 = inlined_call_operand.hbm [shape: f32[16,128], index: 3, kind: output, shape index: {}]
  %s4 = sld [smem:[#allocation0]]
  $region22: #{transformer_decoder_forward.33} parent=0
    _
  %s6 = ssub.s32 1, %s4
  %s7 = scalar_select 0, %s6, %s4
  $region1: #{transformer_decoder_forward.33} parent=0
    #allocation2 [shape = 'u8[8192]{0}', space=vmem, size = 0x2000, scoped, tag = 'output window, operand 0, single buffered']
    #allocation3 [shape = 's32[1]{0}', space=sflag, size = 0x4, scoped, tag = 'scoped memory for transformer_decoder_forward.33']
    %8 = vsyncpa [#allocation3], 0
    // Predicated region
    $region2: #{transformer_decoder_forward.33} parent=1 // pred_check
      _
    $region3: #{transformer_decoder_forward.33} parent=1 // pred_check_branch
      %10 = sbr.rel (0) target = $region5
    $region4: #{transformer_decoder_forward.33} parent=1 // pred_region
      _
    $region5: #{transformer_decoder_forward.33} parent=1 // pred_fallthru
      _
    // Predicated region
    $region6: #{transformer_decoder_forward.33} parent=1 // pred_check
      _
    $region7: #{transformer_decoder_forward.33} parent=1 // pred_check_branch
      %12 = sbr.rel (0) target = $region9
    $region8: #{transformer_decoder_forward.33} parent=1 // pred_region
      _
    $region9: #{transformer_decoder_forward.33} parent=1 // pred_fallthru
      _
    // Predicated region
    $region10: #{transformer_decoder_forward.33} parent=1 // pred_check
      _
    $region11: #{transformer_decoder_forward.33} parent=1 // pred_check_branch
      %14 = sbr.rel (0) target = $region13
    $region12: #{transformer_decoder_forward.33} parent=1 // pred_region
      _
    $region13: #{transformer_decoder_forward.33} parent=1 // pred_fallthru
      _
    %v15 = vld [vmem:[%s0] sm:$0xff]
    %v16 = vld [vmem:[%s0 + $0x8] sm:$0xff]
    %17 = vadd.xlane.f32.xlu0 %v15
    %v18 = vpop.xlane.xlu0 %17
    %19 = vadd.xlane.f32.xlu0 %v16
    %v20 = vpop.xlane.xlu0 %19
    %v21 = vrcp.pop 128.0
    %v22 = vmul.f32 %v18, %v21
    %v23 = vmul.f32 %v20, %v21
    %v24 = vsub.f32 %v15, %v22
    %v25 = vsub.f32 %v16, %v23
    %v26 = vmul.f32 %v24, %v24
    %v27 = vmul.f32 %v25, %v25
    %28 = vadd.xlane.f32.xlu0 %v26
    %v29 = vpop.xlane.xlu0 %28
    %30 = vadd.xlane.f32.xlu0 %v27
    %v31 = vpop.xlane.xlu0 %30
    %v32 = vmul.f32 %v29, %v21
    %v33 = vmul.f32 %v31, %v21
    %v34 = vadd.f32 %v32, 1e-05
    %v35 = vadd.f32 %v33, 1e-05
    %v36 = vrsqrt.pop %v34
    %v37 = vrsqrt.pop %v35
    %v38 = vmul.f32 %v24, %v36
    %v39 = vmul.f32 %v25, %v37
    %v40 = vld [vmem:[%s1] sm:$0x1]
    %v42 = vlaneseq
    %v43 = vshrl.u32 %v42, 7
    %v44 = vsub.s32 0, %v43
    %v45 = vrot.slane %v40, %v44
    %v47 = vmul.f32 %v38, %v45
    %v48 = vmul.f32 %v39, %v45
    %v49 = vld [vmem:[%s2] sm:$0x1]
    %v51 = vlaneseq
    %v52 = vshrl.u32 %v51, 7
    %v53 = vsub.s32 0, %v52
    %v54 = vrot.slane %v49, %v53
    %v56 = vadd.f32 %v47, %v54
    %v57 = vadd.f32 %v48, %v54
    %58 = vst [vmem:[#allocation2] sm:$0xff] %v56
    %59 = vst [vmem:[#allocation2 + $0x8] sm:$0xff] %v57
    // Predicated region
    $region14: #{transformer_decoder_forward.33} parent=1 // pred_check
      _
    $region15: #{transformer_decoder_forward.33} parent=1 // pred_check_branch
      %61 = sbr.rel (0) target = $region17
    $region16: #{transformer_decoder_forward.33} parent=1 // pred_region
      %s63 = ssub.s32 256, 256
      %64 = vsyncadd [#allocation3], %s63
      %s65 = sshll.u32 [#allocation2], 4
      %s66 = int_to_ptr.vmem [resolvable:$true] %s65
      %71 = dma.vmem_to_hbm [thread:$0]  %s66, 256, %s3, [#allocation3], 128, 128, 8
    $region17: #{transformer_decoder_forward.33} parent=1 // pred_fallthru
      _
    // Predicated region
    $region18: #{transformer_decoder_forward.33} parent=1 // pred_check
      _
    $region19: #{transformer_decoder_forward.33} parent=1 // pred_check_branch
      %73 = sbr.rel (0) target = $region21
    $region20: #{transformer_decoder_forward.33} parent=1 // pred_region
      %74 = dma.done [#allocation3], 256
    $region21: #{transformer_decoder_forward.33} parent=1 // pred_fallthru
      _
    %75 = vsyncpa [#allocation3], 1

</llo_original>
